<compile_context>
chip_gen: v7x
topology: tpu7x:2x2x1
jax: 0.10.0
libtpu: 0.0.40
codegen_flags: <defaults>
</compile_context>

<pallas_src>
import functools

import jax
import jax.numpy as jnp
import numpy as np
from jax import lax
from jax.experimental import pallas as pl
from jax.experimental.pallas import tpu as pltpu

INF_CRC_VAL = 100.0


def fused_kernel(x_ref, coef_ref, h2_ref, bmat_ref, dec_ref, aux_ref, w_ref,
                 *, n_ens, inf_crc, sel_dtype):
    tb = x_ref.shape[0]
    two_l = x_ref.shape[1]
    L = two_l // 2

    x = x_ref[...]                                    # [TB, 2L] f32 = [xa | xb]
    xr = pltpu.roll(x, shift=L, axis=1)               # [xb | xa]  (XLU lane roll)
    coef = coef_ref[...]                              # [2E, 2L] f32 coefficient rows

    # ---- candidate words (stand-in decoders), written straight into bf16 scratch ----
    # TODO(synk): stand-ins for gating_decoder.traceback(start_state_i) (lanes < L) and
    #             decoders_trainers[i].decoder(x_hard, 'val') (lanes >= L).
    for i in range(n_ens):
        cx = coef[i:i + 1, :]                         # [1,2L]: [1 .. 1 | g_i .. g_i]
        cr = coef[n_ens + i:n_ens + i + 1, :]         # [1,2L]: [a_i .. | b_i .. ]
        s = cx * x + cr * xr                          # lanes<L: xa+a_i*xb ; >=L: b_i*xa+g_i*xb
        w_ref[pl.ds(i * tb, tb), :] = (s < 0.0).astype(jnp.float32).astype(w_ref.dtype)

    # ---- one stacked K=2L CRC-syndrome matmul for all E combined words ----
    w_all = w_ref[...]                                # [E*TB, 2L] bf16 ({0,1} exact)
    syn = jnp.dot(w_all, h2_ref[...],
                  preferred_element_type=jnp.float32)                  # [E*TB, 2P]
    # Exact mod 2: integer dot-product values bounded by the contraction length (<= L).
    syn = syn - 2.0 * jnp.floor(syn * 0.5)

    # ---- lane-broadcast CRC sums via a second (free MXU slot) matmul ----
    crcb = jnp.dot(syn.astype(jnp.bfloat16), bmat_ref[...],
                   preferred_element_type=jnp.float32)                 # [E*TB, 4L]
    crc1 = [crcb[i * tb:(i + 1) * tb, :two_l] for i in range(n_ens)]   # [TB,2L] bcast
    crc2 = [crcb[i * tb:(i + 1) * tb, two_l:] for i in range(n_ens)]   # [TB,2L] bcast

    def word(i):  # re-slice candidate word i from the scratch (short live range)
        return w_ref[pl.ds(i * tb, tb), :].astype(sel_dtype)

    # ---- stage 1: gating select (first-occurrence argmin over crc1) ----
    best1_w = word(0)
    best1_c = crc1[0]
    for i in range(1, n_ens):
        better = crc1[i] < best1_c
        best1_w = jnp.where(better, word(i), best1_w)
        best1_c = jnp.where(better, crc1[i], best1_c)
    nz = best1_c != 0.0                               # [TB, 2L] bool, lane-broadcast

    # ---- stage 2: to_decode mask + masked first-occurrence argmin over crc2 ----
    lane = lax.broadcasted_iota(jnp.int32, (tb, two_l), 1)
    aux = jnp.where((lane == 0) & nz, 1.0, 0.0)       # col 0 = nonzero-CRC flag
    best2_w = None
    best2_c = None
    for i in range(n_ens):
        td = crc1[i] == best1_c
        aux = jnp.where((lane == (i + 1)) & td & nz, 1.0, aux)   # cols 1..E = to_decode
        c2 = jnp.where(td, crc2[i], inf_crc)
        wi = word(i)
        if i == 0:
            best2_w, best2_c = wi, c2
        else:
            better = c2 < best2_c
            best2_w = jnp.where(better, wi, best2_w)
            best2_c = jnp.where(better, c2, best2_c)

    # ---- final combine: word2 lives in lanes L..2L-1 -> one lane roll aligns it ----
    w2_lo = pltpu.roll(best2_w.astype(jnp.float32), shift=L, axis=1)
    dec = jnp.where(nz, w2_lo, best1_w.astype(jnp.float32))            # [TB, 2L]
    dec_ref[...] = dec[:, :L]
    aux_ref[...] = aux[:, :aux_ref.shape[1]].astype(aux_ref.dtype)


def _device_kind():
    try:
        return jax.devices()[0].device_kind.lower()
    except Exception:
        return ""


def _choose_block_b(B, kind):
    """Generation-aware block choice: 2 parallel steps on v7x, one big block on 1-TC chips."""
    divs = [d for d in range(8, B + 1, 8) if B % d == 0]
    if not divs:
        return B                                  # tiny/odd batch: single full-array block
    if "v7" in kind:
        two = [d for d in divs if B // d == 2 and d <= 2048]
        if two:
            return max(two)                       # exactly one step per TensorCore
        even = [d for d in divs if (B // d) % 2 == 0 and d <= 1024]
        if even:
            return max(even)
        return max(d for d in divs if d <= 1024)
    # single-TC v5e / v6e (or unknown): one maximal block, capped for VMEM headroom.
    return max(d for d in divs if d <= 2048)


def gated_wcvae_decode(x, code_h_outer, alpha, beta, gamma, *, det_length, n_ens,
                       block_b=None):
    B, N = x.shape
    P, L = code_h_outer.shape
    assert N == 2 * det_length and L == det_length
    two_l = 2 * L

    kind = _device_kind()
    if block_b is None:
        block_b = _choose_block_b(B, kind)
    assert B % block_b == 0
    grid = (B // block_b,)

    # bf16 VALU exists on v6e/v7x; keep the word select chain in f32 on v5e/unknown.
    sel_dtype = jnp.bfloat16 if ("v6" in kind or "v7" in kind) else jnp.float32
    vmem_limit = 32 * 1024 * 1024 if "v7" in kind else 64 * 1024 * 1024

    # Per-lane coefficient rows (single operand replaces 3 SMEM scalars):
    #   row i      : cx_i = [1 ... 1 | gamma_i ... gamma_i]
    #   row E + i  : cr_i = [alpha_i ...     | beta_i ... ]
    a = alpha.reshape(n_ens, 1).astype(jnp.float32)
    b = beta.reshape(n_ens, 1).astype(jnp.float32)
    g = gamma.reshape(n_ens, 1).astype(jnp.float32)
    ones_l = jnp.ones((n_ens, L), jnp.float32)
    coef = jnp.concatenate(
        [jnp.concatenate([ones_l, g * ones_l], axis=1),
         jnp.concatenate([a * ones_l, b * ones_l], axis=1)], axis=0)   # [2E, 2L]

    # Block-diagonal H2 = diag(H^T, H^T): [2L, 2P], pre-cast to bf16 ({0,1} exact).
    ht = code_h_outer.astype(jnp.bfloat16).T                           # [L, P]
    zl = jnp.zeros((L, P), jnp.bfloat16)
    h2 = jnp.concatenate(
        [jnp.concatenate([ht, zl], axis=1),
         jnp.concatenate([zl, ht], axis=1)], axis=0)                   # [2L, 2P]

    # Broadcast matrix: rows 0..P-1 -> ones over lanes 0..2L-1   (crc1 lane-broadcast)
    #                   rows P..2P-1 -> ones over lanes 2L..4L-1 (crc2 lane-broadcast)
    op = jnp.ones((P, two_l), jnp.bfloat16)
    zp = jnp.zeros((P, two_l), jnp.bfloat16)
    bmat = jnp.concatenate(
        [jnp.concatenate([op, zp], axis=1),
         jnp.concatenate([zp, op], axis=1)], axis=0)                   # [2P, 4L]

    # Must exceed any achievable CRC sum (<= P); keeps the torch constant when valid.
    inf_crc = float(max(INF_CRC_VAL, P + 1))
    aux_w = max(8, n_ens + 1)

    row = lambda c: pl.BlockSpec((block_b, c), lambda bidx: (bidx, 0))
    full = lambda r, c: pl.BlockSpec((r, c), lambda bidx: (0, 0))

    decoded, aux = pl.pallas_call(
        functools.partial(fused_kernel, n_ens=n_ens, inf_crc=inf_crc,
                          sel_dtype=sel_dtype),
        out_shape=(jax.ShapeDtypeStruct((B, L), jnp.float32),
                   jax.ShapeDtypeStruct((B, aux_w), jnp.float32)),
        grid_spec=pltpu.PrefetchScalarGridSpec(
            num_scalar_prefetch=0, grid=grid,
            in_specs=[row(two_l),                       # x  [B, 2L], lane-dense
                      full(2 * n_ens, two_l),           # coef (resident)
                      full(two_l, 2 * P),               # H2   (resident)
                      full(2 * P, 2 * two_l)],          # bmat (resident)
            out_specs=[row(L), row(aux_w)],
            scratch_shapes=[pltpu.VMEM((n_ens * block_b, two_l), jnp.bfloat16)]),
        compiler_params=pltpu.CompilerParams(
            dimension_semantics=("parallel",),
            vmem_limit_bytes=vmem_limit),
    )(x, coef, h2, bmat)

    non_zero_crc_ind = aux[:, 0] > 0.5                       # mirrors self.non_zero_crc_ind
    unsat_words_per_dec = jnp.sum(aux[:, 1:1 + n_ens], axis=0)  # mirrors self.unsat_words_per_dec
    return decoded, non_zero_crc_ind, unsat_words_per_dec


def reference(x, h, alpha, beta, gamma, det_length, inf_crc):
    """Plain-JAX replica of the same forward semantics (for verification)."""
    L = det_length
    xa, xb = x[:, :L], x[:, L:]
    w1 = ((xa[:, None, :] + alpha[0, :, None] * xb[:, None, :]) < 0.0).astype(jnp.float32)
    crc1 = jnp.sum(jnp.mod(jnp.einsum('bel,pl->bep', w1, h), 2.0), axis=-1)
    ind1 = jnp.argmin(crc1, axis=1)
    dec1 = jnp.take_along_axis(w1, ind1[:, None, None], axis=1)[:, 0, :]
    min1 = jnp.min(crc1, axis=1, keepdims=True)
    nonzero = min1[:, 0] != 0.0
    to_decode = crc1 == min1
    w2 = ((beta[0, :, None] * xa[:, None, :] + gamma[0, :, None] * xb[:, None, :]) < 0.0
          ).astype(jnp.float32)
    crc2 = jnp.sum(jnp.mod(jnp.einsum('bel,pl->bep', w2, h), 2.0), axis=-1)
    crc2 = jnp.where(to_decode, crc2, inf_crc)
    ind2 = jnp.argmin(crc2, axis=1)
    dec2 = jnp.take_along_axis(w2, ind2[:, None, None], axis=1)[:, 0, :]
    decoded = jnp.where(nonzero[:, None], dec2, dec1)
    unsat = jnp.sum(jnp.where(nonzero[:, None], to_decode.astype(jnp.float32), 0.0), axis=0)
    return decoded, nonzero, unsat


if __name__ == "__main__":
    # Small, module-consistent shapes.
    B = 256                 # batch
    det_length = 64         # L: info-word length
    N = 2 * det_length      # LLR length (rate-1/2 style)
    P = 16                  # parity rows of code_h_outer
    E = 4                   # decoders_in_ensemble
    n_states = 64           # trellis states

    key = jax.random.PRNGKey(0)
    kx, kh = jax.random.split(key)
    x = jax.random.normal(kx, (B, N), dtype=jnp.float32)
    code_h_outer = jax.random.bernoulli(kh, 0.5, (P, det_length)).astype(jnp.float32)
    # code_gm_inner is stored by __init__ but unused in forward(); omitted.

    # Deterministic per-decoder parameters, derived from the module's start-state rule.
    start_states = jnp.array(
        [int(n_states // E * (i + 0.5)) for i in range(E)], dtype=jnp.float32)
    alpha = (-1.0 + 2.0 * start_states / n_states).reshape(1, E)          # gating decoder
    beta = (0.5 + 0.25 * jnp.arange(E, dtype=jnp.float32)).reshape(1, E)  # ensemble decoders
    gamma = (1.0 - 0.1 * jnp.arange(E, dtype=jnp.float32)).reshape(1, E)

    decoded, non_zero_crc_ind, unsat = gated_wcvae_decode(
        x, code_h_outer, alpha, beta, gamma, det_length=det_length, n_ens=E)
    decoded = jax.block_until_ready(decoded)

    inf_crc = float(max(INF_CRC_VAL, P + 1))
    ref_dec, ref_nz, ref_unsat = reference(
        x, code_h_outer, alpha, beta, gamma, det_length, inf_crc)
    np.testing.assert_allclose(np.asarray(decoded), np.asarray(ref_dec), atol=0, rtol=0)
    np.testing.assert_array_equal(np.asarray(non_zero_crc_ind), np.asarray(ref_nz))
    np.testing.assert_allclose(np.asarray(unsat), np.asarray(ref_unsat), atol=0, rtol=0)
    assert decoded.shape == (B, det_length)
    print("KERNEL_OK")
</pallas_src>

<mosaic_0001>
module attributes {stable_mosaic.version = 11 : i64} {
  func.func @fused_kernel(%arg0: i32, %arg1: memref<256x128xf32, #tpu.memory_space<vmem>>, %arg2: memref<8x128xf32, #tpu.memory_space<vmem>>, %arg3: memref<128x32xbf16, #tpu.memory_space<vmem>>, %arg4: memref<32x256xbf16, #tpu.memory_space<vmem>>, %arg5: memref<256x64xf32, #tpu.memory_space<vmem>>, %arg6: memref<256x8xf32, #tpu.memory_space<vmem>>, %arg7: memref<1024x128xbf16, #tpu.memory_space<vmem>>) attributes {dimension_semantics = [#tpu.dimension_semantics<parallel>], iteration_bounds = array<i64: 1>, scalar_prefetch = 0 : i64, scratch_operands = 1 : i64, tpu.core_type = #tpu.core_type<tc>, window_params = [{transform_indices = @transform_0, window_bounds = array<i64: 256, 128>}, {pipeline_mode = #tpu.pipeline_mode<synchronous>, transform_indices = @transform_1, window_bounds = array<i64: 8, 128>}, {pipeline_mode = #tpu.pipeline_mode<synchronous>, transform_indices = @transform_2, window_bounds = array<i64: 128, 32>}, {pipeline_mode = #tpu.pipeline_mode<synchronous>, transform_indices = @transform_3, window_bounds = array<i64: 32, 256>}, {transform_indices = @transform_4, window_bounds = array<i64: 256, 64>}, {transform_indices = @transform_5, window_bounds = array<i64: 256, 8>}]} {
    %c0 = arith.constant 0 : index
    %c0_0 = arith.constant 0 : index
    %0 = vector.load %arg1[%c0, %c0_0] : memref<256x128xf32, #tpu.memory_space<vmem>>, vector<256x128xf32>
    %c64_i32 = arith.constant 64 : i32
    %1 = tpu.dynamic_rotate %0 by %c64_i32 dim 1 : vector<256x128xf32>, i32 -> vector<256x128xf32>
    %c0_1 = arith.constant 0 : index
    %c0_2 = arith.constant 0 : index
    %2 = vector.load %arg2[%c0_1, %c0_2] : memref<8x128xf32, #tpu.memory_space<vmem>>, vector<8x128xf32>
    %3 = vector.extract_strided_slice %2 {offsets = [0, 0], sizes = [1, 128], strides = [1, 1]} : vector<8x128xf32> to vector<1x128xf32>
    %4 = vector.extract_strided_slice %2 {offsets = [4, 0], sizes = [1, 128], strides = [1, 1]} : vector<8x128xf32> to vector<1x128xf32>
    %5 = vector.broadcast %3 : vector<1x128xf32> to vector<256x128xf32>
    %6 = arith.mulf %5, %0 : vector<256x128xf32>
    %7 = vector.broadcast %4 : vector<1x128xf32> to vector<256x128xf32>
    %8 = arith.mulf %7, %1 : vector<256x128xf32>
    %9 = arith.addf %6, %8 : vector<256x128xf32>
    %cst = arith.constant 0.000000e+00 : f32
    %10 = vector.broadcast %cst : f32 to vector<256x128xf32>
    %11 = arith.cmpf olt, %9, %10 : vector<256x128xf32>
    %12 = arith.extui %11 : vector<256x128xi1> to vector<256x128xi32>
    %13 = arith.sitofp %12 : vector<256x128xi32> to vector<256x128xf32>
    %14 = arith.truncf %13 : vector<256x128xf32> to vector<256x128xbf16>
    %c0_3 = arith.constant 0 : index
    %c0_4 = arith.constant 0 : index
    %15 = vector.load %arg7[%c0_3, %c0_4] : memref<1024x128xbf16, #tpu.memory_space<vmem>>, vector<256x128xbf16>
    tpu.vector_store %arg7[%c0_3, %c0_4], %14 {strides = array<i32>} : memref<1024x128xbf16, #tpu.memory_space<vmem>>, vector<256x128xbf16>,
    %16 = vector.extract_strided_slice %2 {offsets = [1, 0], sizes = [1, 128], strides = [1, 1]} : vector<8x128xf32> to vector<1x128xf32>
    %17 = vector.extract_strided_slice %2 {offsets = [5, 0], sizes = [1, 128], strides = [1, 1]} : vector<8x128xf32> to vector<1x128xf32>
    %18 = vector.broadcast %16 : vector<1x128xf32> to vector<256x128xf32>
    %19 = arith.mulf %18, %0 : vector<256x128xf32>
    %20 = vector.broadcast %17 : vector<1x128xf32> to vector<256x128xf32>
    %21 = arith.mulf %20, %1 : vector<256x128xf32>
    %22 = arith.addf %19, %21 : vector<256x128xf32>
    %cst_5 = arith.constant 0.000000e+00 : f32
    %23 = vector.broadcast %cst_5 : f32 to vector<256x128xf32>
    %24 = arith.cmpf olt, %22, %23 : vector<256x128xf32>
    %25 = arith.extui %24 : vector<256x128xi1> to vector<256x128xi32>
    %26 = arith.sitofp %25 : vector<256x128xi32> to vector<256x128xf32>
    %27 = arith.truncf %26 : vector<256x128xf32> to vector<256x128xbf16>
    %c256 = arith.constant 256 : index
    %c0_6 = arith.constant 0 : index
    %28 = vector.load %arg7[%c256, %c0_6] : memref<1024x128xbf16, #tpu.memory_space<vmem>>, vector<256x128xbf16>
    tpu.vector_store %arg7[%c256, %c0_6], %27 {strides = array<i32>} : memref<1024x128xbf16, #tpu.memory_space<vmem>>, vector<256x128xbf16>,
    %29 = vector.extract_strided_slice %2 {offsets = [2, 0], sizes = [1, 128], strides = [1, 1]} : vector<8x128xf32> to vector<1x128xf32>
    %30 = vector.extract_strided_slice %2 {offsets = [6, 0], sizes = [1, 128], strides = [1, 1]} : vector<8x128xf32> to vector<1x128xf32>
    %31 = vector.broadcast %29 : vector<1x128xf32> to vector<256x128xf32>
    %32 = arith.mulf %31, %0 : vector<256x128xf32>
    %33 = vector.broadcast %30 : vector<1x128xf32> to vector<256x128xf32>
    %34 = arith.mulf %33, %1 : vector<256x128xf32>
    %35 = arith.addf %32, %34 : vector<256x128xf32>
    %cst_7 = arith.constant 0.000000e+00 : f32
    %36 = vector.broadcast %cst_7 : f32 to vector<256x128xf32>
    %37 = arith.cmpf olt, %35, %36 : vector<256x128xf32>
    %38 = arith.extui %37 : vector<256x128xi1> to vector<256x128xi32>
    %39 = arith.sitofp %38 : vector<256x128xi32> to vector<256x128xf32>
    %40 = arith.truncf %39 : vector<256x128xf32> to vector<256x128xbf16>
    %c512 = arith.constant 512 : index
    %c0_8 = arith.constant 0 : index
    %41 = vector.load %arg7[%c512, %c0_8] : memref<1024x128xbf16, #tpu.memory_space<vmem>>, vector<256x128xbf16>
    tpu.vector_store %arg7[%c512, %c0_8], %40 {strides = array<i32>} : memref<1024x128xbf16, #tpu.memory_space<vmem>>, vector<256x128xbf16>,
    %42 = vector.extract_strided_slice %2 {offsets = [3, 0], sizes = [1, 128], strides = [1, 1]} : vector<8x128xf32> to vector<1x128xf32>
    %43 = vector.extract_strided_slice %2 {offsets = [7, 0], sizes = [1, 128], strides = [1, 1]} : vector<8x128xf32> to vector<1x128xf32>
    %44 = vector.broadcast %42 : vector<1x128xf32> to vector<256x128xf32>
    %45 = arith.mulf %44, %0 : vector<256x128xf32>
    %46 = vector.broadcast %43 : vector<1x128xf32> to vector<256x128xf32>
    %47 = arith.mulf %46, %1 : vector<256x128xf32>
    %48 = arith.addf %45, %47 : vector<256x128xf32>
    %cst_9 = arith.constant 0.000000e+00 : f32
    %49 = vector.broadcast %cst_9 : f32 to vector<256x128xf32>
    %50 = arith.cmpf olt, %48, %49 : vector<256x128xf32>
    %51 = arith.extui %50 : vector<256x128xi1> to vector<256x128xi32>
    %52 = arith.sitofp %51 : vector<256x128xi32> to vector<256x128xf32>
    %53 = arith.truncf %52 : vector<256x128xf32> to vector<256x128xbf16>
    %c768 = arith.constant 768 : index
    %c0_10 = arith.constant 0 : index
    %54 = vector.load %arg7[%c768, %c0_10] : memref<1024x128xbf16, #tpu.memory_space<vmem>>, vector<256x128xbf16>
    tpu.vector_store %arg7[%c768, %c0_10], %53 {strides = array<i32>} : memref<1024x128xbf16, #tpu.memory_space<vmem>>, vector<256x128xbf16>,
    %c0_11 = arith.constant 0 : index
    %c0_12 = arith.constant 0 : index
    %55 = vector.load %arg7[%c0_11, %c0_12] : memref<1024x128xbf16, #tpu.memory_space<vmem>>, vector<1024x128xbf16>
    %c0_13 = arith.constant 0 : index
    %c0_14 = arith.constant 0 : index
    %56 = vector.load %arg3[%c0_13, %c0_14] : memref<128x32xbf16, #tpu.memory_space<vmem>>, vector<128x32xbf16>
    %cst_15 = arith.constant dense<0.000000e+00> : vector<1024x32xf32>
    %57 = tpu.matmul %55, %56, %cst_15 {dimension_numbers = #tpu.dot_dimension_numbers<[1], [0], [0], [1], [0, 0, 1, 1], [], []>} : vector<1024x128xbf16>, vector<128x32xbf16>, vector<1024x32xf32> -> vector<1024x32xf32>
    %cst_16 = arith.constant 5.000000e-01 : f32
    %58 = vector.broadcast %cst_16 : f32 to vector<1024x32xf32>
    %59 = arith.mulf %57, %58 : vector<1024x32xf32>
    %60 = math.floor %59 : vector<1024x32xf32>
    %cst_17 = arith.constant 2.000000e+00 : f32
    %61 = vector.broadcast %cst_17 : f32 to vector<1024x32xf32>
    %62 = arith.mulf %61, %60 : vector<1024x32xf32>
    %63 = arith.subf %57, %62 : vector<1024x32xf32>
    %64 = arith.truncf %63 : vector<1024x32xf32> to vector<1024x32xbf16>
    %c0_18 = arith.constant 0 : index
    %c0_19 = arith.constant 0 : index
    %65 = vector.load %arg4[%c0_18, %c0_19] : memref<32x256xbf16, #tpu.memory_space<vmem>>, vector<32x256xbf16>
    %cst_20 = arith.constant dense<0.000000e+00> : vector<1024x256xf32>
    %66 = tpu.matmul %64, %65, %cst_20 {dimension_numbers = #tpu.dot_dimension_numbers<[1], [0], [0], [1], [0, 0, 1, 1], [], []>} : vector<1024x32xbf16>, vector<32x256xbf16>, vector<1024x256xf32> -> vector<1024x256xf32>
    %67 = vector.extract_strided_slice %66 {offsets = [0, 0], sizes = [256, 128], strides = [1, 1]} : vector<1024x256xf32> to vector<256x128xf32>
    %68 = vector.extract_strided_slice %66 {offsets = [256, 0], sizes = [256, 128], strides = [1, 1]} : vector<1024x256xf32> to vector<256x128xf32>
    %69 = vector.extract_strided_slice %66 {offsets = [512, 0], sizes = [256, 128], strides = [1, 1]} : vector<1024x256xf32> to vector<256x128xf32>
    %70 = vector.extract_strided_slice %66 {offsets = [768, 0], sizes = [256, 128], strides = [1, 1]} : vector<1024x256xf32> to vector<256x128xf32>
    %71 = vector.extract_strided_slice %66 {offsets = [0, 128], sizes = [256, 128], strides = [1, 1]} : vector<1024x256xf32> to vector<256x128xf32>
    %72 = vector.extract_strided_slice %66 {offsets = [256, 128], sizes = [256, 128], strides = [1, 1]} : vector<1024x256xf32> to vector<256x128xf32>
    %73 = vector.extract_strided_slice %66 {offsets = [512, 128], sizes = [256, 128], strides = [1, 1]} : vector<1024x256xf32> to vector<256x128xf32>
    %74 = vector.extract_strided_slice %66 {offsets = [768, 128], sizes = [256, 128], strides = [1, 1]} : vector<1024x256xf32> to vector<256x128xf32>
    %c0_21 = arith.constant 0 : index
    %c0_22 = arith.constant 0 : index
    %75 = vector.load %arg7[%c0_21, %c0_22] : memref<1024x128xbf16, #tpu.memory_space<vmem>>, vector<256x128xbf16>
    %76 = arith.extf %75 : vector<256x128xbf16> to vector<256x128xf32>
    %77 = arith.cmpf olt, %68, %67 : vector<256x128xf32>
    %c256_23 = arith.constant 256 : index
    %c0_24 = arith.constant 0 : index
    %78 = vector.load %arg7[%c256_23, %c0_24] : memref<1024x128xbf16, #tpu.memory_space<vmem>>, vector<256x128xbf16>
    %79 = arith.extf %78 : vector<256x128xbf16> to vector<256x128xf32>
    %80 = arith.select %77, %79, %76 : vector<256x128xi1>, vector<256x128xf32>
    %81 = arith.select %77, %68, %67 : vector<256x128xi1>, vector<256x128xf32>
    %82 = arith.cmpf olt, %69, %81 : vector<256x128xf32>
    %c512_25 = arith.constant 512 : index
    %c0_26 = arith.constant 0 : index
    %83 = vector.load %arg7[%c512_25, %c0_26] : memref<1024x128xbf16, #tpu.memory_space<vmem>>, vector<256x128xbf16>
    %84 = arith.extf %83 : vector<256x128xbf16> to vector<256x128xf32>
    %85 = arith.select %82, %84, %80 : vector<256x128xi1>, vector<256x128xf32>
    %86 = arith.select %82, %69, %81 : vector<256x128xi1>, vector<256x128xf32>
    %87 = arith.cmpf olt, %70, %86 : vector<256x128xf32>
    %c768_27 = arith.constant 768 : index
    %c0_28 = arith.constant 0 : index
    %88 = vector.load %arg7[%c768_27, %c0_28] : memref<1024x128xbf16, #tpu.memory_space<vmem>>, vector<256x128xbf16>
    %89 = arith.extf %88 : vector<256x128xbf16> to vector<256x128xf32>
    %90 = arith.select %87, %89, %85 : vector<256x128xi1>, vector<256x128xf32>
    %91 = arith.select %87, %70, %86 : vector<256x128xi1>, vector<256x128xf32>
    %cst_29 = arith.constant 0.000000e+00 : f32
    %92 = vector.broadcast %cst_29 : f32 to vector<256x128xf32>
    %93 = arith.cmpf one, %91, %92 : vector<256x128xf32>
    %94 = tpu.iota {dimensions = array<i32: 1>} : vector<256x128xi32>
    %c0_i32 = arith.constant 0 : i32
    %95 = vector.broadcast %c0_i32 : i32 to vector<256x128xi32>
    %96 = arith.cmpi eq, %94, %95 : vector<256x128xi32>
    %97 = arith.andi %96, %93 : vector<256x128xi1>
    %cst_30 = arith.constant 1.000000e+00 : f32
    %cst_31 = arith.constant 0.000000e+00 : f32
    %98 = vector.broadcast %cst_30 : f32 to vector<256x128xf32>
    %99 = vector.broadcast %cst_31 : f32 to vector<256x128xf32>
    %100 = arith.select %97, %98, %99 : vector<256x128xi1>, vector<256x128xf32>
    %101 = arith.cmpf oeq, %67, %91 : vector<256x128xf32>
    %c1_i32 = arith.constant 1 : i32
    %102 = vector.broadcast %c1_i32 : i32 to vector<256x128xi32>
    %103 = arith.cmpi eq, %94, %102 : vector<256x128xi32>
    %104 = arith.andi %103, %101 : vector<256x128xi1>
    %105 = arith.andi %104, %93 : vector<256x128xi1>
    %cst_32 = arith.constant 1.000000e+00 : f32
    %106 = vector.broadcast %cst_32 : f32 to vector<256x128xf32>
    %107 = arith.select %105, %106, %100 : vector<256x128xi1>, vector<256x128xf32>
    %cst_33 = arith.constant 1.000000e+02 : f32
    %108 = vector.broadcast %cst_33 : f32 to vector<256x128xf32>
    %109 = arith.select %101, %71, %108 : vector<256x128xi1>, vector<256x128xf32>
    %c0_34 = arith.constant 0 : index
    %c0_35 = arith.constant 0 : index
    %110 = vector.load %arg7[%c0_34, %c0_35] : memref<1024x128xbf16, #tpu.memory_space<vmem>>, vector<256x128xbf16>
    %111 = arith.extf %110 : vector<256x128xbf16> to vector<256x128xf32>
    %112 = arith.cmpf oeq, %68, %91 : vector<256x128xf32>
    %c2_i32 = arith.constant 2 : i32
    %113 = vector.broadcast %c2_i32 : i32 to vector<256x128xi32>
    %114 = arith.cmpi eq, %94, %113 : vector<256x128xi32>
    %115 = arith.andi %114, %112 : vector<256x128xi1>
    %116 = arith.andi %115, %93 : vector<256x128xi1>
    %cst_36 = arith.constant 1.000000e+00 : f32
    %117 = vector.broadcast %cst_36 : f32 to vector<256x128xf32>
    %118 = arith.select %116, %117, %107 : vector<256x128xi1>, vector<256x128xf32>
    %cst_37 = arith.constant 1.000000e+02 : f32
    %119 = vector.broadcast %cst_37 : f32 to vector<256x128xf32>
    %120 = arith.select %112, %72, %119 : vector<256x128xi1>, vector<256x128xf32>
    %c256_38 = arith.constant 256 : index
    %c0_39 = arith.constant 0 : index
    %121 = vector.load %arg7[%c256_38, %c0_39] : memref<1024x128xbf16, #tpu.memory_space<vmem>>, vector<256x128xbf16>
    %122 = arith.extf %121 : vector<256x128xbf16> to vector<256x128xf32>
    %123 = arith.cmpf olt, %120, %109 : vector<256x128xf32>
    %124 = arith.select %123, %122, %111 : vector<256x128xi1>, vector<256x128xf32>
    %125 = arith.select %123, %120, %109 : vector<256x128xi1>, vector<256x128xf32>
    %126 = arith.cmpf oeq, %69, %91 : vector<256x128xf32>
    %c3_i32 = arith.constant 3 : i32
    %127 = vector.broadcast %c3_i32 : i32 to vector<256x128xi32>
    %128 = arith.cmpi eq, %94, %127 : vector<256x128xi32>
    %129 = arith.andi %128, %126 : vector<256x128xi1>
    %130 = arith.andi %129, %93 : vector<256x128xi1>
    %cst_40 = arith.constant 1.000000e+00 : f32
    %131 = vector.broadcast %cst_40 : f32 to vector<256x128xf32>
    %132 = arith.select %130, %131, %118 : vector<256x128xi1>, vector<256x128xf32>
    %cst_41 = arith.constant 1.000000e+02 : f32
    %133 = vector.broadcast %cst_41 : f32 to vector<256x128xf32>
    %134 = arith.select %126, %73, %133 : vector<256x128xi1>, vector<256x128xf32>
    %c512_42 = arith.constant 512 : index
    %c0_43 = arith.constant 0 : index
    %135 = vector.load %arg7[%c512_42, %c0_43] : memref<1024x128xbf16, #tpu.memory_space<vmem>>, vector<256x128xbf16>
    %136 = arith.extf %135 : vector<256x128xbf16> to vector<256x128xf32>
    %137 = arith.cmpf olt, %134, %125 : vector<256x128xf32>
    %138 = arith.select %137, %136, %124 : vector<256x128xi1>, vector<256x128xf32>
    %139 = arith.select %137, %134, %125 : vector<256x128xi1>, vector<256x128xf32>
    %140 = arith.cmpf oeq, %70, %91 : vector<256x128xf32>
    %c4_i32 = arith.constant 4 : i32
    %141 = vector.broadcast %c4_i32 : i32 to vector<256x128xi32>
    %142 = arith.cmpi eq, %94, %141 : vector<256x128xi32>
    %143 = arith.andi %142, %140 : vector<256x128xi1>
    %144 = arith.andi %143, %93 : vector<256x128xi1>
    %cst_44 = arith.constant 1.000000e+00 : f32
    %145 = vector.broadcast %cst_44 : f32 to vector<256x128xf32>
    %146 = arith.select %144, %145, %132 : vector<256x128xi1>, vector<256x128xf32>
    %cst_45 = arith.constant 1.000000e+02 : f32
    %147 = vector.broadcast %cst_45 : f32 to vector<256x128xf32>
    %148 = arith.select %140, %74, %147 : vector<256x128xi1>, vector<256x128xf32>
    %c768_46 = arith.constant 768 : index
    %c0_47 = arith.constant 0 : index
    %149 = vector.load %arg7[%c768_46, %c0_47] : memref<1024x128xbf16, #tpu.memory_space<vmem>>, vector<256x128xbf16>
    %150 = arith.extf %149 : vector<256x128xbf16> to vector<256x128xf32>
    %151 = arith.cmpf olt, %148, %139 : vector<256x128xf32>
    %152 = arith.select %151, %150, %138 : vector<256x128xi1>, vector<256x128xf32>
    %c64_i32_48 = arith.constant 64 : i32
    %153 = tpu.dynamic_rotate %152 by %c64_i32_48 dim 1 : vector<256x128xf32>, i32 -> vector<256x128xf32>
    %154 = arith.select %93, %153, %90 : vector<256x128xi1>, vector<256x128xf32>
    %155 = vector.extract_strided_slice %154 {offsets = [0, 0], sizes = [256, 64], strides = [1, 1]} : vector<256x128xf32> to vector<256x64xf32>
    %c0_49 = arith.constant 0 : index
    %c0_50 = arith.constant 0 : index
    %156 = vector.load %arg5[%c0_49, %c0_50] : memref<256x64xf32, #tpu.memory_space<vmem>>, vector<256x64xf32>
    tpu.vector_store %arg5[%c0_49, %c0_50], %155 {strides = array<i32>} : memref<256x64xf32, #tpu.memory_space<vmem>>, vector<256x64xf32>,
    %157 = vector.extract_strided_slice %146 {offsets = [0, 0], sizes = [256, 8], strides = [1, 1]} : vector<256x128xf32> to vector<256x8xf32>
    %c0_51 = arith.constant 0 : index
    %c0_52 = arith.constant 0 : index
    %158 = vector.load %arg6[%c0_51, %c0_52] : memref<256x8xf32, #tpu.memory_space<vmem>>, vector<256x8xf32>
    tpu.vector_store %arg6[%c0_51, %c0_52], %157 {strides = array<i32>} : memref<256x8xf32, #tpu.memory_space<vmem>>, vector<256x8xf32>,
    return
  }
  func.func @transform_0(%arg0: i32) -> (i32, i32) {
    %c0_i32 = arith.constant 0 : i32
    %c0_i32_0 = arith.constant 0 : i32
    return %arg0, %c0_i32 : i32, i32
  }
  func.func @transform_1(%arg0: i32) -> (i32, i32) {
    %c0_i32 = arith.constant 0 : i32
    %c0_i32_0 = arith.constant 0 : i32
    %c0_i32_1 = arith.constant 0 : i32
    return %c0_i32, %c0_i32_0 : i32, i32
  }
  func.func @transform_2(%arg0: i32) -> (i32, i32) {
    %c0_i32 = arith.constant 0 : i32
    %c0_i32_0 = arith.constant 0 : i32
    %c0_i32_1 = arith.constant 0 : i32
    return %c0_i32, %c0_i32_0 : i32, i32
  }
  func.func @transform_3(%arg0: i32) -> (i32, i32) {
    %c0_i32 = arith.constant 0 : i32
    %c0_i32_0 = arith.constant 0 : i32
    %c0_i32_1 = arith.constant 0 : i32
    return %c0_i32, %c0_i32_0 : i32, i32
  }
  func.func @transform_4(%arg0: i32) -> (i32, i32) {
    %c0_i32 = arith.constant 0 : i32
    %c0_i32_0 = arith.constant 0 : i32
    return %arg0, %c0_i32 : i32, i32
  }
  func.func @transform_5(%arg0: i32) -> (i32, i32) {
    %c0_i32 = arith.constant 0 : i32
    %c0_i32_0 = arith.constant 0 : i32
    return %arg0, %c0_i32 : i32, i32
  }
}

</mosaic_0001>

<llo_original>
// kernel: tpu_custom_call.1
$region0: #{tpu_custom_call.1}
  #allocation0 [shape = 'u32[]', space=smem, size = 0x4, offset = 0x4, fixed_abs, tag = 'smem constant byte address 0x4 - core index']
  #allocation1 [shape = 'u32[144,128]{1,0:T(1,128)}', space=vmem, size = 0x12000, scoped, tag = 'internal scratch']
  #allocation2 [shape = 'bf16[1024,128]{1,0:T(16,128)(2,1)}', space=vmem, size = 0x40000, scoped, tag = 'scratch operand']
  %s0 = inlined_call_operand.hbm [shape: f32[256,128], index: 0, kind: input, shape index: {}]
  %s1 = inlined_call_operand.hbm [shape: f32[8,128], index: 1, kind: input, shape index: {}]
  %s2 = inlined_call_operand.hbm [shape: bf16[128,32], index: 2, kind: input, shape index: {}]
  %s3 = inlined_call_operand.hbm [shape: bf16[32,256], index: 3, kind: input, shape index: {}]
  %s4 = inlined_call_operand.hbm [shape: f32[256,64], index: 4, kind: output, shape index: {0}]
  %s5 = inlined_call_operand.hbm [shape: f32[256,8], index: 5, kind: output, shape index: {1}]
  %6 = xla_tuple %s4, %s5
  %s7 = sld [smem:[#allocation0]]
  $region50: #{tpu_custom_call.1} parent=0
    _
  %s9 = ssub.s32 1, %s7
  %s10 = scalar_select 0, %s9, %s7
  $region1: #{tpu_custom_call.1} parent=0
    #allocation3 [shape = 'u8[131072]{0}', space=vmem, size = 0x20000, scoped, tag = 'input window, operand 0, single buffered']
    #allocation4 [shape = 's32[1]{0}', space=sflag, size = 0x4, scoped, tag = 'scoped memory for tpu_custom_call.1']
    #allocation5 [shape = 's32[1]{0}', space=sflag, size = 0x4, scoped, tag = 'scoped memory for tpu_custom_call.1']
    #allocation6 [shape = 'u8[4096]{0}', space=vmem, size = 0x1000, scoped, tag = 'input window, operand 1, single buffered']
    #allocation7 [shape = 's32[1]{0}', space=sflag, size = 0x4, scoped, tag = 'scoped memory for tpu_custom_call.1']
    #allocation8 [shape = 'u8[32768]{0}', space=vmem, size = 0x8000, scoped, tag = 'input window, operand 2, single buffered']
    #allocation9 [shape = 'u8[16384]{0}', space=vmem, size = 0x4000, scoped, tag = 'input window, operand 3, single buffered']
    #allocation10 [shape = 's32[1]{0}', space=sflag, size = 0x4, scoped, tag = 'scoped memory for tpu_custom_call.1']
    #allocation11 [shape = 'u8[131072]{0}', space=vmem, size = 0x20000, scoped, tag = 'output window, operand 0, single buffered']
    #allocation12 [shape = 'u8[131072]{0}', space=vmem, size = 0x20000, scoped, tag = 'output window, operand 1, single buffered']
    #allocation13 [shape = 's32[1]{0}', space=sflag, size = 0x4, scoped, tag = 'scoped memory for tpu_custom_call.1']
    %11 = vsyncpa [#allocation4], 0
    %12 = vsyncpa [#allocation7], 0
    %13 = vsyncpa [#allocation10], 0
    %14 = vsyncpa [#allocation5], 0
    %15 = vsyncpa [#allocation13], 0
    // Predicated region
    $region2: #{tpu_custom_call.1} parent=1 // pred_check
      _
    $region3: #{tpu_custom_call.1} parent=1 // pred_check_branch
      %17 = sbr.rel (0) target = $region5
    $region4: #{tpu_custom_call.1} parent=1 // pred_region
      %s19 = ssub.s32 4096, 4096
      %20 = vsyncadd [#allocation4], %s19
      %s21 = sshll.u32 [#allocation3], 4
      %s22 = int_to_ptr.vmem [resolvable:$true] %s21
      %27 = dma.hbm_to_vmem [thread:$0]  %s0, 4096, %s22, [#allocation4], 128, 128, 8
    $region5: #{tpu_custom_call.1} parent=1 // pred_fallthru
      _
    // Predicated region
    $region6: #{tpu_custom_call.1} parent=1 // pred_check
      _
    $region7: #{tpu_custom_call.1} parent=1 // pred_check_branch
      %29 = sbr.rel (0) target = $region9
    $region8: #{tpu_custom_call.1} parent=1 // pred_region
      %s31 = ssub.s32 128, 128
      %32 = vsyncadd [#allocation7], %s31
      %s34 = sshll.u32 [#allocation6], 4
      %s35 = int_to_ptr.vmem [resolvable:$true] %s34
      %37 = dma.hbm_to_vmem [thread:$0]  %s1, 128, %s35, [#allocation7]
    $region9: #{tpu_custom_call.1} parent=1 // pred_fallthru
      _
    // Predicated region
    $region10: #{tpu_custom_call.1} parent=1 // pred_check
      _
    $region11: #{tpu_custom_call.1} parent=1 // pred_check_branch
      %39 = sbr.rel (0) target = $region13
    $region12: #{tpu_custom_call.1} parent=1 // pred_region
      %s41 = ssub.s32 1024, 1024
      %42 = vsyncadd [#allocation7], %s41
      %s43 = sshll.u32 [#allocation8], 4
      %s44 = int_to_ptr.vmem [resolvable:$true] %s43
      %49 = dma.hbm_to_vmem [thread:$0]  %s2, 1024, %s44, [#allocation7], 64, 64, 4
    $region13: #{tpu_custom_call.1} parent=1 // pred_fallthru
      _
    // Predicated region
    $region14: #{tpu_custom_call.1} parent=1 // pred_check
      _
    $region15: #{tpu_custom_call.1} parent=1 // pred_check_branch
      %51 = sbr.rel (0) target = $region17
    $region16: #{tpu_custom_call.1} parent=1 // pred_region
      %s53 = ssub.s32 512, 512
      %54 = vsyncadd [#allocation10], %s53
      %s55 = sshll.u32 [#allocation9], 4
      %s56 = int_to_ptr.vmem [resolvable:$true] %s55
      %61 = dma.hbm_to_vmem [thread:$0]  %s3, 512, %s56, [#allocation10], 128, 128, 8
    $region17: #{tpu_custom_call.1} parent=1 // pred_fallthru
      _
    // Predicated region
    $region18: #{tpu_custom_call.1} parent=1 // pred_check
      _
    $region19: #{tpu_custom_call.1} parent=1 // pred_check_branch
      %63 = sbr.rel (0) target = $region21
    $region20: #{tpu_custom_call.1} parent=1 // pred_region
      %64 = dma.done [#allocation4], 4096
    $region21: #{tpu_custom_call.1} parent=1 // pred_fallthru
      _
    // Predicated region
    $region22: #{tpu_custom_call.1} parent=1 // pred_check
      _
    $region23: #{tpu_custom_call.1} parent=1 // pred_check_branch
      %66 = sbr.rel (0) target = $region25
    $region24: #{tpu_custom_call.1} parent=1 // pred_region
      %67 = dma.done [#allocation7], 128
    $region25: #{tpu_custom_call.1} parent=1 // pred_fallthru
      _
    // Predicated region
    $region26: #{tpu_custom_call.1} parent=1 // pred_check
      _
    $region27: #{tpu_custom_call.1} parent=1 // pred_check_branch
      %69 = sbr.rel (0) target = $region29
    $region28: #{tpu_custom_call.1} parent=1 // pred_region
      %70 = dma.done [#allocation7], 1024
    $region29: #{tpu_custom_call.1} parent=1 // pred_fallthru
      _
    // Predicated region
    $region30: #{tpu_custom_call.1} parent=1 // pred_check
      _
    $region31: #{tpu_custom_call.1} parent=1 // pred_check_branch
      %72 = sbr.rel (0) target = $region33
    $region32: #{tpu_custom_call.1} parent=1 // pred_region
      %73 = dma.done [#allocation10], 512
    $region33: #{tpu_custom_call.1} parent=1 // pred_fallthru
      _
    %v75 = vld [vmem:[#allocation3] sm:$0xff]
    %v76 = vld [vmem:[#allocation3 + $0x8] sm:$0xff]
    %v77 = vld [vmem:[#allocation3 + $0x10] sm:$0xff]
    %v78 = vld [vmem:[#allocation3 + $0x18] sm:$0xff]
    %v79 = vld [vmem:[#allocation3 + $0x20] sm:$0xff]
    %v80 = vld [vmem:[#allocation3 + $0x28] sm:$0xff]
    %v81 = vld [vmem:[#allocation3 + $0x30] sm:$0xff]
    %v82 = vld [vmem:[#allocation3 + $0x38] sm:$0xff]
    %v83 = vld [vmem:[#allocation3 + $0x40] sm:$0xff]
    %v84 = vld [vmem:[#allocation3 + $0x48] sm:$0xff]
    %v85 = vld [vmem:[#allocation3 + $0x50] sm:$0xff]
    %v86 = vld [vmem:[#allocation3 + $0x58] sm:$0xff]
    %v87 = vld [vmem:[#allocation3 + $0x60] sm:$0xff]
    %v88 = vld [vmem:[#allocation3 + $0x68] sm:$0xff]
    %v89 = vld [vmem:[#allocation3 + $0x70] sm:$0xff]
    %v90 = vld [vmem:[#allocation3 + $0x78] sm:$0xff]
    %v91 = vld [vmem:[#allocation3 + $0x80] sm:$0xff]
    %v92 = vld [vmem:[#allocation3 + $0x88] sm:$0xff]
    %v93 = vld [vmem:[#allocation3 + $0x90] sm:$0xff]
    %v94 = vld [vmem:[#allocation3 + $0x98] sm:$0xff]
    %v95 = vld [vmem:[#allocation3 + $0xa0] sm:$0xff]
    %v96 = vld [vmem:[#allocation3 + $0xa8] sm:$0xff]
    %v97 = vld [vmem:[#allocation3 + $0xb0] sm:$0xff]
    %v98 = vld [vmem:[#allocation3 + $0xb8] sm:$0xff]
    %v99 = vld [vmem:[#allocation3 + $0xc0] sm:$0xff]
    %v100 = vld [vmem:[#allocation3 + $0xc8] sm:$0xff]
    %v101 = vld [vmem:[#allocation3 + $0xd0] sm:$0xff]
    %v102 = vld [vmem:[#allocation3 + $0xd8] sm:$0xff]
    %v103 = vld [vmem:[#allocation3 + $0xe0] sm:$0xff]
    %v104 = vld [vmem:[#allocation3 + $0xe8] sm:$0xff]
    %v105 = vld [vmem:[#allocation3 + $0xf0] sm:$0xff]
    %v106 = vld [vmem:[#allocation3 + $0xf8] sm:$0xff]
    %107 = vrot.lane.b32.xlu0 %v75, 64
    %v108 = vpop.permute.xlu0 %107
    %109 = vrot.lane.b32.xlu0 %v76, 64
    %v110 = vpop.permute.xlu0 %109
    %111 = vrot.lane.b32.xlu0 %v77, 64
    %v112 = vpop.permute.xlu0 %111
    %113 = vrot.lane.b32.xlu0 %v78, 64
    %v114 = vpop.permute.xlu0 %113
    %115 = vrot.lane.b32.xlu0 %v79, 64
    %v116 = vpop.permute.xlu0 %115
    %117 = vrot.lane.b32.xlu0 %v80, 64
    %v118 = vpop.permute.xlu0 %117
    %119 = vrot.lane.b32.xlu0 %v81, 64
    %v120 = vpop.permute.xlu0 %119
    %121 = vrot.lane.b32.xlu0 %v82, 64
    %v122 = vpop.permute.xlu0 %121
    %123 = vrot.lane.b32.xlu0 %v83, 64
    %v124 = vpop.permute.xlu0 %123
    %125 = vrot.lane.b32.xlu0 %v84, 64
    %v126 = vpop.permute.xlu0 %125
    %127 = vrot.lane.b32.xlu0 %v85, 64
    %v128 = vpop.permute.xlu0 %127
    %129 = vrot.lane.b32.xlu0 %v86, 64
    %v130 = vpop.permute.xlu0 %129
    %131 = vrot.lane.b32.xlu0 %v87, 64
    %v132 = vpop.permute.xlu0 %131
    %133 = vrot.lane.b32.xlu0 %v88, 64
    %v134 = vpop.permute.xlu0 %133
    %135 = vrot.lane.b32.xlu0 %v89, 64
    %v136 = vpop.permute.xlu0 %135
    %137 = vrot.lane.b32.xlu0 %v90, 64
    %v138 = vpop.permute.xlu0 %137
    %139 = vrot.lane.b32.xlu0 %v91, 64
    %v140 = vpop.permute.xlu0 %139
    %141 = vrot.lane.b32.xlu0 %v92, 64
    %v142 = vpop.permute.xlu0 %141
    %143 = vrot.lane.b32.xlu0 %v93, 64
    %v144 = vpop.permute.xlu0 %143
    %145 = vrot.lane.b32.xlu0 %v94, 64
    %v146 = vpop.permute.xlu0 %145
    %147 = vrot.lane.b32.xlu0 %v95, 64
    %v148 = vpop.permute.xlu0 %147
    %149 = vrot.lane.b32.xlu0 %v96, 64
    %v150 = vpop.permute.xlu0 %149
    %151 = vrot.lane.b32.xlu0 %v97, 64
    %v152 = vpop.permute.xlu0 %151
    %153 = vrot.lane.b32.xlu0 %v98, 64
    %v154 = vpop.permute.xlu0 %153
    %155 = vrot.lane.b32.xlu0 %v99, 64
    %v156 = vpop.permute.xlu0 %155
    %157 = vrot.lane.b32.xlu0 %v100, 64
    %v158 = vpop.permute.xlu0 %157
    %159 = vrot.lane.b32.xlu0 %v101, 64
    %v160 = vpop.permute.xlu0 %159
    %161 = vrot.lane.b32.xlu0 %v102, 64
    %v162 = vpop.permute.xlu0 %161
    %163 = vrot.lane.b32.xlu0 %v103, 64
    %v164 = vpop.permute.xlu0 %163
    %165 = vrot.lane.b32.xlu0 %v104, 64
    %v166 = vpop.permute.xlu0 %165
    %167 = vrot.lane.b32.xlu0 %v105, 64
    %v168 = vpop.permute.xlu0 %167
    %169 = vrot.lane.b32.xlu0 %v106, 64
    %v170 = vpop.permute.xlu0 %169
    %v171 = vld [vmem:[#allocation6] sm:$0xff]
    %v172 = vlaneseq
    %v173 = vshrl.u32 %v172, 7
    %v174 = vsub.s32 0, %v173
    %v175 = vrot.slane %v171, %v174
    %v176 = vmul.f32 %v175, %v75
    %v177 = vmul.f32 %v175, %v76
    %v178 = vmul.f32 %v175, %v77
    %v179 = vmul.f32 %v175, %v78
    %v180 = vmul.f32 %v175, %v79
    %v181 = vmul.f32 %v175, %v80
    %v182 = vmul.f32 %v175, %v81
    %v183 = vmul.f32 %v175, %v82
    %v184 = vmul.f32 %v175, %v83
    %v185 = vmul.f32 %v175, %v84
    %v186 = vmul.f32 %v175, %v85
    %v187 = vmul.f32 %v175, %v86
    %v188 = vmul.f32 %v175, %v87
    %v189 = vmul.f32 %v175, %v88
    %v190 = vmul.f32 %v175, %v89
    %v191 = vmul.f32 %v175, %v90
    %v192 = vmul.f32 %v175, %v91
    %v193 = vmul.f32 %v175, %v92
    %v194 = vmul.f32 %v175, %v93
    %v195 = vmul.f32 %v175, %v94
    %v196 = vmul.f32 %v175, %v95
    %v197 = vmul.f32 %v175, %v96
    %v198 = vmul.f32 %v175, %v97
    %v199 = vmul.f32 %v175, %v98
    %v200 = vmul.f32 %v175, %v99
    %v201 = vmul.f32 %v175, %v100
    %v202 = vmul.f32 %v175, %v101
    %v203 = vmul.f32 %v175, %v102
    %v204 = vmul.f32 %v175, %v103
    %v205 = vmul.f32 %v175, %v104
    %v206 = vmul.f32 %v175, %v105
    %v207 = vmul.f32 %v175, %v106
    %v208 = vlaneseq
    %v209 = vshrl.u32 %v208, 7
    %v210 = vsub.s32 4, %v209
    %v211 = vrot.slane %v171, %v210
    %v212 = vmul.f32 %v211, %v108
    %v213 = vmul.f32 %v211, %v110
    %v214 = vmul.f32 %v211, %v112
    %v215 = vmul.f32 %v211, %v114
    %v216 = vmul.f32 %v211, %v116
    %v217 = vmul.f32 %v211, %v118
    %v218 = vmul.f32 %v211, %v120
    %v219 = vmul.f32 %v211, %v122
    %v220 = vmul.f32 %v211, %v124
    %v221 = vmul.f32 %v211, %v126
    %v222 = vmul.f32 %v211, %v128
    %v223 = vmul.f32 %v211, %v130
    %v224 = vmul.f32 %v211, %v132
    %v225 = vmul.f32 %v211, %v134
    %v226 = vmul.f32 %v211, %v136
    %v227 = vmul.f32 %v211, %v138
    %v228 = vmul.f32 %v211, %v140
    %v229 = vmul.f32 %v211, %v142
    %v230 = vmul.f32 %v211, %v144
    %v231 = vmul.f32 %v211, %v146
    %v232 = vmul.f32 %v211, %v148
    %v233 = vmul.f32 %v211, %v150
    %v234 = vmul.f32 %v211, %v152
    %v235 = vmul.f32 %v211, %v154
    %v236 = vmul.f32 %v211, %v156
    %v237 = vmul.f32 %v211, %v158
    %v238 = vmul.f32 %v211, %v160
    %v239 = vmul.f32 %v211, %v162
    %v240 = vmul.f32 %v211, %v164
    %v241 = vmul.f32 %v211, %v166
    %v242 = vmul.f32 %v211, %v168
    %v243 = vmul.f32 %v211, %v170
    %v244 = vadd.f32 %v176, %v212
    %v245 = vadd.f32 %v177, %v213
    %v246 = vadd.f32 %v178, %v214
    %v247 = vadd.f32 %v179, %v215
    %v248 = vadd.f32 %v180, %v216
    %v249 = vadd.f32 %v181, %v217
    %v250 = vadd.f32 %v182, %v218
    %v251 = vadd.f32 %v183, %v219
    %v252 = vadd.f32 %v184, %v220
    %v253 = vadd.f32 %v185, %v221
    %v254 = vadd.f32 %v186, %v222
    %v255 = vadd.f32 %v187, %v223
    %v256 = vadd.f32 %v188, %v224
    %v257 = vadd.f32 %v189, %v225
    %v258 = vadd.f32 %v190, %v226
    %v259 = vadd.f32 %v191, %v227
    %v260 = vadd.f32 %v192, %v228
    %v261 = vadd.f32 %v193, %v229
    %v262 = vadd.f32 %v194, %v230
    %v263 = vadd.f32 %v195, %v231
    %v264 = vadd.f32 %v196, %v232
    %v265 = vadd.f32 %v197, %v233
    %v266 = vadd.f32 %v198, %v234
    %v267 = vadd.f32 %v199, %v235
    %v268 = vadd.f32 %v200, %v236
    %v269 = vadd.f32 %v201, %v237
    %v270 = vadd.f32 %v202, %v238
    %v271 = vadd.f32 %v203, %v239
    %v272 = vadd.f32 %v204, %v240
    %v273 = vadd.f32 %v205, %v241
    %v274 = vadd.f32 %v206, %v242
    %v275 = vadd.f32 %v207, %v243
    %vm276 = vcmp.lt.f32.partialorder %v244, 0.0
    %vm277 = vcmp.lt.f32.partialorder %v245, 0.0
    %vm278 = vcmp.lt.f32.partialorder %v246, 0.0
    %vm279 = vcmp.lt.f32.partialorder %v247, 0.0
    %vm280 = vcmp.lt.f32.partialorder %v248, 0.0
    %vm281 = vcmp.lt.f32.partialorder %v249, 0.0
    %vm282 = vcmp.lt.f32.partialorder %v250, 0.0
    %vm283 = vcmp.lt.f32.partialorder %v251, 0.0
    %vm284 = vcmp.lt.f32.partialorder %v252, 0.0
    %vm285 = vcmp.lt.f32.partialorder %v253, 0.0
    %vm286 = vcmp.lt.f32.partialorder %v254, 0.0
    %vm287 = vcmp.lt.f32.partialorder %v255, 0.0
    %vm288 = vcmp.lt.f32.partialorder %v256, 0.0
    %vm289 = vcmp.lt.f32.partialorder %v257, 0.0
    %vm290 = vcmp.lt.f32.partialorder %v258, 0.0
    %vm291 = vcmp.lt.f32.partialorder %v259, 0.0
    %vm292 = vcmp.lt.f32.partialorder %v260, 0.0
    %vm293 = vcmp.lt.f32.partialorder %v261, 0.0
    %vm294 = vcmp.lt.f32.partialorder %v262, 0.0
    %vm295 = vcmp.lt.f32.partialorder %v263, 0.0
    %vm296 = vcmp.lt.f32.partialorder %v264, 0.0
    %vm297 = vcmp.lt.f32.partialorder %v265, 0.0
    %vm298 = vcmp.lt.f32.partialorder %v266, 0.0
    %vm299 = vcmp.lt.f32.partialorder %v267, 0.0
    %vm300 = vcmp.lt.f32.partialorder %v268, 0.0
    %vm301 = vcmp.lt.f32.partialorder %v269, 0.0
    %vm302 = vcmp.lt.f32.partialorder %v270, 0.0
    %vm303 = vcmp.lt.f32.partialorder %v271, 0.0
    %vm304 = vcmp.lt.f32.partialorder %v272, 0.0
    %vm305 = vcmp.lt.f32.partialorder %v273, 0.0
    %vm306 = vcmp.lt.f32.partialorder %v274, 0.0
    %vm307 = vcmp.lt.f32.partialorder %v275, 0.0
    %v308 = vsel %vm276, 1, 0
    %v309 = vsel %vm277, 1, 0
    %v310 = vsel %vm278, 1, 0
    %v311 = vsel %vm279, 1, 0
    %v312 = vsel %vm280, 1, 0
    %v313 = vsel %vm281, 1, 0
    %v314 = vsel %vm282, 1, 0
    %v315 = vsel %vm283, 1, 0
    %v316 = vsel %vm284, 1, 0
    %v317 = vsel %vm285, 1, 0
    %v318 = vsel %vm286, 1, 0
    %v319 = vsel %vm287, 1, 0
    %v320 = vsel %vm288, 1, 0
    %v321 = vsel %vm289, 1, 0
    %v322 = vsel %vm290, 1, 0
    %v323 = vsel %vm291, 1, 0
    %v324 = vsel %vm292, 1, 0
    %v325 = vsel %vm293, 1, 0
    %v326 = vsel %vm294, 1, 0
    %v327 = vsel %vm295, 1, 0
    %v328 = vsel %vm296, 1, 0
    %v329 = vsel %vm297, 1, 0
    %v330 = vsel %vm298, 1, 0
    %v331 = vsel %vm299, 1, 0
    %v332 = vsel %vm300, 1, 0
    %v333 = vsel %vm301, 1, 0
    %v334 = vsel %vm302, 1, 0
    %v335 = vsel %vm303, 1, 0
    %v336 = vsel %vm304, 1, 0
    %v337 = vsel %vm305, 1, 0
    %v338 = vsel %vm306, 1, 0
    %v339 = vsel %vm307, 1, 0
    %v340 = vcvt.s32.f32 %v308
    %v341 = vcvt.s32.f32 %v309
    %v342 = vcvt.s32.f32 %v310
    %v343 = vcvt.s32.f32 %v311
    %v344 = vcvt.s32.f32 %v312
    %v345 = vcvt.s32.f32 %v313
    %v346 = vcvt.s32.f32 %v314
    %v347 = vcvt.s32.f32 %v315
    %v348 = vcvt.s32.f32 %v316
    %v349 = vcvt.s32.f32 %v317
    %v350 = vcvt.s32.f32 %v318
    %v351 = vcvt.s32.f32 %v319
    %v352 = vcvt.s32.f32 %v320
    %v353 = vcvt.s32.f32 %v321
    %v354 = vcvt.s32.f32 %v322
    %v355 = vcvt.s32.f32 %v323
    %v356 = vcvt.s32.f32 %v324
    %v357 = vcvt.s32.f32 %v325
    %v358 = vcvt.s32.f32 %v326
    %v359 = vcvt.s32.f32 %v327
    %v360 = vcvt.s32.f32 %v328
    %v361 = vcvt.s32.f32 %v329
    %v362 = vcvt.s32.f32 %v330
    %v363 = vcvt.s32.f32 %v331
    %v364 = vcvt.s32.f32 %v332
    %v365 = vcvt.s32.f32 %v333
    %v366 = vcvt.s32.f32 %v334
    %v367 = vcvt.s32.f32 %v335
    %v368 = vcvt.s32.f32 %v336
    %v369 = vcvt.s32.f32 %v337
    %v370 = vcvt.s32.f32 %v338
    %v371 = vcvt.s32.f32 %v339
    %v372 = vpack.c.bf16 %v341, %v340
    %v373 = vpack.c.bf16 %v343, %v342
    %v374 = vpack.c.bf16 %v345, %v344
    %v375 = vpack.c.bf16 %v347, %v346
    %v376 = vpack.c.bf16 %v349, %v348
    %v377 = vpack.c.bf16 %v351, %v350
    %v378 = vpack.c.bf16 %v353, %v352
    %v379 = vpack.c.bf16 %v355, %v354
    %v380 = vpack.c.bf16 %v357, %v356
    %v381 = vpack.c.bf16 %v359, %v358
    %v382 = vpack.c.bf16 %v361, %v360
    %v383 = vpack.c.bf16 %v363, %v362
    %v384 = vpack.c.bf16 %v365, %v364
    %v385 = vpack.c.bf16 %v367, %v366
    %v386 = vpack.c.bf16 %v369, %v368
    %v387 = vpack.c.bf16 %v371, %v370
    %388 = vst [vmem:[#allocation2] sm:$0xff] %v372
    %389 = vst [vmem:[#allocation2 + $0x8] sm:$0xff] %v373
    %390 = vst [vmem:[#allocation2 + $0x10] sm:$0xff] %v374
    %391 = vst [vmem:[#allocation2 + $0x18] sm:$0xff] %v375
    %392 = vst [vmem:[#allocation2 + $0x20] sm:$0xff] %v376
    %393 = vst [vmem:[#allocation2 + $0x28] sm:$0xff] %v377
    %394 = vst [vmem:[#allocation2 + $0x30] sm:$0xff] %v378
    %395 = vst [vmem:[#allocation2 + $0x38] sm:$0xff] %v379
    %396 = vst [vmem:[#allocation2 + $0x40] sm:$0xff] %v380
    %397 = vst [vmem:[#allocation2 + $0x48] sm:$0xff] %v381
    %398 = vst [vmem:[#allocation2 + $0x50] sm:$0xff] %v382
    %399 = vst [vmem:[#allocation2 + $0x58] sm:$0xff] %v383
    %400 = vst [vmem:[#allocation2 + $0x60] sm:$0xff] %v384
    %401 = vst [vmem:[#allocation2 + $0x68] sm:$0xff] %v385
    %402 = vst [vmem:[#allocation2 + $0x70] sm:$0xff] %v386
    %403 = vst [vmem:[#allocation2 + $0x78] sm:$0xff] %v387
    %v404 = vlaneseq
    %v405 = vshrl.u32 %v404, 7
    %v406 = vsub.s32 1, %v405
    %v407 = vrot.slane %v171, %v406
    %v408 = vmul.f32 %v407, %v75
    %v409 = vmul.f32 %v407, %v76
    %v410 = vmul.f32 %v407, %v77
    %v411 = vmul.f32 %v407, %v78
    %v412 = vmul.f32 %v407, %v79
    %v413 = vmul.f32 %v407, %v80
    %v414 = vmul.f32 %v407, %v81
    %v415 = vmul.f32 %v407, %v82
    %v416 = vmul.f32 %v407, %v83
    %v417 = vmul.f32 %v407, %v84
    %v418 = vmul.f32 %v407, %v85
    %v419 = vmul.f32 %v407, %v86
    %v420 = vmul.f32 %v407, %v87
    %v421 = vmul.f32 %v407, %v88
    %v422 = vmul.f32 %v407, %v89
    %v423 = vmul.f32 %v407, %v90
    %v424 = vmul.f32 %v407, %v91
    %v425 = vmul.f32 %v407, %v92
    %v426 = vmul.f32 %v407, %v93
    %v427 = vmul.f32 %v407, %v94
    %v428 = vmul.f32 %v407, %v95
    %v429 = vmul.f32 %v407, %v96
    %v430 = vmul.f32 %v407, %v97
    %v431 = vmul.f32 %v407, %v98
    %v432 = vmul.f32 %v407, %v99
    %v433 = vmul.f32 %v407, %v100
    %v434 = vmul.f32 %v407, %v101
    %v435 = vmul.f32 %v407, %v102
    %v436 = vmul.f32 %v407, %v103
    %v437 = vmul.f32 %v407, %v104
    %v438 = vmul.f32 %v407, %v105
    %v439 = vmul.f32 %v407, %v106
    %v440 = vlaneseq
    %v441 = vshrl.u32 %v440, 7
    %v442 = vsub.s32 5, %v441
    %v443 = vrot.slane %v171, %v442
    %v444 = vmul.f32 %v443, %v108
    %v445 = vmul.f32 %v443, %v110
    %v446 = vmul.f32 %v443, %v112
    %v447 = vmul.f32 %v443, %v114
    %v448 = vmul.f32 %v443, %v116
    %v449 = vmul.f32 %v443, %v118
    %v450 = vmul.f32 %v443, %v120
    %v451 = vmul.f32 %v443, %v122
    %v452 = vmul.f32 %v443, %v124
    %v453 = vmul.f32 %v443, %v126
    %v454 = vmul.f32 %v443, %v128
    %v455 = vmul.f32 %v443, %v130
    %v456 = vmul.f32 %v443, %v132
    %v457 = vmul.f32 %v443, %v134
    %v458 = vmul.f32 %v443, %v136
    %v459 = vmul.f32 %v443, %v138
    %v460 = vmul.f32 %v443, %v140
    %v461 = vmul.f32 %v443, %v142
    %v462 = vmul.f32 %v443, %v144
    %v463 = vmul.f32 %v443, %v146
    %v464 = vmul.f32 %v443, %v148
    %v465 = vmul.f32 %v443, %v150
    %v466 = vmul.f32 %v443, %v152
    %v467 = vmul.f32 %v443, %v154
    %v468 = vmul.f32 %v443, %v156
    %v469 = vmul.f32 %v443, %v158
    %v470 = vmul.f32 %v443, %v160
    %v471 = vmul.f32 %v443, %v162
    %v472 = vmul.f32 %v443, %v164
    %v473 = vmul.f32 %v443, %v166
    %v474 = vmul.f32 %v443, %v168
    %v475 = vmul.f32 %v443, %v170
    %v476 = vadd.f32 %v408, %v444
    %v477 = vadd.f32 %v409, %v445
    %v478 = vadd.f32 %v410, %v446
    %v479 = vadd.f32 %v411, %v447
    %v480 = vadd.f32 %v412, %v448
    %v481 = vadd.f32 %v413, %v449
    %v482 = vadd.f32 %v414, %v450
    %v483 = vadd.f32 %v415, %v451
    %v484 = vadd.f32 %v416, %v452
    %v485 = vadd.f32 %v417, %v453
    %v486 = vadd.f32 %v418, %v454
    %v487 = vadd.f32 %v419, %v455
    %v488 = vadd.f32 %v420, %v456
    %v489 = vadd.f32 %v421, %v457
    %v490 = vadd.f32 %v422, %v458
    %v491 = vadd.f32 %v423, %v459
    %v492 = vadd.f32 %v424, %v460
    %v493 = vadd.f32 %v425, %v461
    %v494 = vadd.f32 %v426, %v462
    %v495 = vadd.f32 %v427, %v463
    %v496 = vadd.f32 %v428, %v464
    %v497 = vadd.f32 %v429, %v465
    %v498 = vadd.f32 %v430, %v466
    %v499 = vadd.f32 %v431, %v467
    %v500 = vadd.f32 %v432, %v468
    %v501 = vadd.f32 %v433, %v469
    %v502 = vadd.f32 %v434, %v470
    %v503 = vadd.f32 %v435, %v471
    %v504 = vadd.f32 %v436, %v472
    %v505 = vadd.f32 %v437, %v473
    %v506 = vadd.f32 %v438, %v474
    %v507 = vadd.f32 %v439, %v475
    %vm508 = vcmp.lt.f32.partialorder %v476, 0.0
    %vm509 = vcmp.lt.f32.partialorder %v477, 0.0
    %vm510 = vcmp.lt.f32.partialorder %v478, 0.0
    %vm511 = vcmp.lt.f32.partialorder %v479, 0.0
    %vm512 = vcmp.lt.f32.partialorder %v480, 0.0
    %vm513 = vcmp.lt.f32.partialorder %v481, 0.0
    %vm514 = vcmp.lt.f32.partialorder %v482, 0.0
    %vm515 = vcmp.lt.f32.partialorder %v483, 0.0
    %vm516 = vcmp.lt.f32.partialorder %v484, 0.0
    %vm517 = vcmp.lt.f32.partialorder %v485, 0.0
    %vm518 = vcmp.lt.f32.partialorder %v486, 0.0
    %vm519 = vcmp.lt.f32.partialorder %v487, 0.0
    %vm520 = vcmp.lt.f32.partialorder %v488, 0.0
    %vm521 = vcmp.lt.f32.partialorder %v489, 0.0
    %vm522 = vcmp.lt.f32.partialorder %v490, 0.0
    %vm523 = vcmp.lt.f32.partialorder %v491, 0.0
    %vm524 = vcmp.lt.f32.partialorder %v492, 0.0
    %vm525 = vcmp.lt.f32.partialorder %v493, 0.0
    %vm526 = vcmp.lt.f32.partialorder %v494, 0.0
    %vm527 = vcmp.lt.f32.partialorder %v495, 0.0
    %vm528 = vcmp.lt.f32.partialorder %v496, 0.0
    %vm529 = vcmp.lt.f32.partialorder %v497, 0.0
    %vm530 = vcmp.lt.f32.partialorder %v498, 0.0
    %vm531 = vcmp.lt.f32.partialorder %v499, 0.0
    %vm532 = vcmp.lt.f32.partialorder %v500, 0.0
    %vm533 = vcmp.lt.f32.partialorder %v501, 0.0
    %vm534 = vcmp.lt.f32.partialorder %v502, 0.0
    %vm535 = vcmp.lt.f32.partialorder %v503, 0.0
    %vm536 = vcmp.lt.f32.partialorder %v504, 0.0
    %vm537 = vcmp.lt.f32.partialorder %v505, 0.0
    %vm538 = vcmp.lt.f32.partialorder %v506, 0.0
    %vm539 = vcmp.lt.f32.partialorder %v507, 0.0
    %v540 = vsel %vm508, 1, 0
    %v541 = vsel %vm509, 1, 0
    %v542 = vsel %vm510, 1, 0
    %v543 = vsel %vm511, 1, 0
    %v544 = vsel %vm512, 1, 0
    %v545 = vsel %vm513, 1, 0
    %v546 = vsel %vm514, 1, 0
    %v547 = vsel %vm515, 1, 0
    %v548 = vsel %vm516, 1, 0
    %v549 = vsel %vm517, 1, 0
    %v550 = vsel %vm518, 1, 0
    %v551 = vsel %vm519, 1, 0
    %v552 = vsel %vm520, 1, 0
    %v553 = vsel %vm521, 1, 0
    %v554 = vsel %vm522, 1, 0
    %v555 = vsel %vm523, 1, 0
    %v556 = vsel %vm524, 1, 0
    %v557 = vsel %vm525, 1, 0
    %v558 = vsel %vm526, 1, 0
    %v559 = vsel %vm527, 1, 0
    %v560 = vsel %vm528, 1, 0
    %v561 = vsel %vm529, 1, 0
    %v562 = vsel %vm530, 1, 0
    %v563 = vsel %vm531, 1, 0
    %v564 = vsel %vm532, 1, 0
    %v565 = vsel %vm533, 1, 0
    %v566 = vsel %vm534, 1, 0
    %v567 = vsel %vm535, 1, 0
    %v568 = vsel %vm536, 1, 0
    %v569 = vsel %vm537, 1, 0
    %v570 = vsel %vm538, 1, 0
    %v571 = vsel %vm539, 1, 0
    %v572 = vcvt.s32.f32 %v540
    %v573 = vcvt.s32.f32 %v541
    %v574 = vcvt.s32.f32 %v542
    %v575 = vcvt.s32.f32 %v543
    %v576 = vcvt.s32.f32 %v544
    %v577 = vcvt.s32.f32 %v545
    %v578 = vcvt.s32.f32 %v546
    %v579 = vcvt.s32.f32 %v547
    %v580 = vcvt.s32.f32 %v548
    %v581 = vcvt.s32.f32 %v549
    %v582 = vcvt.s32.f32 %v550
    %v583 = vcvt.s32.f32 %v551
    %v584 = vcvt.s32.f32 %v552
    %v585 = vcvt.s32.f32 %v553
    %v586 = vcvt.s32.f32 %v554
    %v587 = vcvt.s32.f32 %v555
    %v588 = vcvt.s32.f32 %v556
    %v589 = vcvt.s32.f32 %v557
    %v590 = vcvt.s32.f32 %v558
    %v591 = vcvt.s32.f32 %v559
    %v592 = vcvt.s32.f32 %v560
    %v593 = vcvt.s32.f32 %v561
    %v594 = vcvt.s32.f32 %v562
    %v595 = vcvt.s32.f32 %v563
    %v596 = vcvt.s32.f32 %v564
    %v597 = vcvt.s32.f32 %v565
    %v598 = vcvt.s32.f32 %v566
    %v599 = vcvt.s32.f32 %v567
    %v600 = vcvt.s32.f32 %v568
    %v601 = vcvt.s32.f32 %v569
    %v602 = vcvt.s32.f32 %v570
    %v603 = vcvt.s32.f32 %v571
    %v604 = vpack.c.bf16 %v573, %v572
    %v605 = vpack.c.bf16 %v575, %v574
    %v606 = vpack.c.bf16 %v577, %v576
    %v607 = vpack.c.bf16 %v579, %v578
    %v608 = vpack.c.bf16 %v581, %v580
    %v609 = vpack.c.bf16 %v583, %v582
    %v610 = vpack.c.bf16 %v585, %v584
    %v611 = vpack.c.bf16 %v587, %v586
    %v612 = vpack.c.bf16 %v589, %v588
    %v613 = vpack.c.bf16 %v591, %v590
    %v614 = vpack.c.bf16 %v593, %v592
    %v615 = vpack.c.bf16 %v595, %v594
    %v616 = vpack.c.bf16 %v597, %v596
    %v617 = vpack.c.bf16 %v599, %v598
    %v618 = vpack.c.bf16 %v601, %v600
    %v619 = vpack.c.bf16 %v603, %v602
    %620 = vst [vmem:[#allocation2 + $0x80] sm:$0xff] %v604
    %621 = vst [vmem:[#allocation2 + $0x88] sm:$0xff] %v605
    %622 = vst [vmem:[#allocation2 + $0x90] sm:$0xff] %v606
    %623 = vst [vmem:[#allocation2 + $0x98] sm:$0xff] %v607
    %624 = vst [vmem:[#allocation2 + $0xa0] sm:$0xff] %v608
    %625 = vst [vmem:[#allocation2 + $0xa8] sm:$0xff] %v609
    %626 = vst [vmem:[#allocation2 + $0xb0] sm:$0xff] %v610
    %627 = vst [vmem:[#allocation2 + $0xb8] sm:$0xff] %v611
    %628 = vst [vmem:[#allocation2 + $0xc0] sm:$0xff] %v612
    %629 = vst [vmem:[#allocation2 + $0xc8] sm:$0xff] %v613
    %630 = vst [vmem:[#allocation2 + $0xd0] sm:$0xff] %v614
    %631 = vst [vmem:[#allocation2 + $0xd8] sm:$0xff] %v615
    %632 = vst [vmem:[#allocation2 + $0xe0] sm:$0xff] %v616
    %633 = vst [vmem:[#allocation2 + $0xe8] sm:$0xff] %v617
    %634 = vst [vmem:[#allocation2 + $0xf0] sm:$0xff] %v618
    %635 = vst [vmem:[#allocation2 + $0xf8] sm:$0xff] %v619
    %v636 = vlaneseq
    %v637 = vshrl.u32 %v636, 7
    %v638 = vsub.s32 2, %v637
    %v639 = vrot.slane %v171, %v638
    %v640 = vmul.f32 %v639, %v75
    %v641 = vmul.f32 %v639, %v76
    %v642 = vmul.f32 %v639, %v77
    %v643 = vmul.f32 %v639, %v78
    %v644 = vmul.f32 %v639, %v79
    %v645 = vmul.f32 %v639, %v80
    %v646 = vmul.f32 %v639, %v81
    %v647 = vmul.f32 %v639, %v82
    %v648 = vmul.f32 %v639, %v83
    %v649 = vmul.f32 %v639, %v84
    %v650 = vmul.f32 %v639, %v85
    %v651 = vmul.f32 %v639, %v86
    %v652 = vmul.f32 %v639, %v87
    %v653 = vmul.f32 %v639, %v88
    %v654 = vmul.f32 %v639, %v89
    %v655 = vmul.f32 %v639, %v90
    %v656 = vmul.f32 %v639, %v91
    %v657 = vmul.f32 %v639, %v92
    %v658 = vmul.f32 %v639, %v93
    %v659 = vmul.f32 %v639, %v94
    %v660 = vmul.f32 %v639, %v95
    %v661 = vmul.f32 %v639, %v96
    %v662 = vmul.f32 %v639, %v97
    %v663 = vmul.f32 %v639, %v98
    %v664 = vmul.f32 %v639, %v99
    %v665 = vmul.f32 %v639, %v100
    %v666 = vmul.f32 %v639, %v101
    %v667 = vmul.f32 %v639, %v102
    %v668 = vmul.f32 %v639, %v103
    %v669 = vmul.f32 %v639, %v104
    %v670 = vmul.f32 %v639, %v105
    %v671 = vmul.f32 %v639, %v106
    %v672 = vlaneseq
    %v673 = vshrl.u32 %v672, 7
    %v674 = vsub.s32 6, %v673
    %v675 = vrot.slane %v171, %v674
    %v676 = vmul.f32 %v675, %v108
    %v677 = vmul.f32 %v675, %v110
    %v678 = vmul.f32 %v675, %v112
    %v679 = vmul.f32 %v675, %v114
    %v680 = vmul.f32 %v675, %v116
    %v681 = vmul.f32 %v675, %v118
    %v682 = vmul.f32 %v675, %v120
    %v683 = vmul.f32 %v675, %v122
    %v684 = vmul.f32 %v675, %v124
    %v685 = vmul.f32 %v675, %v126
    %v686 = vmul.f32 %v675, %v128
    %v687 = vmul.f32 %v675, %v130
    %v688 = vmul.f32 %v675, %v132
    %v689 = vmul.f32 %v675, %v134
    %v690 = vmul.f32 %v675, %v136
    %v691 = vmul.f32 %v675, %v138
    %v692 = vmul.f32 %v675, %v140
    %v693 = vmul.f32 %v675, %v142
    %v694 = vmul.f32 %v675, %v144
    %v695 = vmul.f32 %v675, %v146
    %v696 = vmul.f32 %v675, %v148
    %v697 = vmul.f32 %v675, %v150
    %v698 = vmul.f32 %v675, %v152
    %v699 = vmul.f32 %v675, %v154
    %v700 = vmul.f32 %v675, %v156
    %v701 = vmul.f32 %v675, %v158
    %v702 = vmul.f32 %v675, %v160
    %v703 = vmul.f32 %v675, %v162
    %v704 = vmul.f32 %v675, %v164
    %v705 = vmul.f32 %v675, %v166
    %v706 = vmul.f32 %v675, %v168
    %v707 = vmul.f32 %v675, %v170
    %v708 = vadd.f32 %v640, %v676
    %v709 = vadd.f32 %v641, %v677
    %v710 = vadd.f32 %v642, %v678
    %v711 = vadd.f32 %v643, %v679
    %v712 = vadd.f32 %v644, %v680
    %v713 = vadd.f32 %v645, %v681
    %v714 = vadd.f32 %v646, %v682
    %v715 = vadd.f32 %v647, %v683
    %v716 = vadd.f32 %v648, %v684
    %v717 = vadd.f32 %v649, %v685
    %v718 = vadd.f32 %v650, %v686
    %v719 = vadd.f32 %v651, %v687
    %v720 = vadd.f32 %v652, %v688
    %v721 = vadd.f32 %v653, %v689
    %v722 = vadd.f32 %v654, %v690
    %v723 = vadd.f32 %v655, %v691
    %v724 = vadd.f32 %v656, %v692
    %v725 = vadd.f32 %v657, %v693
    %v726 = vadd.f32 %v658, %v694
    %v727 = vadd.f32 %v659, %v695
    %v728 = vadd.f32 %v660, %v696
    %v729 = vadd.f32 %v661, %v697
    %v730 = vadd.f32 %v662, %v698
    %v731 = vadd.f32 %v663, %v699
    %v732 = vadd.f32 %v664, %v700
    %v733 = vadd.f32 %v665, %v701
    %v734 = vadd.f32 %v666, %v702
    %v735 = vadd.f32 %v667, %v703
    %v736 = vadd.f32 %v668, %v704
    %v737 = vadd.f32 %v669, %v705
    %v738 = vadd.f32 %v670, %v706
    %v739 = vadd.f32 %v671, %v707
    %vm740 = vcmp.lt.f32.partialorder %v708, 0.0
    %vm741 = vcmp.lt.f32.partialorder %v709, 0.0
    %vm742 = vcmp.lt.f32.partialorder %v710, 0.0
    %vm743 = vcmp.lt.f32.partialorder %v711, 0.0
    %vm744 = vcmp.lt.f32.partialorder %v712, 0.0
    %vm745 = vcmp.lt.f32.partialorder %v713, 0.0
    %vm746 = vcmp.lt.f32.partialorder %v714, 0.0
    %vm747 = vcmp.lt.f32.partialorder %v715, 0.0
    %vm748 = vcmp.lt.f32.partialorder %v716, 0.0
    %vm749 = vcmp.lt.f32.partialorder %v717, 0.0
    %vm750 = vcmp.lt.f32.partialorder %v718, 0.0
    %vm751 = vcmp.lt.f32.partialorder %v719, 0.0
    %vm752 = vcmp.lt.f32.partialorder %v720, 0.0
    %vm753 = vcmp.lt.f32.partialorder %v721, 0.0
    %vm754 = vcmp.lt.f32.partialorder %v722, 0.0
    %vm755 = vcmp.lt.f32.partialorder %v723, 0.0
    %vm756 = vcmp.lt.f32.partialorder %v724, 0.0
    %vm757 = vcmp.lt.f32.partialorder %v725, 0.0
    %vm758 = vcmp.lt.f32.partialorder %v726, 0.0
    %vm759 = vcmp.lt.f32.partialorder %v727, 0.0
    %vm760 = vcmp.lt.f32.partialorder %v728, 0.0
    %vm761 = vcmp.lt.f32.partialorder %v729, 0.0
    %vm762 = vcmp.lt.f32.partialorder %v730, 0.0
    %vm763 = vcmp.lt.f32.partialorder %v731, 0.0
    %vm764 = vcmp.lt.f32.partialorder %v732, 0.0
    %vm765 = vcmp.lt.f32.partialorder %v733, 0.0
    %vm766 = vcmp.lt.f32.partialorder %v734, 0.0
    %vm767 = vcmp.lt.f32.partialorder %v735, 0.0
    %vm768 = vcmp.lt.f32.partialorder %v736, 0.0
    %vm769 = vcmp.lt.f32.partialorder %v737, 0.0
    %vm770 = vcmp.lt.f32.partialorder %v738, 0.0
    %vm771 = vcmp.lt.f32.partialorder %v739, 0.0
    %v772 = vsel %vm740, 1, 0
    %v773 = vsel %vm741, 1, 0
    %v774 = vsel %vm742, 1, 0
    %v775 = vsel %vm743, 1, 0
    %v776 = vsel %vm744, 1, 0
    %v777 = vsel %vm745, 1, 0
    %v778 = vsel %vm746, 1, 0
    %v779 = vsel %vm747, 1, 0
    %v780 = vsel %vm748, 1, 0
    %v781 = vsel %vm749, 1, 0
    %v782 = vsel %vm750, 1, 0
    %v783 = vsel %vm751, 1, 0
    %v784 = vsel %vm752, 1, 0
    %v785 = vsel %vm753, 1, 0
    %v786 = vsel %vm754, 1, 0
    %v787 = vsel %vm755, 1, 0
    %v788 = vsel %vm756, 1, 0
    %v789 = vsel %vm757, 1, 0
    %v790 = vsel %vm758, 1, 0
    %v791 = vsel %vm759, 1, 0
    %v792 = vsel %vm760, 1, 0
    %v793 = vsel %vm761, 1, 0
    %v794 = vsel %vm762, 1, 0
    %v795 = vsel %vm763, 1, 0
    %v796 = vsel %vm764, 1, 0
    %v797 = vsel %vm765, 1, 0
    %v798 = vsel %vm766, 1, 0
    %v799 = vsel %vm767, 1, 0
    %v800 = vsel %vm768, 1, 0
    %v801 = vsel %vm769, 1, 0
    %v802 = vsel %vm770, 1, 0
    %v803 = vsel %vm771, 1, 0
    %v804 = vcvt.s32.f32 %v772
    %v805 = vcvt.s32.f32 %v773
    %v806 = vcvt.s32.f32 %v774
    %v807 = vcvt.s32.f32 %v775
    %v808 = vcvt.s32.f32 %v776
    %v809 = vcvt.s32.f32 %v777
    %v810 = vcvt.s32.f32 %v778
    %v811 = vcvt.s32.f32 %v779
    %v812 = vcvt.s32.f32 %v780
    %v813 = vcvt.s32.f32 %v781
    %v814 = vcvt.s32.f32 %v782
    %v815 = vcvt.s32.f32 %v783
    %v816 = vcvt.s32.f32 %v784
    %v817 = vcvt.s32.f32 %v785
    %v818 = vcvt.s32.f32 %v786
    %v819 = vcvt.s32.f32 %v787
    %v820 = vcvt.s32.f32 %v788
    %v821 = vcvt.s32.f32 %v789
    %v822 = vcvt.s32.f32 %v790
    %v823 = vcvt.s32.f32 %v791
    %v824 = vcvt.s32.f32 %v792
    %v825 = vcvt.s32.f32 %v793
    %v826 = vcvt.s32.f32 %v794
    %v827 = vcvt.s32.f32 %v795
    %v828 = vcvt.s32.f32 %v796
    %v829 = vcvt.s32.f32 %v797
    %v830 = vcvt.s32.f32 %v798
    %v831 = vcvt.s32.f32 %v799
    %v832 = vcvt.s32.f32 %v800
    %v833 = vcvt.s32.f32 %v801
    %v834 = vcvt.s32.f32 %v802
    %v835 = vcvt.s32.f32 %v803
    %v836 = vpack.c.bf16 %v805, %v804
    %v837 = vpack.c.bf16 %v807, %v806
    %v838 = vpack.c.bf16 %v809, %v808
    %v839 = vpack.c.bf16 %v811, %v810
    %v840 = vpack.c.bf16 %v813, %v812
    %v841 = vpack.c.bf16 %v815, %v814
    %v842 = vpack.c.bf16 %v817, %v816
    %v843 = vpack.c.bf16 %v819, %v818
    %v844 = vpack.c.bf16 %v821, %v820
    %v845 = vpack.c.bf16 %v823, %v822
    %v846 = vpack.c.bf16 %v825, %v824
    %v847 = vpack.c.bf16 %v827, %v826
    %v848 = vpack.c.bf16 %v829, %v828
    %v849 = vpack.c.bf16 %v831, %v830
    %v850 = vpack.c.bf16 %v833, %v832
    %v851 = vpack.c.bf16 %v835, %v834
    %852 = vst [vmem:[#allocation2 + $0x100] sm:$0xff] %v836
    %853 = vst [vmem:[#allocation2 + $0x108] sm:$0xff] %v837
    %854 = vst [vmem:[#allocation2 + $0x110] sm:$0xff] %v838
    %855 = vst [vmem:[#allocation2 + $0x118] sm:$0xff] %v839
    %856 = vst [vmem:[#allocation2 + $0x120] sm:$0xff] %v840
    %857 = vst [vmem:[#allocation2 + $0x128] sm:$0xff] %v841
    %858 = vst [vmem:[#allocation2 + $0x130] sm:$0xff] %v842
    %859 = vst [vmem:[#allocation2 + $0x138] sm:$0xff] %v843
    %860 = vst [vmem:[#allocation2 + $0x140] sm:$0xff] %v844
    %861 = vst [vmem:[#allocation2 + $0x148] sm:$0xff] %v845
    %862 = vst [vmem:[#allocation2 + $0x150] sm:$0xff] %v846
    %863 = vst [vmem:[#allocation2 + $0x158] sm:$0xff] %v847
    %864 = vst [vmem:[#allocation2 + $0x160] sm:$0xff] %v848
    %865 = vst [vmem:[#allocation2 + $0x168] sm:$0xff] %v849
    %866 = vst [vmem:[#allocation2 + $0x170] sm:$0xff] %v850
    %867 = vst [vmem:[#allocation2 + $0x178] sm:$0xff] %v851
    %v868 = vlaneseq
    %v869 = vshrl.u32 %v868, 7
    %v870 = vsub.s32 3, %v869
    %v871 = vrot.slane %v171, %v870
    %v872 = vmul.f32 %v871, %v75
    %v873 = vmul.f32 %v871, %v76
    %v874 = vmul.f32 %v871, %v77
    %v875 = vmul.f32 %v871, %v78
    %v876 = vmul.f32 %v871, %v79
    %v877 = vmul.f32 %v871, %v80
    %v878 = vmul.f32 %v871, %v81
    %v879 = vmul.f32 %v871, %v82
    %v880 = vmul.f32 %v871, %v83
    %v881 = vmul.f32 %v871, %v84
    %v882 = vmul.f32 %v871, %v85
    %v883 = vmul.f32 %v871, %v86
    %v884 = vmul.f32 %v871, %v87
    %v885 = vmul.f32 %v871, %v88
    %v886 = vmul.f32 %v871, %v89
    %v887 = vmul.f32 %v871, %v90
    %v888 = vmul.f32 %v871, %v91
    %v889 = vmul.f32 %v871, %v92
    %v890 = vmul.f32 %v871, %v93
    %v891 = vmul.f32 %v871, %v94
    %v892 = vmul.f32 %v871, %v95
    %v893 = vmul.f32 %v871, %v96
    %v894 = vmul.f32 %v871, %v97
    %v895 = vmul.f32 %v871, %v98
    %v896 = vmul.f32 %v871, %v99
    %v897 = vmul.f32 %v871, %v100
    %v898 = vmul.f32 %v871, %v101
    %v899 = vmul.f32 %v871, %v102
    %v900 = vmul.f32 %v871, %v103
    %v901 = vmul.f32 %v871, %v104
    %v902 = vmul.f32 %v871, %v105
    %v903 = vmul.f32 %v871, %v106
    %v904 = vlaneseq
    %v905 = vshrl.u32 %v904, 7
    %v906 = vsub.s32 7, %v905
    %v907 = vrot.slane %v171, %v906
    %v908 = vmul.f32 %v907, %v108
    %v909 = vmul.f32 %v907, %v110
    %v910 = vmul.f32 %v907, %v112
    %v911 = vmul.f32 %v907, %v114
    %v912 = vmul.f32 %v907, %v116
    %v913 = vmul.f32 %v907, %v118
    %v914 = vmul.f32 %v907, %v120
    %v915 = vmul.f32 %v907, %v122
    %v916 = vmul.f32 %v907, %v124
    %v917 = vmul.f32 %v907, %v126
    %v918 = vmul.f32 %v907, %v128
    %v919 = vmul.f32 %v907, %v130
    %v920 = vmul.f32 %v907, %v132
    %v921 = vmul.f32 %v907, %v134
    %v922 = vmul.f32 %v907, %v136
    %v923 = vmul.f32 %v907, %v138
    %v924 = vmul.f32 %v907, %v140
    %v925 = vmul.f32 %v907, %v142
    %v926 = vmul.f32 %v907, %v144
    %v927 = vmul.f32 %v907, %v146
    %v928 = vmul.f32 %v907, %v148
    %v929 = vmul.f32 %v907, %v150
    %v930 = vmul.f32 %v907, %v152
    %v931 = vmul.f32 %v907, %v154
    %v932 = vmul.f32 %v907, %v156
    %v933 = vmul.f32 %v907, %v158
    %v934 = vmul.f32 %v907, %v160
    %v935 = vmul.f32 %v907, %v162
    %v936 = vmul.f32 %v907, %v164
    %v937 = vmul.f32 %v907, %v166
    %v938 = vmul.f32 %v907, %v168
    %v939 = vmul.f32 %v907, %v170
    %v940 = vadd.f32 %v872, %v908
    %v941 = vadd.f32 %v873, %v909
    %v942 = vadd.f32 %v874, %v910
    %v943 = vadd.f32 %v875, %v911
    %v944 = vadd.f32 %v876, %v912
    %v945 = vadd.f32 %v877, %v913
    %v946 = vadd.f32 %v878, %v914
    %v947 = vadd.f32 %v879, %v915
    %v948 = vadd.f32 %v880, %v916
    %v949 = vadd.f32 %v881, %v917
    %v950 = vadd.f32 %v882, %v918
    %v951 = vadd.f32 %v883, %v919
    %v952 = vadd.f32 %v884, %v920
    %v953 = vadd.f32 %v885, %v921
    %v954 = vadd.f32 %v886, %v922
    %v955 = vadd.f32 %v887, %v923
    %v956 = vadd.f32 %v888, %v924
    %v957 = vadd.f32 %v889, %v925
    %v958 = vadd.f32 %v890, %v926
    %v959 = vadd.f32 %v891, %v927
    %v960 = vadd.f32 %v892, %v928
    %v961 = vadd.f32 %v893, %v929
    %v962 = vadd.f32 %v894, %v930
    %v963 = vadd.f32 %v895, %v931
    %v964 = vadd.f32 %v896, %v932
    %v965 = vadd.f32 %v897, %v933
    %v966 = vadd.f32 %v898, %v934
    %v967 = vadd.f32 %v899, %v935
    %v968 = vadd.f32 %v900, %v936
    %v969 = vadd.f32 %v901, %v937
    %v970 = vadd.f32 %v902, %v938
    %v971 = vadd.f32 %v903, %v939
    %vm972 = vcmp.lt.f32.partialorder %v940, 0.0
    %vm973 = vcmp.lt.f32.partialorder %v941, 0.0
    %vm974 = vcmp.lt.f32.partialorder %v942, 0.0
    %vm975 = vcmp.lt.f32.partialorder %v943, 0.0
    %vm976 = vcmp.lt.f32.partialorder %v944, 0.0
    %vm977 = vcmp.lt.f32.partialorder %v945, 0.0
    %vm978 = vcmp.lt.f32.partialorder %v946, 0.0
    %vm979 = vcmp.lt.f32.partialorder %v947, 0.0
    %vm980 = vcmp.lt.f32.partialorder %v948, 0.0
    %vm981 = vcmp.lt.f32.partialorder %v949, 0.0
    %vm982 = vcmp.lt.f32.partialorder %v950, 0.0
    %vm983 = vcmp.lt.f32.partialorder %v951, 0.0
    %vm984 = vcmp.lt.f32.partialorder %v952, 0.0
    %vm985 = vcmp.lt.f32.partialorder %v953, 0.0
    %vm986 = vcmp.lt.f32.partialorder %v954, 0.0
    %vm987 = vcmp.lt.f32.partialorder %v955, 0.0
    %vm988 = vcmp.lt.f32.partialorder %v956, 0.0
    %vm989 = vcmp.lt.f32.partialorder %v957, 0.0
    %vm990 = vcmp.lt.f32.partialorder %v958, 0.0
    %vm991 = vcmp.lt.f32.partialorder %v959, 0.0
    %vm992 = vcmp.lt.f32.partialorder %v960, 0.0
    %vm993 = vcmp.lt.f32.partialorder %v961, 0.0
    %vm994 = vcmp.lt.f32.partialorder %v962, 0.0
    %vm995 = vcmp.lt.f32.partialorder %v963, 0.0
    %vm996 = vcmp.lt.f32.partialorder %v964, 0.0
    %vm997 = vcmp.lt.f32.partialorder %v965, 0.0
    %vm998 = vcmp.lt.f32.partialorder %v966, 0.0
    %vm999 = vcmp.lt.f32.partialorder %v967, 0.0
    %vm1000 = vcmp.lt.f32.partialorder %v968, 0.0
    %vm1001 = vcmp.lt.f32.partialorder %v969, 0.0
    %vm1002 = vcmp.lt.f32.partialorder %v970, 0.0
    %vm1003 = vcmp.lt.f32.partialorder %v971, 0.0
    %v1004 = vsel %vm972, 1, 0
    %v1005 = vsel %vm973, 1, 0
    %v1006 = vsel %vm974, 1, 0
    %v1007 = vsel %vm975, 1, 0
    %v1008 = vsel %vm976, 1, 0
    %v1009 = vsel %vm977, 1, 0
    %v1010 = vsel %vm978, 1, 0
    %v1011 = vsel %vm979, 1, 0
    %v1012 = vsel %vm980, 1, 0
    %v1013 = vsel %vm981, 1, 0
    %v1014 = vsel %vm982, 1, 0
    %v1015 = vsel %vm983, 1, 0
    %v1016 = vsel %vm984, 1, 0
    %v1017 = vsel %vm985, 1, 0
    %v1018 = vsel %vm986, 1, 0
    %v1019 = vsel %vm987, 1, 0
    %v1020 = vsel %vm988, 1, 0
    %v1021 = vsel %vm989, 1, 0
    %v1022 = vsel %vm990, 1, 0
    %v1023 = vsel %vm991, 1, 0
    %v1024 = vsel %vm992, 1, 0
    %v1025 = vsel %vm993, 1, 0
    %v1026 = vsel %vm994, 1, 0
    %v1027 = vsel %vm995, 1, 0
    %v1028 = vsel %vm996, 1, 0
    %v1029 = vsel %vm997, 1, 0
    %v1030 = vsel %vm998, 1, 0
    %v1031 = vsel %vm999, 1, 0
    %v1032 = vsel %vm1000, 1, 0
    %v1033 = vsel %vm1001, 1, 0
    %v1034 = vsel %vm1002, 1, 0
    %v1035 = vsel %vm1003, 1, 0
    %v1036 = vcvt.s32.f32 %v1004
    %v1037 = vcvt.s32.f32 %v1005
    %v1038 = vcvt.s32.f32 %v1006
    %v1039 = vcvt.s32.f32 %v1007
    %v1040 = vcvt.s32.f32 %v1008
    %v1041 = vcvt.s32.f32 %v1009
    %v1042 = vcvt.s32.f32 %v1010
    %v1043 = vcvt.s32.f32 %v1011
    %v1044 = vcvt.s32.f32 %v1012
    %v1045 = vcvt.s32.f32 %v1013
    %v1046 = vcvt.s32.f32 %v1014
    %v1047 = vcvt.s32.f32 %v1015
    %v1048 = vcvt.s32.f32 %v1016
    %v1049 = vcvt.s32.f32 %v1017
    %v1050 = vcvt.s32.f32 %v1018
    %v1051 = vcvt.s32.f32 %v1019
    %v1052 = vcvt.s32.f32 %v1020
    %v1053 = vcvt.s32.f32 %v1021
    %v1054 = vcvt.s32.f32 %v1022
    %v1055 = vcvt.s32.f32 %v1023
    %v1056 = vcvt.s32.f32 %v1024
    %v1057 = vcvt.s32.f32 %v1025
    %v1058 = vcvt.s32.f32 %v1026
    %v1059 = vcvt.s32.f32 %v1027
    %v1060 = vcvt.s32.f32 %v1028
    %v1061 = vcvt.s32.f32 %v1029
    %v1062 = vcvt.s32.f32 %v1030
    %v1063 = vcvt.s32.f32 %v1031
    %v1064 = vcvt.s32.f32 %v1032
    %v1065 = vcvt.s32.f32 %v1033
    %v1066 = vcvt.s32.f32 %v1034
    %v1067 = vcvt.s32.f32 %v1035
    %v1068 = vpack.c.bf16 %v1037, %v1036
    %v1069 = vpack.c.bf16 %v1039, %v1038
    %v1070 = vpack.c.bf16 %v1041, %v1040
    %v1071 = vpack.c.bf16 %v1043, %v1042
    %v1072 = vpack.c.bf16 %v1045, %v1044
    %v1073 = vpack.c.bf16 %v1047, %v1046
    %v1074 = vpack.c.bf16 %v1049, %v1048
    %v1075 = vpack.c.bf16 %v1051, %v1050
    %v1076 = vpack.c.bf16 %v1053, %v1052
    %v1077 = vpack.c.bf16 %v1055, %v1054
    %v1078 = vpack.c.bf16 %v1057, %v1056
    %v1079 = vpack.c.bf16 %v1059, %v1058
    %v1080 = vpack.c.bf16 %v1061, %v1060
    %v1081 = vpack.c.bf16 %v1063, %v1062
    %v1082 = vpack.c.bf16 %v1065, %v1064
    %v1083 = vpack.c.bf16 %v1067, %v1066
    %1084 = vst [vmem:[#allocation2 + $0x180] sm:$0xff] %v1068
    %1085 = vst [vmem:[#allocation2 + $0x188] sm:$0xff] %v1069
    %1086 = vst [vmem:[#allocation2 + $0x190] sm:$0xff] %v1070
    %1087 = vst [vmem:[#allocation2 + $0x198] sm:$0xff] %v1071
    %1088 = vst [vmem:[#allocation2 + $0x1a0] sm:$0xff] %v1072
    %1089 = vst [vmem:[#allocation2 + $0x1a8] sm:$0xff] %v1073
    %1090 = vst [vmem:[#allocation2 + $0x1b0] sm:$0xff] %v1074
    %1091 = vst [vmem:[#allocation2 + $0x1b8] sm:$0xff] %v1075
    %1092 = vst [vmem:[#allocation2 + $0x1c0] sm:$0xff] %v1076
    %1093 = vst [vmem:[#allocation2 + $0x1c8] sm:$0xff] %v1077
    %1094 = vst [vmem:[#allocation2 + $0x1d0] sm:$0xff] %v1078
    %1095 = vst [vmem:[#allocation2 + $0x1d8] sm:$0xff] %v1079
    %1096 = vst [vmem:[#allocation2 + $0x1e0] sm:$0xff] %v1080
    %1097 = vst [vmem:[#allocation2 + $0x1e8] sm:$0xff] %v1081
    %1098 = vst [vmem:[#allocation2 + $0x1f0] sm:$0xff] %v1082
    %1099 = vst [vmem:[#allocation2 + $0x1f8] sm:$0xff] %v1083
    %v1100 = vld [vmem:[#allocation2] sm:$0xff]
    %v1101 = vld [vmem:[#allocation2 + $0x8] sm:$0xff]
    %v1102 = vld [vmem:[#allocation2 + $0x10] sm:$0xff]
    %v1103 = vld [vmem:[#allocation2 + $0x18] sm:$0xff]
    %v1104 = vld [vmem:[#allocation2 + $0x20] sm:$0xff]
    %v1105 = vld [vmem:[#allocation2 + $0x28] sm:$0xff]
    %v1106 = vld [vmem:[#allocation2 + $0x30] sm:$0xff]
    %v1107 = vld [vmem:[#allocation2 + $0x38] sm:$0xff]
    %v1108 = vld [vmem:[#allocation2 + $0x40] sm:$0xff]
    %v1109 = vld [vmem:[#allocation2 + $0x48] sm:$0xff]
    %v1110 = vld [vmem:[#allocation2 + $0x50] sm:$0xff]
    %v1111 = vld [vmem:[#allocation2 + $0x58] sm:$0xff]
    %v1112 = vld [vmem:[#allocation2 + $0x60] sm:$0xff]
    %v1113 = vld [vmem:[#allocation2 + $0x68] sm:$0xff]
    %v1114 = vld [vmem:[#allocation2 + $0x70] sm:$0xff]
    %v1115 = vld [vmem:[#allocation2 + $0x78] sm:$0xff]
    %v1116 = vld [vmem:[#allocation2 + $0x80] sm:$0xff]
    %v1117 = vld [vmem:[#allocation2 + $0x88] sm:$0xff]
    %v1118 = vld [vmem:[#allocation2 + $0x90] sm:$0xff]
    %v1119 = vld [vmem:[#allocation2 + $0x98] sm:$0xff]
    %v1120 = vld [vmem:[#allocation2 + $0xa0] sm:$0xff]
    %v1121 = vld [vmem:[#allocation2 + $0xa8] sm:$0xff]
    %v1122 = vld [vmem:[#allocation2 + $0xb0] sm:$0xff]
    %v1123 = vld [vmem:[#allocation2 + $0xb8] sm:$0xff]
    %v1124 = vld [vmem:[#allocation2 + $0xc0] sm:$0xff]
    %v1125 = vld [vmem:[#allocation2 + $0xc8] sm:$0xff]
    %v1126 = vld [vmem:[#allocation2 + $0xd0] sm:$0xff]
    %v1127 = vld [vmem:[#allocation2 + $0xd8] sm:$0xff]
    %v1128 = vld [vmem:[#allocation2 + $0xe0] sm:$0xff]
    %v1129 = vld [vmem:[#allocation2 + $0xe8] sm:$0xff]
    %v1130 = vld [vmem:[#allocation2 + $0xf0] sm:$0xff]
    %v1131 = vld [vmem:[#allocation2 + $0xf8] sm:$0xff]
    %v1132 = vld [vmem:[#allocation2 + $0x100] sm:$0xff]
    %v1133 = vld [vmem:[#allocation2 + $0x108] sm:$0xff]
    %v1134 = vld [vmem:[#allocation2 + $0x110] sm:$0xff]
    %v1135 = vld [vmem:[#allocation2 + $0x118] sm:$0xff]
    %v1136 = vld [vmem:[#allocation2 + $0x120] sm:$0xff]
    %v1137 = vld [vmem:[#allocation2 + $0x128] sm:$0xff]
    %v1138 = vld [vmem:[#allocation2 + $0x130] sm:$0xff]
    %v1139 = vld [vmem:[#allocation2 + $0x138] sm:$0xff]
    %v1140 = vld [vmem:[#allocation2 + $0x140] sm:$0xff]
    %v1141 = vld [vmem:[#allocation2 + $0x148] sm:$0xff]
    %v1142 = vld [vmem:[#allocation2 + $0x150] sm:$0xff]
    %v1143 = vld [vmem:[#allocation2 + $0x158] sm:$0xff]
    %v1144 = vld [vmem:[#allocation2 + $0x160] sm:$0xff]
    %v1145 = vld [vmem:[#allocation2 + $0x168] sm:$0xff]
    %v1146 = vld [vmem:[#allocation2 + $0x170] sm:$0xff]
    %v1147 = vld [vmem:[#allocation2 + $0x178] sm:$0xff]
    %v1148 = vld [vmem:[#allocation2 + $0x180] sm:$0xff]
    %v1149 = vld [vmem:[#allocation2 + $0x188] sm:$0xff]
    %v1150 = vld [vmem:[#allocation2 + $0x190] sm:$0xff]
    %v1151 = vld [vmem:[#allocation2 + $0x198] sm:$0xff]
    %v1152 = vld [vmem:[#allocation2 + $0x1a0] sm:$0xff]
    %v1153 = vld [vmem:[#allocation2 + $0x1a8] sm:$0xff]
    %v1154 = vld [vmem:[#allocation2 + $0x1b0] sm:$0xff]
    %v1155 = vld [vmem:[#allocation2 + $0x1b8] sm:$0xff]
    %v1156 = vld [vmem:[#allocation2 + $0x1c0] sm:$0xff]
    %v1157 = vld [vmem:[#allocation2 + $0x1c8] sm:$0xff]
    %v1158 = vld [vmem:[#allocation2 + $0x1d0] sm:$0xff]
    %v1159 = vld [vmem:[#allocation2 + $0x1d8] sm:$0xff]
    %v1160 = vld [vmem:[#allocation2 + $0x1e0] sm:$0xff]
    %v1161 = vld [vmem:[#allocation2 + $0x1e8] sm:$0xff]
    %v1162 = vld [vmem:[#allocation2 + $0x1f0] sm:$0xff]
    %v1163 = vld [vmem:[#allocation2 + $0x1f8] sm:$0xff]
    %v1164 = vld [vmem:[#allocation8] sm:$0xf]
    %v1165 = vld [vmem:[#allocation8 + $0x4] sm:$0xf]
    %v1166 = vld [vmem:[#allocation8 + $0x8] sm:$0xf]
    %v1167 = vld [vmem:[#allocation8 + $0xc] sm:$0xf]
    %v1168 = vld [vmem:[#allocation8 + $0x10] sm:$0xf]
    %v1169 = vld [vmem:[#allocation8 + $0x14] sm:$0xf]
    %v1170 = vld [vmem:[#allocation8 + $0x18] sm:$0xf]
    %v1171 = vld [vmem:[#allocation8 + $0x1c] sm:$0xf]
    %v1172 = vld [vmem:[#allocation8 + $0x20] sm:$0xf]
    %v1173 = vld [vmem:[#allocation8 + $0x24] sm:$0xf]
    %v1174 = vld [vmem:[#allocation8 + $0x28] sm:$0xf]
    %v1175 = vld [vmem:[#allocation8 + $0x2c] sm:$0xf]
    %v1176 = vld [vmem:[#allocation8 + $0x30] sm:$0xf]
    %v1177 = vld [vmem:[#allocation8 + $0x34] sm:$0xf]
    %v1178 = vld [vmem:[#allocation8 + $0x38] sm:$0xf]
    %v1179 = vld [vmem:[#allocation8 + $0x3c] sm:$0xf]
    %v1196 = vunpack.c.l.b16 %v1164
    %v1197 = vunpack.c.l.b16 %v1165
    %v1198 = vunpack.c.l.b16 %v1166
    %v1199 = vunpack.c.l.b16 %v1167
    %v1200 = vunpack.c.l.b16 %v1168
    %v1201 = vunpack.c.l.b16 %v1169
    %v1202 = vunpack.c.l.b16 %v1170
    %v1203 = vunpack.c.l.b16 %v1171
    %v1204 = vunpack.c.l.b16 %v1172
    %v1205 = vunpack.c.l.b16 %v1173
    %v1206 = vunpack.c.l.b16 %v1174
    %v1207 = vunpack.c.l.b16 %v1175
    %v1208 = vunpack.c.l.b16 %v1176
    %v1209 = vunpack.c.l.b16 %v1177
    %v1210 = vunpack.c.l.b16 %v1178
    %v1211 = vunpack.c.l.b16 %v1179
    %v1212 = vpack.c.b16 %v1197, %v1196
    %v1213 = vpack.c.b16 %v1199, %v1198
    %v1214 = vpack.c.b16 %v1201, %v1200
    %v1215 = vpack.c.b16 %v1203, %v1202
    %v1216 = vpack.c.b16 %v1205, %v1204
    %v1217 = vpack.c.b16 %v1207, %v1206
    %v1218 = vpack.c.b16 %v1209, %v1208
    %v1219 = vpack.c.b16 %v1211, %v1210
    %1228 = vmatprep.subr.bf16.mxu0 0
    %1229 = vmatpush1.bf16.msra.mxu0 %v1212
    %1230 = vmatprep.subr.bf16.mxu0 0
    %1231 = vmatpush1.bf16.msra.mxu0 %v1213
    %1232 = vmatprep.subr.bf16.mxu0 0
    %1233 = vmatpush1.bf16.msra.mxu0 %v1214
    %1234 = vmatprep.subr.bf16.mxu0 0
    %1235 = vmatpush1.bf16.msra.mxu0 %v1215
    %1236 = vmatprep.subr.bf16.mxu0 0
    %1237 = vmatpush1.bf16.msra.mxu0 %v1216
    %1238 = vmatprep.subr.bf16.mxu0 0
    %1239 = vmatpush1.bf16.msra.mxu0 %v1217
    %1240 = vmatprep.subr.bf16.mxu0 0
    %1241 = vmatpush1.bf16.msra.mxu0 %v1218
    %1242 = vmatprep.subr.bf16.mxu0 0
    %1243 = vmatpush1.bf16.msra.mxu0 %v1219
    %1244 = vmatprep.subr.bf16.mxu0 0
    %1245 = vmatpush1.bf16.msra.mxu0 0
    %1246 = vmatprep.subr.bf16.mxu0 0
    %1247 = vmatpush1.bf16.msra.mxu0 0
    %1248 = vmatprep.subr.bf16.mxu0 0
    %1249 = vmatpush1.bf16.msra.mxu0 0
    %1250 = vmatprep.subr.bf16.mxu0 0
    %1251 = vmatpush1.bf16.msra.mxu0 0
    %1252 = vmatprep.subr.bf16.mxu0 0
    %1253 = vmatpush1.bf16.msra.mxu0 0
    %1254 = vmatprep.subr.bf16.mxu0 0
    %1255 = vmatpush1.bf16.msra.mxu0 0
    %1256 = vmatprep.subr.bf16.mxu0 0
    %1257 = vmatpush1.bf16.msra.mxu0 0
    %1258 = vmatprep.subr.bf16.mxu0 0
    %1259 = vmatpush1.bf16.msra.mxu0 0
    %1260 = vmatprep.mubr.bf16.mxu0 0
    %1261 = vmatmul.mubr.bf16.gmra.mrb[0].mxu0 %v1100
    %v1262 = vpop.f32.mrb[0].mxu0
    %v1263 = vadd.f32 0.0, %v1262
    %v1264 = vpop.f32.mrb[0].mxu0
    %v1265 = vpop.f32.mrb[0].mxu0
    %v1266 = vadd.f32 0.0, %v1265
    %v1267 = vpop.f32.mrb[0].mxu0
    %1268 = vmatprep.mubr.bf16.mxu0 0
    %1269 = vmatmul.mubr.bf16.gmra.mrb[0].mxu0 %v1101
    %v1270 = vpop.f32.mrb[0].mxu0
    %v1271 = vadd.f32 0.0, %v1270
    %v1272 = vpop.f32.mrb[0].mxu0
    %v1273 = vpop.f32.mrb[0].mxu0
    %v1274 = vadd.f32 0.0, %v1273
    %v1275 = vpop.f32.mrb[0].mxu0
    %1276 = vmatprep.mubr.bf16.mxu0 0
    %1277 = vmatmul.mubr.bf16.gmra.mrb[0].mxu0 %v1102
    %v1278 = vpop.f32.mrb[0].mxu0
    %v1279 = vadd.f32 0.0, %v1278
    %v1280 = vpop.f32.mrb[0].mxu0
    %v1281 = vpop.f32.mrb[0].mxu0
    %v1282 = vadd.f32 0.0, %v1281
    %v1283 = vpop.f32.mrb[0].mxu0
    %1284 = vmatprep.mubr.bf16.mxu0 0
    %1285 = vmatmul.mubr.bf16.gmra.mrb[0].mxu0 %v1103
    %v1286 = vpop.f32.mrb[0].mxu0
    %v1287 = vadd.f32 0.0, %v1286
    %v1288 = vpop.f32.mrb[0].mxu0
    %v1289 = vpop.f32.mrb[0].mxu0
    %v1290 = vadd.f32 0.0, %v1289
    %v1291 = vpop.f32.mrb[0].mxu0
    %1292 = vmatprep.mubr.bf16.mxu0 0
    %1293 = vmatmul.mubr.bf16.gmra.mrb[0].mxu0 %v1104
    %v1294 = vpop.f32.mrb[0].mxu0
    %v1295 = vadd.f32 0.0, %v1294
    %v1296 = vpop.f32.mrb[0].mxu0
    %v1297 = vpop.f32.mrb[0].mxu0
    %v1298 = vadd.f32 0.0, %v1297
    %v1299 = vpop.f32.mrb[0].mxu0
    %1300 = vmatprep.mubr.bf16.mxu0 0
    %1301 = vmatmul.mubr.bf16.gmra.mrb[0].mxu0 %v1105
    %v1302 = vpop.f32.mrb[0].mxu0
    %v1303 = vadd.f32 0.0, %v1302
    %v1304 = vpop.f32.mrb[0].mxu0
    %v1305 = vpop.f32.mrb[0].mxu0
    %v1306 = vadd.f32 0.0, %v1305
    %v1307 = vpop.f32.mrb[0].mxu0
    %1308 = vmatprep.mubr.bf16.mxu0 0
    %1309 = vmatmul.mubr.bf16.gmra.mrb[0].mxu0 %v1106
    %v1310 = vpop.f32.mrb[0].mxu0
    %v1311 = vadd.f32 0.0, %v1310
    %v1312 = vpop.f32.mrb[0].mxu0
    %v1313 = vpop.f32.mrb[0].mxu0
    %v1314 = vadd.f32 0.0, %v1313
    %v1315 = vpop.f32.mrb[0].mxu0
    %1316 = vmatprep.mubr.bf16.mxu0 0
    %1317 = vmatmul.mubr.bf16.gmra.mrb[0].mxu0 %v1107
    %v1318 = vpop.f32.mrb[0].mxu0
    %v1319 = vadd.f32 0.0, %v1318
    %v1320 = vpop.f32.mrb[0].mxu0
    %v1321 = vpop.f32.mrb[0].mxu0
    %v1322 = vadd.f32 0.0, %v1321
    %v1323 = vpop.f32.mrb[0].mxu0
    %1324 = vmatprep.mubr.bf16.mxu0 0
    %1325 = vmatmul.mubr.bf16.gmra.mrb[0].mxu0 %v1108
    %v1326 = vpop.f32.mrb[0].mxu0
    %v1327 = vadd.f32 0.0, %v1326
    %v1328 = vpop.f32.mrb[0].mxu0
    %v1329 = vpop.f32.mrb[0].mxu0
    %v1330 = vadd.f32 0.0, %v1329
    %v1331 = vpop.f32.mrb[0].mxu0
    %1332 = vmatprep.mubr.bf16.mxu0 0
    %1333 = vmatmul.mubr.bf16.gmra.mrb[0].mxu0 %v1109
    %v1334 = vpop.f32.mrb[0].mxu0
    %v1335 = vadd.f32 0.0, %v1334
    %v1336 = vpop.f32.mrb[0].mxu0
    %v1337 = vpop.f32.mrb[0].mxu0
    %v1338 = vadd.f32 0.0, %v1337
    %v1339 = vpop.f32.mrb[0].mxu0
    %1340 = vmatprep.mubr.bf16.mxu0 0
    %1341 = vmatmul.mubr.bf16.gmra.mrb[0].mxu0 %v1110
    %v1342 = vpop.f32.mrb[0].mxu0
    %v1343 = vadd.f32 0.0, %v1342
    %v1344 = vpop.f32.mrb[0].mxu0
    %v1345 = vpop.f32.mrb[0].mxu0
    %v1346 = vadd.f32 0.0, %v1345
    %v1347 = vpop.f32.mrb[0].mxu0
    %1348 = vmatprep.mubr.bf16.mxu0 0
    %1349 = vmatmul.mubr.bf16.gmra.mrb[0].mxu0 %v1111
    %v1350 = vpop.f32.mrb[0].mxu0
    %v1351 = vadd.f32 0.0, %v1350
    %v1352 = vpop.f32.mrb[0].mxu0
    %v1353 = vpop.f32.mrb[0].mxu0
    %v1354 = vadd.f32 0.0, %v1353
    %v1355 = vpop.f32.mrb[0].mxu0
    %1356 = vmatprep.mubr.bf16.mxu0 0
    %1357 = vmatmul.mubr.bf16.gmra.mrb[0].mxu0 %v1112
    %v1358 = vpop.f32.mrb[0].mxu0
    %v1359 = vadd.f32 0.0, %v1358
    %v1360 = vpop.f32.mrb[0].mxu0
    %v1361 = vpop.f32.mrb[0].mxu0
    %v1362 = vadd.f32 0.0, %v1361
    %v1363 = vpop.f32.mrb[0].mxu0
    %1364 = vmatprep.mubr.bf16.mxu0 0
    %1365 = vmatmul.mubr.bf16.gmra.mrb[0].mxu0 %v1113
    %v1366 = vpop.f32.mrb[0].mxu0
    %v1367 = vadd.f32 0.0, %v1366
    %v1368 = vpop.f32.mrb[0].mxu0
    %v1369 = vpop.f32.mrb[0].mxu0
    %v1370 = vadd.f32 0.0, %v1369
    %v1371 = vpop.f32.mrb[0].mxu0
    %1372 = vmatprep.mubr.bf16.mxu0 0
    %1373 = vmatmul.mubr.bf16.gmra.mrb[0].mxu0 %v1114
    %v1374 = vpop.f32.mrb[0].mxu0
    %v1375 = vadd.f32 0.0, %v1374
    %v1376 = vpop.f32.mrb[0].mxu0
    %v1377 = vpop.f32.mrb[0].mxu0
    %v1378 = vadd.f32 0.0, %v1377
    %v1379 = vpop.f32.mrb[0].mxu0
    %1380 = vmatprep.mubr.bf16.mxu0 0
    %1381 = vmatmul.mubr.bf16.gmra.mrb[0].mxu0 %v1115
    %v1382 = vpop.f32.mrb[0].mxu0
    %v1383 = vadd.f32 0.0, %v1382
    %v1384 = vpop.f32.mrb[0].mxu0
    %v1385 = vpop.f32.mrb[0].mxu0
    %v1386 = vadd.f32 0.0, %v1385
    %v1387 = vpop.f32.mrb[0].mxu0
    %1388 = vmatprep.mubr.bf16.mxu0 0
    %1389 = vmatmul.mubr.bf16.gmra.mrb[0].mxu0 %v1116
    %v1390 = vpop.f32.mrb[0].mxu0
    %v1391 = vadd.f32 0.0, %v1390
    %v1392 = vpop.f32.mrb[0].mxu0
    %v1393 = vpop.f32.mrb[0].mxu0
    %v1394 = vadd.f32 0.0, %v1393
    %v1395 = vpop.f32.mrb[0].mxu0
    %1396 = vmatprep.mubr.bf16.mxu0 0
    %1397 = vmatmul.mubr.bf16.gmra.mrb[0].mxu0 %v1117
    %v1398 = vpop.f32.mrb[0].mxu0
    %v1399 = vadd.f32 0.0, %v1398
    %v1400 = vpop.f32.mrb[0].mxu0
    %v1401 = vpop.f32.mrb[0].mxu0
    %v1402 = vadd.f32 0.0, %v1401
    %v1403 = vpop.f32.mrb[0].mxu0
    %1404 = vmatprep.mubr.bf16.mxu0 0
    %1405 = vmatmul.mubr.bf16.gmra.mrb[0].mxu0 %v1118
    %v1406 = vpop.f32.mrb[0].mxu0
    %v1407 = vadd.f32 0.0, %v1406
    %v1408 = vpop.f32.mrb[0].mxu0
    %v1409 = vpop.f32.mrb[0].mxu0
    %v1410 = vadd.f32 0.0, %v1409
    %v1411 = vpop.f32.mrb[0].mxu0
    %1412 = vmatprep.mubr.bf16.mxu0 0
    %1413 = vmatmul.mubr.bf16.gmra.mrb[0].mxu0 %v1119
    %v1414 = vpop.f32.mrb[0].mxu0
    %v1415 = vadd.f32 0.0, %v1414
    %v1416 = vpop.f32.mrb[0].mxu0
    %v1417 = vpop.f32.mrb[0].mxu0
    %v1418 = vadd.f32 0.0, %v1417
    %v1419 = vpop.f32.mrb[0].mxu0
    %1420 = vmatprep.mubr.bf16.mxu0 0
    %1421 = vmatmul.mubr.bf16.gmra.mrb[0].mxu0 %v1120
    %v1422 = vpop.f32.mrb[0].mxu0
    %v1423 = vadd.f32 0.0, %v1422
    %v1424 = vpop.f32.mrb[0].mxu0
    %v1425 = vpop.f32.mrb[0].mxu0
    %v1426 = vadd.f32 0.0, %v1425
    %v1427 = vpop.f32.mrb[0].mxu0
    %1428 = vmatprep.mubr.bf16.mxu0 0
    %1429 = vmatmul.mubr.bf16.gmra.mrb[0].mxu0 %v1121
    %v1430 = vpop.f32.mrb[0].mxu0
    %v1431 = vadd.f32 0.0, %v1430
    %v1432 = vpop.f32.mrb[0].mxu0
    %v1433 = vpop.f32.mrb[0].mxu0
    %v1434 = vadd.f32 0.0, %v1433
    %v1435 = vpop.f32.mrb[0].mxu0
    %1436 = vmatprep.mubr.bf16.mxu0 0
    %1437 = vmatmul.mubr.bf16.gmra.mrb[0].mxu0 %v1122
    %v1438 = vpop.f32.mrb[0].mxu0
    %v1439 = vadd.f32 0.0, %v1438
    %v1440 = vpop.f32.mrb[0].mxu0
    %v1441 = vpop.f32.mrb[0].mxu0
    %v1442 = vadd.f32 0.0, %v1441
    %v1443 = vpop.f32.mrb[0].mxu0
    %1444 = vmatprep.mubr.bf16.mxu0 0
    %1445 = vmatmul.mubr.bf16.gmra.mrb[0].mxu0 %v1123
    %v1446 = vpop.f32.mrb[0].mxu0
    %v1447 = vadd.f32 0.0, %v1446
    %v1448 = vpop.f32.mrb[0].mxu0
    %v1449 = vpop.f32.mrb[0].mxu0
    %v1450 = vadd.f32 0.0, %v1449
    %v1451 = vpop.f32.mrb[0].mxu0
    %1452 = vmatprep.mubr.bf16.mxu0 0
    %1453 = vmatmul.mubr.bf16.gmra.mrb[0].mxu0 %v1124
    %v1454 = vpop.f32.mrb[0].mxu0
    %v1455 = vadd.f32 0.0, %v1454
    %v1456 = vpop.f32.mrb[0].mxu0
    %v1457 = vpop.f32.mrb[0].mxu0
    %v1458 = vadd.f32 0.0, %v1457
    %v1459 = vpop.f32.mrb[0].mxu0
    %1460 = vmatprep.mubr.bf16.mxu0 0
    %1461 = vmatmul.mubr.bf16.gmra.mrb[0].mxu0 %v1125
    %v1462 = vpop.f32.mrb[0].mxu0
    %v1463 = vadd.f32 0.0, %v1462
    %v1464 = vpop.f32.mrb[0].mxu0
    %v1465 = vpop.f32.mrb[0].mxu0
    %v1466 = vadd.f32 0.0, %v1465
    %v1467 = vpop.f32.mrb[0].mxu0
    %1468 = vmatprep.mubr.bf16.mxu0 0
    %1469 = vmatmul.mubr.bf16.gmra.mrb[0].mxu0 %v1126
    %v1470 = vpop.f32.mrb[0].mxu0
    %v1471 = vadd.f32 0.0, %v1470
    %v1472 = vpop.f32.mrb[0].mxu0
    %v1473 = vpop.f32.mrb[0].mxu0
    %v1474 = vadd.f32 0.0, %v1473
    %v1475 = vpop.f32.mrb[0].mxu0
    %1476 = vmatprep.mubr.bf16.mxu0 0
    %1477 = vmatmul.mubr.bf16.gmra.mrb[0].mxu0 %v1127
    %v1478 = vpop.f32.mrb[0].mxu0
    %v1479 = vadd.f32 0.0, %v1478
    %v1480 = vpop.f32.mrb[0].mxu0
    %v1481 = vpop.f32.mrb[0].mxu0
    %v1482 = vadd.f32 0.0, %v1481
    %v1483 = vpop.f32.mrb[0].mxu0
    %1484 = vmatprep.mubr.bf16.mxu0 0
    %1485 = vmatmul.mubr.bf16.gmra.mrb[0].mxu0 %v1128
    %v1486 = vpop.f32.mrb[0].mxu0
    %v1487 = vadd.f32 0.0, %v1486
    %v1488 = vpop.f32.mrb[0].mxu0
    %v1489 = vpop.f32.mrb[0].mxu0
    %v1490 = vadd.f32 0.0, %v1489
    %v1491 = vpop.f32.mrb[0].mxu0
    %1492 = vmatprep.mubr.bf16.mxu0 0
    %1493 = vmatmul.mubr.bf16.gmra.mrb[0].mxu0 %v1129
    %v1494 = vpop.f32.mrb[0].mxu0
    %v1495 = vadd.f32 0.0, %v1494
    %v1496 = vpop.f32.mrb[0].mxu0
    %v1497 = vpop.f32.mrb[0].mxu0
    %v1498 = vadd.f32 0.0, %v1497
    %v1499 = vpop.f32.mrb[0].mxu0
    %1500 = vmatprep.mubr.bf16.mxu0 0
    %1501 = vmatmul.mubr.bf16.gmra.mrb[0].mxu0 %v1130
    %v1502 = vpop.f32.mrb[0].mxu0
    %v1503 = vadd.f32 0.0, %v1502
    %v1504 = vpop.f32.mrb[0].mxu0
    %v1505 = vpop.f32.mrb[0].mxu0
    %v1506 = vadd.f32 0.0, %v1505
    %v1507 = vpop.f32.mrb[0].mxu0
    %1508 = vmatprep.mubr.bf16.mxu0 0
    %1509 = vmatmul.mubr.bf16.gmra.mrb[0].mxu0 %v1131
    %v1510 = vpop.f32.mrb[0].mxu0
    %v1511 = vadd.f32 0.0, %v1510
    %v1512 = vpop.f32.mrb[0].mxu0
    %v1513 = vpop.f32.mrb[0].mxu0
    %v1514 = vadd.f32 0.0, %v1513
    %v1515 = vpop.f32.mrb[0].mxu0
    %1516 = vmatprep.mubr.bf16.mxu0 0
    %1517 = vmatmul.mubr.bf16.gmra.mrb[0].mxu0 %v1132
    %v1518 = vpop.f32.mrb[0].mxu0
    %v1519 = vadd.f32 0.0, %v1518
    %v1520 = vpop.f32.mrb[0].mxu0
    %v1521 = vpop.f32.mrb[0].mxu0
    %v1522 = vadd.f32 0.0, %v1521
    %v1523 = vpop.f32.mrb[0].mxu0
    %1524 = vmatprep.mubr.bf16.mxu0 0
    %1525 = vmatmul.mubr.bf16.gmra.mrb[0].mxu0 %v1133
    %v1526 = vpop.f32.mrb[0].mxu0
    %v1527 = vadd.f32 0.0, %v1526
    %v1528 = vpop.f32.mrb[0].mxu0
    %v1529 = vpop.f32.mrb[0].mxu0
    %v1530 = vadd.f32 0.0, %v1529
    %v1531 = vpop.f32.mrb[0].mxu0
    %1532 = vmatprep.mubr.bf16.mxu0 0
    %1533 = vmatmul.mubr.bf16.gmra.mrb[0].mxu0 %v1134
    %v1534 = vpop.f32.mrb[0].mxu0
    %v1535 = vadd.f32 0.0, %v1534
    %v1536 = vpop.f32.mrb[0].mxu0
    %v1537 = vpop.f32.mrb[0].mxu0
    %v1538 = vadd.f32 0.0, %v1537
    %v1539 = vpop.f32.mrb[0].mxu0
    %1540 = vmatprep.mubr.bf16.mxu0 0
    %1541 = vmatmul.mubr.bf16.gmra.mrb[0].mxu0 %v1135
    %v1542 = vpop.f32.mrb[0].mxu0
    %v1543 = vadd.f32 0.0, %v1542
    %v1544 = vpop.f32.mrb[0].mxu0
    %v1545 = vpop.f32.mrb[0].mxu0
    %v1546 = vadd.f32 0.0, %v1545
    %v1547 = vpop.f32.mrb[0].mxu0
    %1548 = vmatprep.mubr.bf16.mxu0 0
    %1549 = vmatmul.mubr.bf16.gmra.mrb[0].mxu0 %v1136
    %v1550 = vpop.f32.mrb[0].mxu0
    %v1551 = vadd.f32 0.0, %v1550
    %v1552 = vpop.f32.mrb[0].mxu0
    %v1553 = vpop.f32.mrb[0].mxu0
    %v1554 = vadd.f32 0.0, %v1553
    %v1555 = vpop.f32.mrb[0].mxu0
    %1556 = vmatprep.mubr.bf16.mxu0 0
    %1557 = vmatmul.mubr.bf16.gmra.mrb[0].mxu0 %v1137
    %v1558 = vpop.f32.mrb[0].mxu0
    %v1559 = vadd.f32 0.0, %v1558
    %v1560 = vpop.f32.mrb[0].mxu0
    %v1561 = vpop.f32.mrb[0].mxu0
    %v1562 = vadd.f32 0.0, %v1561
    %v1563 = vpop.f32.mrb[0].mxu0
    %1564 = vmatprep.mubr.bf16.mxu0 0
    %1565 = vmatmul.mubr.bf16.gmra.mrb[0].mxu0 %v1138
    %v1566 = vpop.f32.mrb[0].mxu0
    %v1567 = vadd.f32 0.0, %v1566
    %v1568 = vpop.f32.mrb[0].mxu0
    %v1569 = vpop.f32.mrb[0].mxu0
    %v1570 = vadd.f32 0.0, %v1569
    %v1571 = vpop.f32.mrb[0].mxu0
    %1572 = vmatprep.mubr.bf16.mxu0 0
    %1573 = vmatmul.mubr.bf16.gmra.mrb[0].mxu0 %v1139
    %v1574 = vpop.f32.mrb[0].mxu0
    %v1575 = vadd.f32 0.0, %v1574
    %v1576 = vpop.f32.mrb[0].mxu0
    %v1577 = vpop.f32.mrb[0].mxu0
    %v1578 = vadd.f32 0.0, %v1577
    %v1579 = vpop.f32.mrb[0].mxu0
    %1580 = vmatprep.mubr.bf16.mxu0 0
    %1581 = vmatmul.mubr.bf16.gmra.mrb[0].mxu0 %v1140
    %v1582 = vpop.f32.mrb[0].mxu0
    %v1583 = vadd.f32 0.0, %v1582
    %v1584 = vpop.f32.mrb[0].mxu0
    %v1585 = vpop.f32.mrb[0].mxu0
    %v1586 = vadd.f32 0.0, %v1585
    %v1587 = vpop.f32.mrb[0].mxu0
    %1588 = vmatprep.mubr.bf16.mxu0 0
    %1589 = vmatmul.mubr.bf16.gmra.mrb[0].mxu0 %v1141
    %v1590 = vpop.f32.mrb[0].mxu0
    %v1591 = vadd.f32 0.0, %v1590
    %v1592 = vpop.f32.mrb[0].mxu0
    %v1593 = vpop.f32.mrb[0].mxu0
    %v1594 = vadd.f32 0.0, %v1593
    %v1595 = vpop.f32.mrb[0].mxu0
    %1596 = vmatprep.mubr.bf16.mxu0 0
    %1597 = vmatmul.mubr.bf16.gmra.mrb[0].mxu0 %v1142
    %v1598 = vpop.f32.mrb[0].mxu0
    %v1599 = vadd.f32 0.0, %v1598
    %v1600 = vpop.f32.mrb[0].mxu0
    %v1601 = vpop.f32.mrb[0].mxu0
    %v1602 = vadd.f32 0.0, %v1601
    %v1603 = vpop.f32.mrb[0].mxu0
    %1604 = vmatprep.mubr.bf16.mxu0 0
    %1605 = vmatmul.mubr.bf16.gmra.mrb[0].mxu0 %v1143
    %v1606 = vpop.f32.mrb[0].mxu0
    %v1607 = vadd.f32 0.0, %v1606
    %v1608 = vpop.f32.mrb[0].mxu0
    %v1609 = vpop.f32.mrb[0].mxu0
    %v1610 = vadd.f32 0.0, %v1609
    %v1611 = vpop.f32.mrb[0].mxu0
    %1612 = vmatprep.mubr.bf16.mxu0 0
    %1613 = vmatmul.mubr.bf16.gmra.mrb[0].mxu0 %v1144
    %v1614 = vpop.f32.mrb[0].mxu0
    %v1615 = vadd.f32 0.0, %v1614
    %v1616 = vpop.f32.mrb[0].mxu0
    %v1617 = vpop.f32.mrb[0].mxu0
    %v1618 = vadd.f32 0.0, %v1617
    %v1619 = vpop.f32.mrb[0].mxu0
    %1620 = vmatprep.mubr.bf16.mxu0 0
    %1621 = vmatmul.mubr.bf16.gmra.mrb[0].mxu0 %v1145
    %v1622 = vpop.f32.mrb[0].mxu0
    %v1623 = vadd.f32 0.0, %v1622
    %v1624 = vpop.f32.mrb[0].mxu0
    %v1625 = vpop.f32.mrb[0].mxu0
    %v1626 = vadd.f32 0.0, %v1625
    %v1627 = vpop.f32.mrb[0].mxu0
    %1628 = vmatprep.mubr.bf16.mxu0 0
    %1629 = vmatmul.mubr.bf16.gmra.mrb[0].mxu0 %v1146
    %v1630 = vpop.f32.mrb[0].mxu0
    %v1631 = vadd.f32 0.0, %v1630
    %v1632 = vpop.f32.mrb[0].mxu0
    %v1633 = vpop.f32.mrb[0].mxu0
    %v1634 = vadd.f32 0.0, %v1633
    %v1635 = vpop.f32.mrb[0].mxu0
    %1636 = vmatprep.mubr.bf16.mxu0 0
    %1637 = vmatmul.mubr.bf16.gmra.mrb[0].mxu0 %v1147
    %v1638 = vpop.f32.mrb[0].mxu0
    %v1639 = vadd.f32 0.0, %v1638
    %v1640 = vpop.f32.mrb[0].mxu0
    %v1641 = vpop.f32.mrb[0].mxu0
    %v1642 = vadd.f32 0.0, %v1641
    %v1643 = vpop.f32.mrb[0].mxu0
    %1644 = vmatprep.mubr.bf16.mxu0 0
    %1645 = vmatmul.mubr.bf16.gmra.mrb[0].mxu0 %v1148
    %v1646 = vpop.f32.mrb[0].mxu0
    %v1647 = vadd.f32 0.0, %v1646
    %v1648 = vpop.f32.mrb[0].mxu0
    %v1649 = vpop.f32.mrb[0].mxu0
    %v1650 = vadd.f32 0.0, %v1649
    %v1651 = vpop.f32.mrb[0].mxu0
    %1652 = vmatprep.mubr.bf16.mxu0 0
    %1653 = vmatmul.mubr.bf16.gmra.mrb[0].mxu0 %v1149
    %v1654 = vpop.f32.mrb[0].mxu0
    %v1655 = vadd.f32 0.0, %v1654
    %v1656 = vpop.f32.mrb[0].mxu0
    %v1657 = vpop.f32.mrb[0].mxu0
    %v1658 = vadd.f32 0.0, %v1657
    %v1659 = vpop.f32.mrb[0].mxu0
    %1660 = vmatprep.mubr.bf16.mxu0 0
    %1661 = vmatmul.mubr.bf16.gmra.mrb[0].mxu0 %v1150
    %v1662 = vpop.f32.mrb[0].mxu0
    %v1663 = vadd.f32 0.0, %v1662
    %v1664 = vpop.f32.mrb[0].mxu0
    %v1665 = vpop.f32.mrb[0].mxu0
    %v1666 = vadd.f32 0.0, %v1665
    %v1667 = vpop.f32.mrb[0].mxu0
    %1668 = vmatprep.mubr.bf16.mxu0 0
    %1669 = vmatmul.mubr.bf16.gmra.mrb[0].mxu0 %v1151
    %v1670 = vpop.f32.mrb[0].mxu0
    %v1671 = vadd.f32 0.0, %v1670
    %v1672 = vpop.f32.mrb[0].mxu0
    %v1673 = vpop.f32.mrb[0].mxu0
    %v1674 = vadd.f32 0.0, %v1673
    %v1675 = vpop.f32.mrb[0].mxu0
    %1676 = vmatprep.mubr.bf16.mxu0 0
    %1677 = vmatmul.mubr.bf16.gmra.mrb[0].mxu0 %v1152
    %v1678 = vpop.f32.mrb[0].mxu0
    %v1679 = vadd.f32 0.0, %v1678
    %v1680 = vpop.f32.mrb[0].mxu0
    %v1681 = vpop.f32.mrb[0].mxu0
    %v1682 = vadd.f32 0.0, %v1681
    %v1683 = vpop.f32.mrb[0].mxu0
    %1684 = vmatprep.mubr.bf16.mxu0 0
    %1685 = vmatmul.mubr.bf16.gmra.mrb[0].mxu0 %v1153
    %v1686 = vpop.f32.mrb[0].mxu0
    %v1687 = vadd.f32 0.0, %v1686
    %v1688 = vpop.f32.mrb[0].mxu0
    %v1689 = vpop.f32.mrb[0].mxu0
    %v1690 = vadd.f32 0.0, %v1689
    %v1691 = vpop.f32.mrb[0].mxu0
    %1692 = vmatprep.mubr.bf16.mxu0 0
    %1693 = vmatmul.mubr.bf16.gmra.mrb[0].mxu0 %v1154
    %v1694 = vpop.f32.mrb[0].mxu0
    %v1695 = vadd.f32 0.0, %v1694
    %v1696 = vpop.f32.mrb[0].mxu0
    %v1697 = vpop.f32.mrb[0].mxu0
    %v1698 = vadd.f32 0.0, %v1697
    %v1699 = vpop.f32.mrb[0].mxu0
    %1700 = vmatprep.mubr.bf16.mxu0 0
    %1701 = vmatmul.mubr.bf16.gmra.mrb[0].mxu0 %v1155
    %v1702 = vpop.f32.mrb[0].mxu0
    %v1703 = vadd.f32 0.0, %v1702
    %v1704 = vpop.f32.mrb[0].mxu0
    %v1705 = vpop.f32.mrb[0].mxu0
    %v1706 = vadd.f32 0.0, %v1705
    %v1707 = vpop.f32.mrb[0].mxu0
    %1708 = vmatprep.mubr.bf16.mxu0 0
    %1709 = vmatmul.mubr.bf16.gmra.mrb[0].mxu0 %v1156
    %v1710 = vpop.f32.mrb[0].mxu0
    %v1711 = vadd.f32 0.0, %v1710
    %v1712 = vpop.f32.mrb[0].mxu0
    %v1713 = vpop.f32.mrb[0].mxu0
    %v1714 = vadd.f32 0.0, %v1713
    %v1715 = vpop.f32.mrb[0].mxu0
    %1716 = vmatprep.mubr.bf16.mxu0 0
    %1717 = vmatmul.mubr.bf16.gmra.mrb[0].mxu0 %v1157
    %v1718 = vpop.f32.mrb[0].mxu0
    %v1719 = vadd.f32 0.0, %v1718
    %v1720 = vpop.f32.mrb[0].mxu0
    %v1721 = vpop.f32.mrb[0].mxu0
    %v1722 = vadd.f32 0.0, %v1721
    %v1723 = vpop.f32.mrb[0].mxu0
    %1724 = vmatprep.mubr.bf16.mxu0 0
    %1725 = vmatmul.mubr.bf16.gmra.mrb[0].mxu0 %v1158
    %v1726 = vpop.f32.mrb[0].mxu0
    %v1727 = vadd.f32 0.0, %v1726
    %v1728 = vpop.f32.mrb[0].mxu0
    %v1729 = vpop.f32.mrb[0].mxu0
    %v1730 = vadd.f32 0.0, %v1729
    %v1731 = vpop.f32.mrb[0].mxu0
    %1732 = vmatprep.mubr.bf16.mxu0 0
    %1733 = vmatmul.mubr.bf16.gmra.mrb[0].mxu0 %v1159
    %v1734 = vpop.f32.mrb[0].mxu0
    %v1735 = vadd.f32 0.0, %v1734
    %v1736 = vpop.f32.mrb[0].mxu0
    %v1737 = vpop.f32.mrb[0].mxu0
    %v1738 = vadd.f32 0.0, %v1737
    %v1739 = vpop.f32.mrb[0].mxu0
    %1740 = vmatprep.mubr.bf16.mxu0 0
    %1741 = vmatmul.mubr.bf16.gmra.mrb[0].mxu0 %v1160
    %v1742 = vpop.f32.mrb[0].mxu0
    %v1743 = vadd.f32 0.0, %v1742
    %v1744 = vpop.f32.mrb[0].mxu0
    %v1745 = vpop.f32.mrb[0].mxu0
    %v1746 = vadd.f32 0.0, %v1745
    %v1747 = vpop.f32.mrb[0].mxu0
    %1748 = vmatprep.mubr.bf16.mxu0 0
    %1749 = vmatmul.mubr.bf16.gmra.mrb[0].mxu0 %v1161
    %v1750 = vpop.f32.mrb[0].mxu0
    %v1751 = vadd.f32 0.0, %v1750
    %v1752 = vpop.f32.mrb[0].mxu0
    %v1753 = vpop.f32.mrb[0].mxu0
    %v1754 = vadd.f32 0.0, %v1753
    %v1755 = vpop.f32.mrb[0].mxu0
    %1756 = vmatprep.mubr.bf16.mxu0 0
    %1757 = vmatmul.mubr.bf16.gmra.mrb[0].mxu0 %v1162
    %v1758 = vpop.f32.mrb[0].mxu0
    %v1759 = vadd.f32 0.0, %v1758
    %v1760 = vpop.f32.mrb[0].mxu0
    %v1761 = vpop.f32.mrb[0].mxu0
    %v1762 = vadd.f32 0.0, %v1761
    %v1763 = vpop.f32.mrb[0].mxu0
    %1764 = vmatprep.mubr.bf16.mxu0 0
    %1765 = vmatmul.mubr.bf16.gmra.mrb[0].mxu0 %v1163
    %v1766 = vpop.f32.mrb[0].mxu0
    %v1767 = vadd.f32 0.0, %v1766
    %v1768 = vpop.f32.mrb[0].mxu0
    %v1769 = vpop.f32.mrb[0].mxu0
    %v1770 = vadd.f32 0.0, %v1769
    %v1771 = vpop.f32.mrb[0].mxu0
    %1772 = vdwg.mxu0
    %v1773 = vmul.f32 %v1263, 0.5
    %v1774 = vmul.f32 %v1266, 0.5
    %v1775 = vmul.f32 %v1271, 0.5
    %v1776 = vmul.f32 %v1274, 0.5
    %v1777 = vmul.f32 %v1279, 0.5
    %v1778 = vmul.f32 %v1282, 0.5
    %v1779 = vmul.f32 %v1287, 0.5
    %v1780 = vmul.f32 %v1290, 0.5
    %v1781 = vmul.f32 %v1295, 0.5
    %v1782 = vmul.f32 %v1298, 0.5
    %v1783 = vmul.f32 %v1303, 0.5
    %v1784 = vmul.f32 %v1306, 0.5
    %v1785 = vmul.f32 %v1311, 0.5
    %v1786 = vmul.f32 %v1314, 0.5
    %v1787 = vmul.f32 %v1319, 0.5
    %v1788 = vmul.f32 %v1322, 0.5
    %v1789 = vmul.f32 %v1327, 0.5
    %v1790 = vmul.f32 %v1330, 0.5
    %v1791 = vmul.f32 %v1335, 0.5
    %v1792 = vmul.f32 %v1338, 0.5
    %v1793 = vmul.f32 %v1343, 0.5
    %v1794 = vmul.f32 %v1346, 0.5
    %v1795 = vmul.f32 %v1351, 0.5
    %v1796 = vmul.f32 %v1354, 0.5
    %v1797 = vmul.f32 %v1359, 0.5
    %v1798 = vmul.f32 %v1362, 0.5
    %v1799 = vmul.f32 %v1367, 0.5
    %v1800 = vmul.f32 %v1370, 0.5
    %v1801 = vmul.f32 %v1375, 0.5
    %v1802 = vmul.f32 %v1378, 0.5
    %v1803 = vmul.f32 %v1383, 0.5
    %v1804 = vmul.f32 %v1386, 0.5
    %v1805 = vmul.f32 %v1391, 0.5
    %v1806 = vmul.f32 %v1394, 0.5
    %v1807 = vmul.f32 %v1399, 0.5
    %v1808 = vmul.f32 %v1402, 0.5
    %v1809 = vmul.f32 %v1407, 0.5
    %v1810 = vmul.f32 %v1410, 0.5
    %v1811 = vmul.f32 %v1415, 0.5
    %v1812 = vmul.f32 %v1418, 0.5
    %v1813 = vmul.f32 %v1423, 0.5
    %v1814 = vmul.f32 %v1426, 0.5
    %v1815 = vmul.f32 %v1431, 0.5
    %v1816 = vmul.f32 %v1434, 0.5
    %v1817 = vmul.f32 %v1439, 0.5
    %v1818 = vmul.f32 %v1442, 0.5
    %v1819 = vmul.f32 %v1447, 0.5
    %v1820 = vmul.f32 %v1450, 0.5
    %v1821 = vmul.f32 %v1455, 0.5
    %v1822 = vmul.f32 %v1458, 0.5
    %v1823 = vmul.f32 %v1463, 0.5
    %v1824 = vmul.f32 %v1466, 0.5
    %v1825 = vmul.f32 %v1471, 0.5
    %v1826 = vmul.f32 %v1474, 0.5
    %v1827 = vmul.f32 %v1479, 0.5
    %v1828 = vmul.f32 %v1482, 0.5
    %v1829 = vmul.f32 %v1487, 0.5
    %v1830 = vmul.f32 %v1490, 0.5
    %v1831 = vmul.f32 %v1495, 0.5
    %v1832 = vmul.f32 %v1498, 0.5
    %v1833 = vmul.f32 %v1503, 0.5
    %v1834 = vmul.f32 %v1506, 0.5
    %v1835 = vmul.f32 %v1511, 0.5
    %v1836 = vmul.f32 %v1514, 0.5
    %v1837 = vmul.f32 %v1519, 0.5
    %v1838 = vmul.f32 %v1522, 0.5
    %v1839 = vmul.f32 %v1527, 0.5
    %v1840 = vmul.f32 %v1530, 0.5
    %v1841 = vmul.f32 %v1535, 0.5
    %v1842 = vmul.f32 %v1538, 0.5
    %v1843 = vmul.f32 %v1543, 0.5
    %v1844 = vmul.f32 %v1546, 0.5
    %v1845 = vmul.f32 %v1551, 0.5
    %v1846 = vmul.f32 %v1554, 0.5
    %v1847 = vmul.f32 %v1559, 0.5
    %v1848 = vmul.f32 %v1562, 0.5
    %v1849 = vmul.f32 %v1567, 0.5
    %v1850 = vmul.f32 %v1570, 0.5
    %v1851 = vmul.f32 %v1575, 0.5
    %v1852 = vmul.f32 %v1578, 0.5
    %v1853 = vmul.f32 %v1583, 0.5
    %v1854 = vmul.f32 %v1586, 0.5
    %v1855 = vmul.f32 %v1591, 0.5
    %v1856 = vmul.f32 %v1594, 0.5
    %v1857 = vmul.f32 %v1599, 0.5
    %v1858 = vmul.f32 %v1602, 0.5
    %v1859 = vmul.f32 %v1607, 0.5
    %v1860 = vmul.f32 %v1610, 0.5
    %v1861 = vmul.f32 %v1615, 0.5
    %v1862 = vmul.f32 %v1618, 0.5
    %v1863 = vmul.f32 %v1623, 0.5
    %v1864 = vmul.f32 %v1626, 0.5
    %v1865 = vmul.f32 %v1631, 0.5
    %v1866 = vmul.f32 %v1634, 0.5
    %v1867 = vmul.f32 %v1639, 0.5
    %v1868 = vmul.f32 %v1642, 0.5
    %v1869 = vmul.f32 %v1647, 0.5
    %v1870 = vmul.f32 %v1650, 0.5
    %v1871 = vmul.f32 %v1655, 0.5
    %v1872 = vmul.f32 %v1658, 0.5
    %v1873 = vmul.f32 %v1663, 0.5
    %v1874 = vmul.f32 %v1666, 0.5
    %v1875 = vmul.f32 %v1671, 0.5
    %v1876 = vmul.f32 %v1674, 0.5
    %v1877 = vmul.f32 %v1679, 0.5
    %v1878 = vmul.f32 %v1682, 0.5
    %v1879 = vmul.f32 %v1687, 0.5
    %v1880 = vmul.f32 %v1690, 0.5
    %v1881 = vmul.f32 %v1695, 0.5
    %v1882 = vmul.f32 %v1698, 0.5
    %v1883 = vmul.f32 %v1703, 0.5
    %v1884 = vmul.f32 %v1706, 0.5
    %v1885 = vmul.f32 %v1711, 0.5
    %v1886 = vmul.f32 %v1714, 0.5
    %v1887 = vmul.f32 %v1719, 0.5
    %v1888 = vmul.f32 %v1722, 0.5
    %v1889 = vmul.f32 %v1727, 0.5
    %v1890 = vmul.f32 %v1730, 0.5
    %v1891 = vmul.f32 %v1735, 0.5
    %v1892 = vmul.f32 %v1738, 0.5
    %v1893 = vmul.f32 %v1743, 0.5
    %v1894 = vmul.f32 %v1746, 0.5
    %v1895 = vmul.f32 %v1751, 0.5
    %v1896 = vmul.f32 %v1754, 0.5
    %v1897 = vmul.f32 %v1759, 0.5
    %v1898 = vmul.f32 %v1762, 0.5
    %v1899 = vmul.f32 %v1767, 0.5
    %v1900 = vmul.f32 %v1770, 0.5
    %v1901 = vfloor.f32 %v1773
    %v1902 = vfloor.f32 %v1774
    %v1903 = vfloor.f32 %v1775
    %v1904 = vfloor.f32 %v1776
    %v1905 = vfloor.f32 %v1777
    %v1906 = vfloor.f32 %v1778
    %v1907 = vfloor.f32 %v1779
    %v1908 = vfloor.f32 %v1780
    %v1909 = vfloor.f32 %v1781
    %v1910 = vfloor.f32 %v1782
    %v1911 = vfloor.f32 %v1783
    %v1912 = vfloor.f32 %v1784
    %v1913 = vfloor.f32 %v1785
    %v1914 = vfloor.f32 %v1786
    %v1915 = vfloor.f32 %v1787
    %v1916 = vfloor.f32 %v1788
    %v1917 = vfloor.f32 %v1789
    %v1918 = vfloor.f32 %v1790
    %v1919 = vfloor.f32 %v1791
    %v1920 = vfloor.f32 %v1792
    %v1921 = vfloor.f32 %v1793
    %v1922 = vfloor.f32 %v1794
    %v1923 = vfloor.f32 %v1795
    %v1924 = vfloor.f32 %v1796
    %v1925 = vfloor.f32 %v1797
    %v1926 = vfloor.f32 %v1798
    %v1927 = vfloor.f32 %v1799
    %v1928 = vfloor.f32 %v1800
    %v1929 = vfloor.f32 %v1801
    %v1930 = vfloor.f32 %v1802
    %v1931 = vfloor.f32 %v1803
    %v1932 = vfloor.f32 %v1804
    %v1933 = vfloor.f32 %v1805
    %v1934 = vfloor.f32 %v1806
    %v1935 = vfloor.f32 %v1807
    %v1936 = vfloor.f32 %v1808
    %v1937 = vfloor.f32 %v1809
    %v1938 = vfloor.f32 %v1810
    %v1939 = vfloor.f32 %v1811
    %v1940 = vfloor.f32 %v1812
    %v1941 = vfloor.f32 %v1813
    %v1942 = vfloor.f32 %v1814
    %v1943 = vfloor.f32 %v1815
    %v1944 = vfloor.f32 %v1816
    %v1945 = vfloor.f32 %v1817
    %v1946 = vfloor.f32 %v1818
    %v1947 = vfloor.f32 %v1819
    %v1948 = vfloor.f32 %v1820
    %v1949 = vfloor.f32 %v1821
    %v1950 = vfloor.f32 %v1822
    %v1951 = vfloor.f32 %v1823
    %v1952 = vfloor.f32 %v1824
    %v1953 = vfloor.f32 %v1825
    %v1954 = vfloor.f32 %v1826
    %v1955 = vfloor.f32 %v1827
    %v1956 = vfloor.f32 %v1828
    %v1957 = vfloor.f32 %v1829
    %v1958 = vfloor.f32 %v1830
    %v1959 = vfloor.f32 %v1831
    %v1960 = vfloor.f32 %v1832
    %v1961 = vfloor.f32 %v1833
    %v1962 = vfloor.f32 %v1834
    %v1963 = vfloor.f32 %v1835
    %v1964 = vfloor.f32 %v1836
    %v1965 = vfloor.f32 %v1837
    %v1966 = vfloor.f32 %v1838
    %v1967 = vfloor.f32 %v1839
    %v1968 = vfloor.f32 %v1840
    %v1969 = vfloor.f32 %v1841
    %v1970 = vfloor.f32 %v1842
    %v1971 = vfloor.f32 %v1843
    %v1972 = vfloor.f32 %v1844
    %v1973 = vfloor.f32 %v1845
    %v1974 = vfloor.f32 %v1846
    %v1975 = vfloor.f32 %v1847
    %v1976 = vfloor.f32 %v1848
    %v1977 = vfloor.f32 %v1849
    %v1978 = vfloor.f32 %v1850
    %v1979 = vfloor.f32 %v1851
    %v1980 = vfloor.f32 %v1852
    %v1981 = vfloor.f32 %v1853
    %v1982 = vfloor.f32 %v1854
    %v1983 = vfloor.f32 %v1855
    %v1984 = vfloor.f32 %v1856
    %v1985 = vfloor.f32 %v1857
    %v1986 = vfloor.f32 %v1858
    %v1987 = vfloor.f32 %v1859
    %v1988 = vfloor.f32 %v1860
    %v1989 = vfloor.f32 %v1861
    %v1990 = vfloor.f32 %v1862
    %v1991 = vfloor.f32 %v1863
    %v1992 = vfloor.f32 %v1864
    %v1993 = vfloor.f32 %v1865
    %v1994 = vfloor.f32 %v1866
    %v1995 = vfloor.f32 %v1867
    %v1996 = vfloor.f32 %v1868
    %v1997 = vfloor.f32 %v1869
    %v1998 = vfloor.f32 %v1870
    %v1999 = vfloor.f32 %v1871
    %v2000 = vfloor.f32 %v1872
    %v2001 = vfloor.f32 %v1873
    %v2002 = vfloor.f32 %v1874
    %v2003 = vfloor.f32 %v1875
    %v2004 = vfloor.f32 %v1876
    %v2005 = vfloor.f32 %v1877
    %v2006 = vfloor.f32 %v1878
    %v2007 = vfloor.f32 %v1879
    %v2008 = vfloor.f32 %v1880
    %v2009 = vfloor.f32 %v1881
    %v2010 = vfloor.f32 %v1882
    %v2011 = vfloor.f32 %v1883
    %v2012 = vfloor.f32 %v1884
    %v2013 = vfloor.f32 %v1885
    %v2014 = vfloor.f32 %v1886
    %v2015 = vfloor.f32 %v1887
    %v2016 = vfloor.f32 %v1888
    %v2017 = vfloor.f32 %v1889
    %v2018 = vfloor.f32 %v1890
    %v2019 = vfloor.f32 %v1891
    %v2020 = vfloor.f32 %v1892
    %v2021 = vfloor.f32 %v1893
    %v2022 = vfloor.f32 %v1894
    %v2023 = vfloor.f32 %v1895
    %v2024 = vfloor.f32 %v1896
    %v2025 = vfloor.f32 %v1897
    %v2026 = vfloor.f32 %v1898
    %v2027 = vfloor.f32 %v1899
    %v2028 = vfloor.f32 %v1900
    %v2029 = vmul.f32 %v1901, 2.0
    %v2030 = vmul.f32 %v1902, 2.0
    %v2031 = vmul.f32 %v1903, 2.0
    %v2032 = vmul.f32 %v1904, 2.0
    %v2033 = vmul.f32 %v1905, 2.0
    %v2034 = vmul.f32 %v1906, 2.0
    %v2035 = vmul.f32 %v1907, 2.0
    %v2036 = vmul.f32 %v1908, 2.0
    %v2037 = vmul.f32 %v1909, 2.0
    %v2038 = vmul.f32 %v1910, 2.0
    %v2039 = vmul.f32 %v1911, 2.0
    %v2040 = vmul.f32 %v1912, 2.0
    %v2041 = vmul.f32 %v1913, 2.0
    %v2042 = vmul.f32 %v1914, 2.0
    %v2043 = vmul.f32 %v1915, 2.0
    %v2044 = vmul.f32 %v1916, 2.0
    %v2045 = vmul.f32 %v1917, 2.0
    %v2046 = vmul.f32 %v1918, 2.0
    %v2047 = vmul.f32 %v1919, 2.0
    %v2048 = vmul.f32 %v1920, 2.0
    %v2049 = vmul.f32 %v1921, 2.0
    %v2050 = vmul.f32 %v1922, 2.0
    %v2051 = vmul.f32 %v1923, 2.0
    %v2052 = vmul.f32 %v1924, 2.0
    %v2053 = vmul.f32 %v1925, 2.0
    %v2054 = vmul.f32 %v1926, 2.0
    %v2055 = vmul.f32 %v1927, 2.0
    %v2056 = vmul.f32 %v1928, 2.0
    %v2057 = vmul.f32 %v1929, 2.0
    %v2058 = vmul.f32 %v1930, 2.0
    %v2059 = vmul.f32 %v1931, 2.0
    %v2060 = vmul.f32 %v1932, 2.0
    %v2061 = vmul.f32 %v1933, 2.0
    %v2062 = vmul.f32 %v1934, 2.0
    %v2063 = vmul.f32 %v1935, 2.0
    %v2064 = vmul.f32 %v1936, 2.0
    %v2065 = vmul.f32 %v1937, 2.0
    %v2066 = vmul.f32 %v1938, 2.0
    %v2067 = vmul.f32 %v1939, 2.0
    %v2068 = vmul.f32 %v1940, 2.0
    %v2069 = vmul.f32 %v1941, 2.0
    %v2070 = vmul.f32 %v1942, 2.0
    %v2071 = vmul.f32 %v1943, 2.0
    %v2072 = vmul.f32 %v1944, 2.0
    %v2073 = vmul.f32 %v1945, 2.0
    %v2074 = vmul.f32 %v1946, 2.0
    %v2075 = vmul.f32 %v1947, 2.0
    %v2076 = vmul.f32 %v1948, 2.0
    %v2077 = vmul.f32 %v1949, 2.0
    %v2078 = vmul.f32 %v1950, 2.0
    %v2079 = vmul.f32 %v1951, 2.0
    %v2080 = vmul.f32 %v1952, 2.0
    %v2081 = vmul.f32 %v1953, 2.0
    %v2082 = vmul.f32 %v1954, 2.0
    %v2083 = vmul.f32 %v1955, 2.0
    %v2084 = vmul.f32 %v1956, 2.0
    %v2085 = vmul.f32 %v1957, 2.0
    %v2086 = vmul.f32 %v1958, 2.0
    %v2087 = vmul.f32 %v1959, 2.0
    %v2088 = vmul.f32 %v1960, 2.0
    %v2089 = vmul.f32 %v1961, 2.0
    %v2090 = vmul.f32 %v1962, 2.0
    %v2091 = vmul.f32 %v1963, 2.0
    %v2092 = vmul.f32 %v1964, 2.0
    %v2093 = vmul.f32 %v1965, 2.0
    %v2094 = vmul.f32 %v1966, 2.0
    %v2095 = vmul.f32 %v1967, 2.0
    %v2096 = vmul.f32 %v1968, 2.0
    %v2097 = vmul.f32 %v1969, 2.0
    %v2098 = vmul.f32 %v1970, 2.0
    %v2099 = vmul.f32 %v1971, 2.0
    %v2100 = vmul.f32 %v1972, 2.0
    %v2101 = vmul.f32 %v1973, 2.0
    %v2102 = vmul.f32 %v1974, 2.0
    %v2103 = vmul.f32 %v1975, 2.0
    %v2104 = vmul.f32 %v1976, 2.0
    %v2105 = vmul.f32 %v1977, 2.0
    %v2106 = vmul.f32 %v1978, 2.0
    %v2107 = vmul.f32 %v1979, 2.0
    %v2108 = vmul.f32 %v1980, 2.0
    %v2109 = vmul.f32 %v1981, 2.0
    %v2110 = vmul.f32 %v1982, 2.0
    %v2111 = vmul.f32 %v1983, 2.0
    %v2112 = vmul.f32 %v1984, 2.0
    %v2113 = vmul.f32 %v1985, 2.0
    %v2114 = vmul.f32 %v1986, 2.0
    %v2115 = vmul.f32 %v1987, 2.0
    %v2116 = vmul.f32 %v1988, 2.0
    %v2117 = vmul.f32 %v1989, 2.0
    %v2118 = vmul.f32 %v1990, 2.0
    %v2119 = vmul.f32 %v1991, 2.0
    %v2120 = vmul.f32 %v1992, 2.0
    %v2121 = vmul.f32 %v1993, 2.0
    %v2122 = vmul.f32 %v1994, 2.0
    %v2123 = vmul.f32 %v1995, 2.0
    %v2124 = vmul.f32 %v1996, 2.0
    %v2125 = vmul.f32 %v1997, 2.0
    %v2126 = vmul.f32 %v1998, 2.0
    %v2127 = vmul.f32 %v1999, 2.0
    %v2128 = vmul.f32 %v2000, 2.0
    %v2129 = vmul.f32 %v2001, 2.0
    %v2130 = vmul.f32 %v2002, 2.0
    %v2131 = vmul.f32 %v2003, 2.0
    %v2132 = vmul.f32 %v2004, 2.0
    %v2133 = vmul.f32 %v2005, 2.0
    %v2134 = vmul.f32 %v2006, 2.0
    %v2135 = vmul.f32 %v2007, 2.0
    %v2136 = vmul.f32 %v2008, 2.0
    %v2137 = vmul.f32 %v2009, 2.0
    %v2138 = vmul.f32 %v2010, 2.0
    %v2139 = vmul.f32 %v2011, 2.0
    %v2140 = vmul.f32 %v2012, 2.0
    %v2141 = vmul.f32 %v2013, 2.0
    %v2142 = vmul.f32 %v2014, 2.0
    %v2143 = vmul.f32 %v2015, 2.0
    %v2144 = vmul.f32 %v2016, 2.0
    %v2145 = vmul.f32 %v2017, 2.0
    %v2146 = vmul.f32 %v2018, 2.0
    %v2147 = vmul.f32 %v2019, 2.0
    %v2148 = vmul.f32 %v2020, 2.0
    %v2149 = vmul.f32 %v2021, 2.0
    %v2150 = vmul.f32 %v2022, 2.0
    %v2151 = vmul.f32 %v2023, 2.0
    %v2152 = vmul.f32 %v2024, 2.0
    %v2153 = vmul.f32 %v2025, 2.0
    %v2154 = vmul.f32 %v2026, 2.0
    %v2155 = vmul.f32 %v2027, 2.0
    %v2156 = vmul.f32 %v2028, 2.0
    %v2157 = vsub.f32 %v1263, %v2029
    %v2158 = vsub.f32 %v1266, %v2030
    %v2159 = vsub.f32 %v1271, %v2031
    %v2160 = vsub.f32 %v1274, %v2032
    %v2161 = vsub.f32 %v1279, %v2033
    %v2162 = vsub.f32 %v1282, %v2034
    %v2163 = vsub.f32 %v1287, %v2035
    %v2164 = vsub.f32 %v1290, %v2036
    %v2165 = vsub.f32 %v1295, %v2037
    %v2166 = vsub.f32 %v1298, %v2038
    %v2167 = vsub.f32 %v1303, %v2039
    %v2168 = vsub.f32 %v1306, %v2040
    %v2169 = vsub.f32 %v1311, %v2041
    %v2170 = vsub.f32 %v1314, %v2042
    %v2171 = vsub.f32 %v1319, %v2043
    %v2172 = vsub.f32 %v1322, %v2044
    %v2173 = vsub.f32 %v1327, %v2045
    %v2174 = vsub.f32 %v1330, %v2046
    %v2175 = vsub.f32 %v1335, %v2047
    %v2176 = vsub.f32 %v1338, %v2048
    %v2177 = vsub.f32 %v1343, %v2049
    %v2178 = vsub.f32 %v1346, %v2050
    %v2179 = vsub.f32 %v1351, %v2051
    %v2180 = vsub.f32 %v1354, %v2052
    %v2181 = vsub.f32 %v1359, %v2053
    %v2182 = vsub.f32 %v1362, %v2054
    %v2183 = vsub.f32 %v1367, %v2055
    %v2184 = vsub.f32 %v1370, %v2056
    %v2185 = vsub.f32 %v1375, %v2057
    %v2186 = vsub.f32 %v1378, %v2058
    %v2187 = vsub.f32 %v1383, %v2059
    %v2188 = vsub.f32 %v1386, %v2060
    %v2189 = vsub.f32 %v1391, %v2061
    %v2190 = vsub.f32 %v1394, %v2062
    %v2191 = vsub.f32 %v1399, %v2063
    %v2192 = vsub.f32 %v1402, %v2064
    %v2193 = vsub.f32 %v1407, %v2065
    %v2194 = vsub.f32 %v1410, %v2066
    %v2195 = vsub.f32 %v1415, %v2067
    %v2196 = vsub.f32 %v1418, %v2068
    %v2197 = vsub.f32 %v1423, %v2069
    %v2198 = vsub.f32 %v1426, %v2070
    %v2199 = vsub.f32 %v1431, %v2071
    %v2200 = vsub.f32 %v1434, %v2072
    %v2201 = vsub.f32 %v1439, %v2073
    %v2202 = vsub.f32 %v1442, %v2074
    %v2203 = vsub.f32 %v1447, %v2075
    %v2204 = vsub.f32 %v1450, %v2076
    %v2205 = vsub.f32 %v1455, %v2077
    %v2206 = vsub.f32 %v1458, %v2078
    %v2207 = vsub.f32 %v1463, %v2079
    %v2208 = vsub.f32 %v1466, %v2080
    %v2209 = vsub.f32 %v1471, %v2081
    %v2210 = vsub.f32 %v1474, %v2082
    %v2211 = vsub.f32 %v1479, %v2083
    %v2212 = vsub.f32 %v1482, %v2084
    %v2213 = vsub.f32 %v1487, %v2085
    %v2214 = vsub.f32 %v1490, %v2086
    %v2215 = vsub.f32 %v1495, %v2087
    %v2216 = vsub.f32 %v1498, %v2088
    %v2217 = vsub.f32 %v1503, %v2089
    %v2218 = vsub.f32 %v1506, %v2090
    %v2219 = vsub.f32 %v1511, %v2091
    %v2220 = vsub.f32 %v1514, %v2092
    %v2221 = vsub.f32 %v1519, %v2093
    %v2222 = vsub.f32 %v1522, %v2094
    %v2223 = vsub.f32 %v1527, %v2095
    %v2224 = vsub.f32 %v1530, %v2096
    %v2225 = vsub.f32 %v1535, %v2097
    %v2226 = vsub.f32 %v1538, %v2098
    %v2227 = vsub.f32 %v1543, %v2099
    %v2228 = vsub.f32 %v1546, %v2100
    %v2229 = vsub.f32 %v1551, %v2101
    %v2230 = vsub.f32 %v1554, %v2102
    %v2231 = vsub.f32 %v1559, %v2103
    %v2232 = vsub.f32 %v1562, %v2104
    %v2233 = vsub.f32 %v1567, %v2105
    %v2234 = vsub.f32 %v1570, %v2106
    %v2235 = vsub.f32 %v1575, %v2107
    %v2236 = vsub.f32 %v1578, %v2108
    %v2237 = vsub.f32 %v1583, %v2109
    %v2238 = vsub.f32 %v1586, %v2110
    %v2239 = vsub.f32 %v1591, %v2111
    %v2240 = vsub.f32 %v1594, %v2112
    %v2241 = vsub.f32 %v1599, %v2113
    %v2242 = vsub.f32 %v1602, %v2114
    %v2243 = vsub.f32 %v1607, %v2115
    %v2244 = vsub.f32 %v1610, %v2116
    %v2245 = vsub.f32 %v1615, %v2117
    %v2246 = vsub.f32 %v1618, %v2118
    %v2247 = vsub.f32 %v1623, %v2119
    %v2248 = vsub.f32 %v1626, %v2120
    %v2249 = vsub.f32 %v1631, %v2121
    %v2250 = vsub.f32 %v1634, %v2122
    %v2251 = vsub.f32 %v1639, %v2123
    %v2252 = vsub.f32 %v1642, %v2124
    %v2253 = vsub.f32 %v1647, %v2125
    %v2254 = vsub.f32 %v1650, %v2126
    %v2255 = vsub.f32 %v1655, %v2127
    %v2256 = vsub.f32 %v1658, %v2128
    %v2257 = vsub.f32 %v1663, %v2129
    %v2258 = vsub.f32 %v1666, %v2130
    %v2259 = vsub.f32 %v1671, %v2131
    %v2260 = vsub.f32 %v1674, %v2132
    %v2261 = vsub.f32 %v1679, %v2133
    %v2262 = vsub.f32 %v1682, %v2134
    %v2263 = vsub.f32 %v1687, %v2135
    %v2264 = vsub.f32 %v1690, %v2136
    %v2265 = vsub.f32 %v1695, %v2137
    %v2266 = vsub.f32 %v1698, %v2138
    %v2267 = vsub.f32 %v1703, %v2139
    %v2268 = vsub.f32 %v1706, %v2140
    %v2269 = vsub.f32 %v1711, %v2141
    %v2270 = vsub.f32 %v1714, %v2142
    %v2271 = vsub.f32 %v1719, %v2143
    %v2272 = vsub.f32 %v1722, %v2144
    %v2273 = vsub.f32 %v1727, %v2145
    %v2274 = vsub.f32 %v1730, %v2146
    %v2275 = vsub.f32 %v1735, %v2147
    %v2276 = vsub.f32 %v1738, %v2148
    %v2277 = vsub.f32 %v1743, %v2149
    %v2278 = vsub.f32 %v1746, %v2150
    %v2279 = vsub.f32 %v1751, %v2151
    %v2280 = vsub.f32 %v1754, %v2152
    %v2281 = vsub.f32 %v1759, %v2153
    %v2282 = vsub.f32 %v1762, %v2154
    %v2283 = vsub.f32 %v1767, %v2155
    %v2284 = vsub.f32 %v1770, %v2156
    %v2285 = vpack.c.bf16 %v2158, %v2157
    %v2286 = vpack.c.bf16 %v2160, %v2159
    %v2287 = vpack.c.bf16 %v2162, %v2161
    %v2288 = vpack.c.bf16 %v2164, %v2163
    %v2289 = vpack.c.bf16 %v2166, %v2165
    %v2290 = vpack.c.bf16 %v2168, %v2167
    %v2291 = vpack.c.bf16 %v2170, %v2169
    %v2292 = vpack.c.bf16 %v2172, %v2171
    %v2293 = vpack.c.bf16 %v2174, %v2173
    %v2294 = vpack.c.bf16 %v2176, %v2175
    %v2295 = vpack.c.bf16 %v2178, %v2177
    %v2296 = vpack.c.bf16 %v2180, %v2179
    %v2297 = vpack.c.bf16 %v2182, %v2181
    %v2298 = vpack.c.bf16 %v2184, %v2183
    %v2299 = vpack.c.bf16 %v2186, %v2185
    %v2300 = vpack.c.bf16 %v2188, %v2187
    %v2301 = vpack.c.bf16 %v2190, %v2189
    %v2302 = vpack.c.bf16 %v2192, %v2191
    %v2303 = vpack.c.bf16 %v2194, %v2193
    %v2304 = vpack.c.bf16 %v2196, %v2195
    %v2305 = vpack.c.bf16 %v2198, %v2197
    %v2306 = vpack.c.bf16 %v2200, %v2199
    %v2307 = vpack.c.bf16 %v2202, %v2201
    %v2308 = vpack.c.bf16 %v2204, %v2203
    %v2309 = vpack.c.bf16 %v2206, %v2205
    %v2310 = vpack.c.bf16 %v2208, %v2207
    %v2311 = vpack.c.bf16 %v2210, %v2209
    %v2312 = vpack.c.bf16 %v2212, %v2211
    %v2313 = vpack.c.bf16 %v2214, %v2213
    %v2314 = vpack.c.bf16 %v2216, %v2215
    %v2315 = vpack.c.bf16 %v2218, %v2217
    %v2316 = vpack.c.bf16 %v2220, %v2219
    %v2317 = vpack.c.bf16 %v2222, %v2221
    %v2318 = vpack.c.bf16 %v2224, %v2223
    %v2319 = vpack.c.bf16 %v2226, %v2225
    %v2320 = vpack.c.bf16 %v2228, %v2227
    %v2321 = vpack.c.bf16 %v2230, %v2229
    %v2322 = vpack.c.bf16 %v2232, %v2231
    %v2323 = vpack.c.bf16 %v2234, %v2233
    %v2324 = vpack.c.bf16 %v2236, %v2235
    %v2325 = vpack.c.bf16 %v2238, %v2237
    %v2326 = vpack.c.bf16 %v2240, %v2239
    %v2327 = vpack.c.bf16 %v2242, %v2241
    %v2328 = vpack.c.bf16 %v2244, %v2243
    %v2329 = vpack.c.bf16 %v2246, %v2245
    %v2330 = vpack.c.bf16 %v2248, %v2247
    %v2331 = vpack.c.bf16 %v2250, %v2249
    %v2332 = vpack.c.bf16 %v2252, %v2251
    %v2333 = vpack.c.bf16 %v2254, %v2253
    %v2334 = vpack.c.bf16 %v2256, %v2255
    %v2335 = vpack.c.bf16 %v2258, %v2257
    %v2336 = vpack.c.bf16 %v2260, %v2259
    %v2337 = vpack.c.bf16 %v2262, %v2261
    %v2338 = vpack.c.bf16 %v2264, %v2263
    %v2339 = vpack.c.bf16 %v2266, %v2265
    %v2340 = vpack.c.bf16 %v2268, %v2267
    %v2341 = vpack.c.bf16 %v2270, %v2269
    %v2342 = vpack.c.bf16 %v2272, %v2271
    %v2343 = vpack.c.bf16 %v2274, %v2273
    %v2344 = vpack.c.bf16 %v2276, %v2275
    %v2345 = vpack.c.bf16 %v2278, %v2277
    %v2346 = vpack.c.bf16 %v2280, %v2279
    %v2347 = vpack.c.bf16 %v2282, %v2281
    %v2348 = vpack.c.bf16 %v2284, %v2283
    %v2349 = vld [vmem:[#allocation9] sm:$0xff]
    %v2350 = vld [vmem:[#allocation9 + $0x8] sm:$0xff]
    %v2351 = vld [vmem:[#allocation9 + $0x10] sm:$0xff]
    %v2352 = vld [vmem:[#allocation9 + $0x18] sm:$0xff]
    %v2357 = vunpack.c.l.b16 %v2349
    %v2358 = vunpack.c.h.b16 %v2349
    %v2359 = vunpack.c.l.b16 %v2350
    %v2360 = vunpack.c.h.b16 %v2350
    %v2361 = vunpack.c.l.b16 %v2351
    %v2362 = vunpack.c.h.b16 %v2351
    %v2363 = vunpack.c.l.b16 %v2352
    %v2364 = vunpack.c.h.b16 %v2352
    %v2365 = vpack.c.b16 %v2359, %v2357
    %v2366 = vpack.c.b16 %v2360, %v2358
    %v2367 = vpack.c.b16 %v2363, %v2361
    %v2368 = vpack.c.b16 %v2364, %v2362
    %vm2373 = vcmask 261120
    %v2375 = vsel %vm2373, %v2285, 0
    %v2378 = vsel %vm2373, %v2286, 0
    %v2381 = vsel %vm2373, %v2287, 0
    %v2384 = vsel %vm2373, %v2288, 0
    %v2387 = vsel %vm2373, %v2289, 0
    %v2390 = vsel %vm2373, %v2290, 0
    %v2393 = vsel %vm2373, %v2291, 0
    %v2396 = vsel %vm2373, %v2292, 0
    %v2399 = vsel %vm2373, %v2293, 0
    %v2402 = vsel %vm2373, %v2294, 0
    %v2405 = vsel %vm2373, %v2295, 0
    %v2408 = vsel %vm2373, %v2296, 0
    %v2411 = vsel %vm2373, %v2297, 0
    %v2414 = vsel %vm2373, %v2298, 0
    %v2417 = vsel %vm2373, %v2299, 0
    %v2420 = vsel %vm2373, %v2300, 0
    %v2423 = vsel %vm2373, %v2301, 0
    %v2426 = vsel %vm2373, %v2302, 0
    %v2429 = vsel %vm2373, %v2303, 0
    %v2432 = vsel %vm2373, %v2304, 0
    %v2435 = vsel %vm2373, %v2305, 0
    %v2438 = vsel %vm2373, %v2306, 0
    %v2441 = vsel %vm2373, %v2307, 0
    %v2444 = vsel %vm2373, %v2308, 0
    %v2447 = vsel %vm2373, %v2309, 0
    %v2450 = vsel %vm2373, %v2310, 0
    %v2453 = vsel %vm2373, %v2311, 0
    %v2456 = vsel %vm2373, %v2312, 0
    %v2459 = vsel %vm2373, %v2313, 0
    %v2462 = vsel %vm2373, %v2314, 0
    %v2465 = vsel %vm2373, %v2315, 0
    %v2468 = vsel %vm2373, %v2316, 0
    %v2471 = vsel %vm2373, %v2317, 0
    %v2474 = vsel %vm2373, %v2318, 0
    %v2477 = vsel %vm2373, %v2319, 0
    %v2480 = vsel %vm2373, %v2320, 0
    %v2483 = vsel %vm2373, %v2321, 0
    %v2486 = vsel %vm2373, %v2322, 0
    %v2489 = vsel %vm2373, %v2323, 0
    %v2492 = vsel %vm2373, %v2324, 0
    %v2495 = vsel %vm2373, %v2325, 0
    %v2498 = vsel %vm2373, %v2326, 0
    %v2501 = vsel %vm2373, %v2327, 0
    %v2504 = vsel %vm2373, %v2328, 0
    %v2507 = vsel %vm2373, %v2329, 0
    %v2510 = vsel %vm2373, %v2330, 0
    %v2513 = vsel %vm2373, %v2331, 0
    %v2516 = vsel %vm2373, %v2332, 0
    %v2519 = vsel %vm2373, %v2333, 0
    %v2522 = vsel %vm2373, %v2334, 0
    %v2525 = vsel %vm2373, %v2335, 0
    %v2528 = vsel %vm2373, %v2336, 0
    %v2531 = vsel %vm2373, %v2337, 0
    %v2534 = vsel %vm2373, %v2338, 0
    %v2537 = vsel %vm2373, %v2339, 0
    %v2540 = vsel %vm2373, %v2340, 0
    %v2543 = vsel %vm2373, %v2341, 0
    %v2546 = vsel %vm2373, %v2342, 0
    %v2549 = vsel %vm2373, %v2343, 0
    %v2552 = vsel %vm2373, %v2344, 0
    %v2555 = vsel %vm2373, %v2345, 0
    %v2558 = vsel %vm2373, %v2346, 0
    %v2561 = vsel %vm2373, %v2347, 0
    %v2564 = vsel %vm2373, %v2348, 0
    %2566 = vmatprep.subr.bf16.mxu0 %v2366
    %2567 = vmatpush1.bf16.msra.mxu0 %v2365
    %2568 = vmatprep.subr.bf16.mxu0 %v2368
    %2569 = vmatpush1.bf16.msra.mxu0 %v2367
    %2570 = vmatprep.subr.bf16.mxu0 0
    %2571 = vmatpush1.bf16.msra.mxu0 0
    %2572 = vmatprep.subr.bf16.mxu0 0
    %2573 = vmatpush1.bf16.msra.mxu0 0
    %2574 = vmatprep.subr.bf16.mxu0 0
    %2575 = vmatpush1.bf16.msra.mxu0 0
    %2576 = vmatprep.subr.bf16.mxu0 0
    %2577 = vmatpush1.bf16.msra.mxu0 0
    %2578 = vmatprep.subr.bf16.mxu0 0
    %2579 = vmatpush1.bf16.msra.mxu0 0
    %2580 = vmatprep.subr.bf16.mxu0 0
    %2581 = vmatpush1.bf16.msra.mxu0 0
    %2582 = vmatprep.subr.bf16.mxu0 0
    %2583 = vmatpush1.bf16.msra.mxu0 0
    %2584 = vmatprep.subr.bf16.mxu0 0
    %2585 = vmatpush1.bf16.msra.mxu0 0
    %2586 = vmatprep.subr.bf16.mxu0 0
    %2587 = vmatpush1.bf16.msra.mxu0 0
    %2588 = vmatprep.subr.bf16.mxu0 0
    %2589 = vmatpush1.bf16.msra.mxu0 0
    %2590 = vmatprep.subr.bf16.mxu0 0
    %2591 = vmatpush1.bf16.msra.mxu0 0
    %2592 = vmatprep.subr.bf16.mxu0 0
    %2593 = vmatpush1.bf16.msra.mxu0 0
    %2594 = vmatprep.subr.bf16.mxu0 0
    %2595 = vmatpush1.bf16.msra.mxu0 0
    %2596 = vmatprep.subr.bf16.mxu0 0
    %2597 = vmatpush1.bf16.msra.mxu0 0
    %2598 = vmatprep.mubr.bf16.mxu0 0
    %2599 = vmatmul.mubr.bf16.gmra.mrb[0].mxu0 %v2375
    %v2600 = vpop.f32.mrb[0].mxu0
    %v2601 = vadd.f32 0.0, %v2600
    %v2602 = vpop.f32.mrb[0].mxu0
    %v2603 = vadd.f32 0.0, %v2602
    %v2604 = vpop.f32.mrb[0].mxu0
    %v2605 = vadd.f32 0.0, %v2604
    %v2606 = vpop.f32.mrb[0].mxu0
    %v2607 = vadd.f32 0.0, %v2606
    %2608 = vmatprep.mubr.bf16.mxu0 0
    %2609 = vmatmul.mubr.bf16.gmra.mrb[0].mxu0 %v2378
    %v2610 = vpop.f32.mrb[0].mxu0
    %v2611 = vadd.f32 0.0, %v2610
    %v2612 = vpop.f32.mrb[0].mxu0
    %v2613 = vadd.f32 0.0, %v2612
    %v2614 = vpop.f32.mrb[0].mxu0
    %v2615 = vadd.f32 0.0, %v2614
    %v2616 = vpop.f32.mrb[0].mxu0
    %v2617 = vadd.f32 0.0, %v2616
    %2618 = vmatprep.mubr.bf16.mxu0 0
    %2619 = vmatmul.mubr.bf16.gmra.mrb[0].mxu0 %v2381
    %v2620 = vpop.f32.mrb[0].mxu0
    %v2621 = vadd.f32 0.0, %v2620
    %v2622 = vpop.f32.mrb[0].mxu0
    %v2623 = vadd.f32 0.0, %v2622
    %v2624 = vpop.f32.mrb[0].mxu0
    %v2625 = vadd.f32 0.0, %v2624
    %v2626 = vpop.f32.mrb[0].mxu0
    %v2627 = vadd.f32 0.0, %v2626
    %2628 = vmatprep.mubr.bf16.mxu0 0
    %2629 = vmatmul.mubr.bf16.gmra.mrb[0].mxu0 %v2384
    %v2630 = vpop.f32.mrb[0].mxu0
    %v2631 = vadd.f32 0.0, %v2630
    %v2632 = vpop.f32.mrb[0].mxu0
    %v2633 = vadd.f32 0.0, %v2632
    %v2634 = vpop.f32.mrb[0].mxu0
    %v2635 = vadd.f32 0.0, %v2634
    %v2636 = vpop.f32.mrb[0].mxu0
    %v2637 = vadd.f32 0.0, %v2636
    %2638 = vmatprep.mubr.bf16.mxu0 0
    %2639 = vmatmul.mubr.bf16.gmra.mrb[0].mxu0 %v2387
    %v2640 = vpop.f32.mrb[0].mxu0
    %v2641 = vadd.f32 0.0, %v2640
    %v2642 = vpop.f32.mrb[0].mxu0
    %v2643 = vadd.f32 0.0, %v2642
    %v2644 = vpop.f32.mrb[0].mxu0
    %v2645 = vadd.f32 0.0, %v2644
    %v2646 = vpop.f32.mrb[0].mxu0
    %v2647 = vadd.f32 0.0, %v2646
    %2648 = vmatprep.mubr.bf16.mxu0 0
    %2649 = vmatmul.mubr.bf16.gmra.mrb[0].mxu0 %v2390
    %v2650 = vpop.f32.mrb[0].mxu0
    %v2651 = vadd.f32 0.0, %v2650
    %v2652 = vpop.f32.mrb[0].mxu0
    %v2653 = vadd.f32 0.0, %v2652
    %v2654 = vpop.f32.mrb[0].mxu0
    %v2655 = vadd.f32 0.0, %v2654
    %v2656 = vpop.f32.mrb[0].mxu0
    %v2657 = vadd.f32 0.0, %v2656
    %2658 = vmatprep.mubr.bf16.mxu0 0
    %2659 = vmatmul.mubr.bf16.gmra.mrb[0].mxu0 %v2393
    %v2660 = vpop.f32.mrb[0].mxu0
    %v2661 = vadd.f32 0.0, %v2660
    %v2662 = vpop.f32.mrb[0].mxu0
    %v2663 = vadd.f32 0.0, %v2662
    %v2664 = vpop.f32.mrb[0].mxu0
    %v2665 = vadd.f32 0.0, %v2664
    %v2666 = vpop.f32.mrb[0].mxu0
    %v2667 = vadd.f32 0.0, %v2666
    %2668 = vmatprep.mubr.bf16.mxu0 0
    %2669 = vmatmul.mubr.bf16.gmra.mrb[0].mxu0 %v2396
    %v2670 = vpop.f32.mrb[0].mxu0
    %v2671 = vadd.f32 0.0, %v2670
    %v2672 = vpop.f32.mrb[0].mxu0
    %v2673 = vadd.f32 0.0, %v2672
    %v2674 = vpop.f32.mrb[0].mxu0
    %v2675 = vadd.f32 0.0, %v2674
    %v2676 = vpop.f32.mrb[0].mxu0
    %v2677 = vadd.f32 0.0, %v2676
    %2678 = vmatprep.mubr.bf16.mxu0 0
    %2679 = vmatmul.mubr.bf16.gmra.mrb[0].mxu0 %v2399
    %v2680 = vpop.f32.mrb[0].mxu0
    %v2681 = vadd.f32 0.0, %v2680
    %v2682 = vpop.f32.mrb[0].mxu0
    %v2683 = vadd.f32 0.0, %v2682
    %v2684 = vpop.f32.mrb[0].mxu0
    %v2685 = vadd.f32 0.0, %v2684
    %v2686 = vpop.f32.mrb[0].mxu0
    %v2687 = vadd.f32 0.0, %v2686
    %2688 = vmatprep.mubr.bf16.mxu0 0
    %2689 = vmatmul.mubr.bf16.gmra.mrb[0].mxu0 %v2402
    %v2690 = vpop.f32.mrb[0].mxu0
    %v2691 = vadd.f32 0.0, %v2690
    %v2692 = vpop.f32.mrb[0].mxu0
    %v2693 = vadd.f32 0.0, %v2692
    %v2694 = vpop.f32.mrb[0].mxu0
    %v2695 = vadd.f32 0.0, %v2694
    %v2696 = vpop.f32.mrb[0].mxu0
    %v2697 = vadd.f32 0.0, %v2696
    %2698 = vmatprep.mubr.bf16.mxu0 0
    %2699 = vmatmul.mubr.bf16.gmra.mrb[0].mxu0 %v2405
    %v2700 = vpop.f32.mrb[0].mxu0
    %v2701 = vadd.f32 0.0, %v2700
    %v2702 = vpop.f32.mrb[0].mxu0
    %v2703 = vadd.f32 0.0, %v2702
    %v2704 = vpop.f32.mrb[0].mxu0
    %v2705 = vadd.f32 0.0, %v2704
    %v2706 = vpop.f32.mrb[0].mxu0
    %v2707 = vadd.f32 0.0, %v2706
    %2708 = vmatprep.mubr.bf16.mxu0 0
    %2709 = vmatmul.mubr.bf16.gmra.mrb[0].mxu0 %v2408
    %v2710 = vpop.f32.mrb[0].mxu0
    %v2711 = vadd.f32 0.0, %v2710
    %v2712 = vpop.f32.mrb[0].mxu0
    %v2713 = vadd.f32 0.0, %v2712
    %v2714 = vpop.f32.mrb[0].mxu0
    %v2715 = vadd.f32 0.0, %v2714
    %v2716 = vpop.f32.mrb[0].mxu0
    %v2717 = vadd.f32 0.0, %v2716
    %2718 = vmatprep.mubr.bf16.mxu0 0
    %2719 = vmatmul.mubr.bf16.gmra.mrb[0].mxu0 %v2411
    %v2720 = vpop.f32.mrb[0].mxu0
    %v2721 = vadd.f32 0.0, %v2720
    %v2722 = vpop.f32.mrb[0].mxu0
    %v2723 = vadd.f32 0.0, %v2722
    %v2724 = vpop.f32.mrb[0].mxu0
    %v2725 = vadd.f32 0.0, %v2724
    %v2726 = vpop.f32.mrb[0].mxu0
    %v2727 = vadd.f32 0.0, %v2726
    %2728 = vmatprep.mubr.bf16.mxu0 0
    %2729 = vmatmul.mubr.bf16.gmra.mrb[0].mxu0 %v2414
    %v2730 = vpop.f32.mrb[0].mxu0
    %v2731 = vadd.f32 0.0, %v2730
    %v2732 = vpop.f32.mrb[0].mxu0
    %v2733 = vadd.f32 0.0, %v2732
    %v2734 = vpop.f32.mrb[0].mxu0
    %v2735 = vadd.f32 0.0, %v2734
    %v2736 = vpop.f32.mrb[0].mxu0
    %v2737 = vadd.f32 0.0, %v2736
    %2738 = vmatprep.mubr.bf16.mxu0 0
    %2739 = vmatmul.mubr.bf16.gmra.mrb[0].mxu0 %v2417
    %v2740 = vpop.f32.mrb[0].mxu0
    %v2741 = vadd.f32 0.0, %v2740
    %v2742 = vpop.f32.mrb[0].mxu0
    %v2743 = vadd.f32 0.0, %v2742
    %v2744 = vpop.f32.mrb[0].mxu0
    %v2745 = vadd.f32 0.0, %v2744
    %v2746 = vpop.f32.mrb[0].mxu0
    %v2747 = vadd.f32 0.0, %v2746
    %2748 = vmatprep.mubr.bf16.mxu0 0
    %2749 = vmatmul.mubr.bf16.gmra.mrb[0].mxu0 %v2420
    %v2750 = vpop.f32.mrb[0].mxu0
    %v2751 = vadd.f32 0.0, %v2750
    %v2752 = vpop.f32.mrb[0].mxu0
    %v2753 = vadd.f32 0.0, %v2752
    %v2754 = vpop.f32.mrb[0].mxu0
    %v2755 = vadd.f32 0.0, %v2754
    %v2756 = vpop.f32.mrb[0].mxu0
    %v2757 = vadd.f32 0.0, %v2756
    %2758 = vmatprep.mubr.bf16.mxu0 0
    %2759 = vmatmul.mubr.bf16.gmra.mrb[0].mxu0 %v2423
    %v2760 = vpop.f32.mrb[0].mxu0
    %v2761 = vadd.f32 0.0, %v2760
    %v2762 = vpop.f32.mrb[0].mxu0
    %v2763 = vadd.f32 0.0, %v2762
    %v2764 = vpop.f32.mrb[0].mxu0
    %v2765 = vadd.f32 0.0, %v2764
    %v2766 = vpop.f32.mrb[0].mxu0
    %v2767 = vadd.f32 0.0, %v2766
    %2768 = vmatprep.mubr.bf16.mxu0 0
    %2769 = vmatmul.mubr.bf16.gmra.mrb[0].mxu0 %v2426
    %v2770 = vpop.f32.mrb[0].mxu0
    %v2771 = vadd.f32 0.0, %v2770
    %v2772 = vpop.f32.mrb[0].mxu0
    %v2773 = vadd.f32 0.0, %v2772
    %v2774 = vpop.f32.mrb[0].mxu0
    %v2775 = vadd.f32 0.0, %v2774
    %v2776 = vpop.f32.mrb[0].mxu0
    %v2777 = vadd.f32 0.0, %v2776
    %2778 = vmatprep.mubr.bf16.mxu0 0
    %2779 = vmatmul.mubr.bf16.gmra.mrb[0].mxu0 %v2429
    %v2780 = vpop.f32.mrb[0].mxu0
    %v2781 = vadd.f32 0.0, %v2780
    %v2782 = vpop.f32.mrb[0].mxu0
    %v2783 = vadd.f32 0.0, %v2782
    %v2784 = vpop.f32.mrb[0].mxu0
    %v2785 = vadd.f32 0.0, %v2784
    %v2786 = vpop.f32.mrb[0].mxu0
    %v2787 = vadd.f32 0.0, %v2786
    %2788 = vmatprep.mubr.bf16.mxu0 0
    %2789 = vmatmul.mubr.bf16.gmra.mrb[0].mxu0 %v2432
    %v2790 = vpop.f32.mrb[0].mxu0
    %v2791 = vadd.f32 0.0, %v2790
    %v2792 = vpop.f32.mrb[0].mxu0
    %v2793 = vadd.f32 0.0, %v2792
    %v2794 = vpop.f32.mrb[0].mxu0
    %v2795 = vadd.f32 0.0, %v2794
    %v2796 = vpop.f32.mrb[0].mxu0
    %v2797 = vadd.f32 0.0, %v2796
    %2798 = vmatprep.mubr.bf16.mxu0 0
    %2799 = vmatmul.mubr.bf16.gmra.mrb[0].mxu0 %v2435
    %v2800 = vpop.f32.mrb[0].mxu0
    %v2801 = vadd.f32 0.0, %v2800
    %v2802 = vpop.f32.mrb[0].mxu0
    %v2803 = vadd.f32 0.0, %v2802
    %v2804 = vpop.f32.mrb[0].mxu0
    %v2805 = vadd.f32 0.0, %v2804
    %v2806 = vpop.f32.mrb[0].mxu0
    %v2807 = vadd.f32 0.0, %v2806
    %2808 = vmatprep.mubr.bf16.mxu0 0
    %2809 = vmatmul.mubr.bf16.gmra.mrb[0].mxu0 %v2438
    %v2810 = vpop.f32.mrb[0].mxu0
    %v2811 = vadd.f32 0.0, %v2810
    %v2812 = vpop.f32.mrb[0].mxu0
    %v2813 = vadd.f32 0.0, %v2812
    %v2814 = vpop.f32.mrb[0].mxu0
    %v2815 = vadd.f32 0.0, %v2814
    %v2816 = vpop.f32.mrb[0].mxu0
    %v2817 = vadd.f32 0.0, %v2816
    %2818 = vmatprep.mubr.bf16.mxu0 0
    %2819 = vmatmul.mubr.bf16.gmra.mrb[0].mxu0 %v2441
    %v2820 = vpop.f32.mrb[0].mxu0
    %v2821 = vadd.f32 0.0, %v2820
    %v2822 = vpop.f32.mrb[0].mxu0
    %v2823 = vadd.f32 0.0, %v2822
    %v2824 = vpop.f32.mrb[0].mxu0
    %v2825 = vadd.f32 0.0, %v2824
    %v2826 = vpop.f32.mrb[0].mxu0
    %v2827 = vadd.f32 0.0, %v2826
    %2828 = vmatprep.mubr.bf16.mxu0 0
    %2829 = vmatmul.mubr.bf16.gmra.mrb[0].mxu0 %v2444
    %v2830 = vpop.f32.mrb[0].mxu0
    %v2831 = vadd.f32 0.0, %v2830
    %v2832 = vpop.f32.mrb[0].mxu0
    %v2833 = vadd.f32 0.0, %v2832
    %v2834 = vpop.f32.mrb[0].mxu0
    %v2835 = vadd.f32 0.0, %v2834
    %v2836 = vpop.f32.mrb[0].mxu0
    %v2837 = vadd.f32 0.0, %v2836
    %2838 = vmatprep.mubr.bf16.mxu0 0
    %2839 = vmatmul.mubr.bf16.gmra.mrb[0].mxu0 %v2447
    %v2840 = vpop.f32.mrb[0].mxu0
    %v2841 = vadd.f32 0.0, %v2840
    %v2842 = vpop.f32.mrb[0].mxu0
    %v2843 = vadd.f32 0.0, %v2842
    %v2844 = vpop.f32.mrb[0].mxu0
    %v2845 = vadd.f32 0.0, %v2844
    %v2846 = vpop.f32.mrb[0].mxu0
    %v2847 = vadd.f32 0.0, %v2846
    %2848 = vmatprep.mubr.bf16.mxu0 0
    %2849 = vmatmul.mubr.bf16.gmra.mrb[0].mxu0 %v2450
    %v2850 = vpop.f32.mrb[0].mxu0
    %v2851 = vadd.f32 0.0, %v2850
    %v2852 = vpop.f32.mrb[0].mxu0
    %v2853 = vadd.f32 0.0, %v2852
    %v2854 = vpop.f32.mrb[0].mxu0
    %v2855 = vadd.f32 0.0, %v2854
    %v2856 = vpop.f32.mrb[0].mxu0
    %v2857 = vadd.f32 0.0, %v2856
    %2858 = vmatprep.mubr.bf16.mxu0 0
    %2859 = vmatmul.mubr.bf16.gmra.mrb[0].mxu0 %v2453
    %v2860 = vpop.f32.mrb[0].mxu0
    %v2861 = vadd.f32 0.0, %v2860
    %v2862 = vpop.f32.mrb[0].mxu0
    %v2863 = vadd.f32 0.0, %v2862
    %v2864 = vpop.f32.mrb[0].mxu0
    %v2865 = vadd.f32 0.0, %v2864
    %v2866 = vpop.f32.mrb[0].mxu0
    %v2867 = vadd.f32 0.0, %v2866
    %2868 = vmatprep.mubr.bf16.mxu0 0
    %2869 = vmatmul.mubr.bf16.gmra.mrb[0].mxu0 %v2456
    %v2870 = vpop.f32.mrb[0].mxu0
    %v2871 = vadd.f32 0.0, %v2870
    %v2872 = vpop.f32.mrb[0].mxu0
    %v2873 = vadd.f32 0.0, %v2872
    %v2874 = vpop.f32.mrb[0].mxu0
    %v2875 = vadd.f32 0.0, %v2874
    %v2876 = vpop.f32.mrb[0].mxu0
    %v2877 = vadd.f32 0.0, %v2876
    %2878 = vmatprep.mubr.bf16.mxu0 0
    %2879 = vmatmul.mubr.bf16.gmra.mrb[0].mxu0 %v2459
    %v2880 = vpop.f32.mrb[0].mxu0
    %v2881 = vadd.f32 0.0, %v2880
    %v2882 = vpop.f32.mrb[0].mxu0
    %v2883 = vadd.f32 0.0, %v2882
    %v2884 = vpop.f32.mrb[0].mxu0
    %v2885 = vadd.f32 0.0, %v2884
    %v2886 = vpop.f32.mrb[0].mxu0
    %v2887 = vadd.f32 0.0, %v2886
    %2888 = vmatprep.mubr.bf16.mxu0 0
    %2889 = vmatmul.mubr.bf16.gmra.mrb[0].mxu0 %v2462
    %v2890 = vpop.f32.mrb[0].mxu0
    %v2891 = vadd.f32 0.0, %v2890
    %v2892 = vpop.f32.mrb[0].mxu0
    %v2893 = vadd.f32 0.0, %v2892
    %v2894 = vpop.f32.mrb[0].mxu0
    %v2895 = vadd.f32 0.0, %v2894
    %v2896 = vpop.f32.mrb[0].mxu0
    %v2897 = vadd.f32 0.0, %v2896
    %2898 = vmatprep.mubr.bf16.mxu0 0
    %2899 = vmatmul.mubr.bf16.gmra.mrb[0].mxu0 %v2465
    %v2900 = vpop.f32.mrb[0].mxu0
    %v2901 = vadd.f32 0.0, %v2900
    %v2902 = vpop.f32.mrb[0].mxu0
    %v2903 = vadd.f32 0.0, %v2902
    %v2904 = vpop.f32.mrb[0].mxu0
    %v2905 = vadd.f32 0.0, %v2904
    %v2906 = vpop.f32.mrb[0].mxu0
    %v2907 = vadd.f32 0.0, %v2906
    %2908 = vmatprep.mubr.bf16.mxu0 0
    %2909 = vmatmul.mubr.bf16.gmra.mrb[0].mxu0 %v2468
    %v2910 = vpop.f32.mrb[0].mxu0
    %v2911 = vadd.f32 0.0, %v2910
    %v2912 = vpop.f32.mrb[0].mxu0
    %v2913 = vadd.f32 0.0, %v2912
    %v2914 = vpop.f32.mrb[0].mxu0
    %v2915 = vadd.f32 0.0, %v2914
    %v2916 = vpop.f32.mrb[0].mxu0
    %v2917 = vadd.f32 0.0, %v2916
    %2918 = vmatprep.mubr.bf16.mxu0 0
    %2919 = vmatmul.mubr.bf16.gmra.mrb[0].mxu0 %v2471
    %v2920 = vpop.f32.mrb[0].mxu0
    %v2921 = vadd.f32 0.0, %v2920
    %v2922 = vpop.f32.mrb[0].mxu0
    %v2923 = vadd.f32 0.0, %v2922
    %v2924 = vpop.f32.mrb[0].mxu0
    %v2925 = vadd.f32 0.0, %v2924
    %v2926 = vpop.f32.mrb[0].mxu0
    %v2927 = vadd.f32 0.0, %v2926
    %2928 = vmatprep.mubr.bf16.mxu0 0
    %2929 = vmatmul.mubr.bf16.gmra.mrb[0].mxu0 %v2474
    %v2930 = vpop.f32.mrb[0].mxu0
    %v2931 = vadd.f32 0.0, %v2930
    %v2932 = vpop.f32.mrb[0].mxu0
    %v2933 = vadd.f32 0.0, %v2932
    %v2934 = vpop.f32.mrb[0].mxu0
    %v2935 = vadd.f32 0.0, %v2934
    %v2936 = vpop.f32.mrb[0].mxu0
    %v2937 = vadd.f32 0.0, %v2936
    %2938 = vmatprep.mubr.bf16.mxu0 0
    %2939 = vmatmul.mubr.bf16.gmra.mrb[0].mxu0 %v2477
    %v2940 = vpop.f32.mrb[0].mxu0
    %v2941 = vadd.f32 0.0, %v2940
    %v2942 = vpop.f32.mrb[0].mxu0
    %v2943 = vadd.f32 0.0, %v2942
    %v2944 = vpop.f32.mrb[0].mxu0
    %v2945 = vadd.f32 0.0, %v2944
    %v2946 = vpop.f32.mrb[0].mxu0
    %v2947 = vadd.f32 0.0, %v2946
    %2948 = vmatprep.mubr.bf16.mxu0 0
    %2949 = vmatmul.mubr.bf16.gmra.mrb[0].mxu0 %v2480
    %v2950 = vpop.f32.mrb[0].mxu0
    %v2951 = vadd.f32 0.0, %v2950
    %v2952 = vpop.f32.mrb[0].mxu0
    %v2953 = vadd.f32 0.0, %v2952
    %v2954 = vpop.f32.mrb[0].mxu0
    %v2955 = vadd.f32 0.0, %v2954
    %v2956 = vpop.f32.mrb[0].mxu0
    %v2957 = vadd.f32 0.0, %v2956
    %2958 = vmatprep.mubr.bf16.mxu0 0
    %2959 = vmatmul.mubr.bf16.gmra.mrb[0].mxu0 %v2483
    %v2960 = vpop.f32.mrb[0].mxu0
    %v2961 = vadd.f32 0.0, %v2960
    %v2962 = vpop.f32.mrb[0].mxu0
    %v2963 = vadd.f32 0.0, %v2962
    %v2964 = vpop.f32.mrb[0].mxu0
    %v2965 = vadd.f32 0.0, %v2964
    %v2966 = vpop.f32.mrb[0].mxu0
    %v2967 = vadd.f32 0.0, %v2966
    %2968 = vmatprep.mubr.bf16.mxu0 0
    %2969 = vmatmul.mubr.bf16.gmra.mrb[0].mxu0 %v2486
    %v2970 = vpop.f32.mrb[0].mxu0
    %v2971 = vadd.f32 0.0, %v2970
    %v2972 = vpop.f32.mrb[0].mxu0
    %v2973 = vadd.f32 0.0, %v2972
    %v2974 = vpop.f32.mrb[0].mxu0
    %v2975 = vadd.f32 0.0, %v2974
    %v2976 = vpop.f32.mrb[0].mxu0
    %v2977 = vadd.f32 0.0, %v2976
    %2978 = vmatprep.mubr.bf16.mxu0 0
    %2979 = vmatmul.mubr.bf16.gmra.mrb[0].mxu0 %v2489
    %v2980 = vpop.f32.mrb[0].mxu0
    %v2981 = vadd.f32 0.0, %v2980
    %v2982 = vpop.f32.mrb[0].mxu0
    %v2983 = vadd.f32 0.0, %v2982
    %v2984 = vpop.f32.mrb[0].mxu0
    %v2985 = vadd.f32 0.0, %v2984
    %v2986 = vpop.f32.mrb[0].mxu0
    %v2987 = vadd.f32 0.0, %v2986
    %2988 = vmatprep.mubr.bf16.mxu0 0
    %2989 = vmatmul.mubr.bf16.gmra.mrb[0].mxu0 %v2492
    %v2990 = vpop.f32.mrb[0].mxu0
    %v2991 = vadd.f32 0.0, %v2990
    %v2992 = vpop.f32.mrb[0].mxu0
    %v2993 = vadd.f32 0.0, %v2992
    %v2994 = vpop.f32.mrb[0].mxu0
    %v2995 = vadd.f32 0.0, %v2994
    %v2996 = vpop.f32.mrb[0].mxu0
    %v2997 = vadd.f32 0.0, %v2996
    %2998 = vmatprep.mubr.bf16.mxu0 0
    %2999 = vmatmul.mubr.bf16.gmra.mrb[0].mxu0 %v2495
    %v3000 = vpop.f32.mrb[0].mxu0
    %v3001 = vadd.f32 0.0, %v3000
    %v3002 = vpop.f32.mrb[0].mxu0
    %v3003 = vadd.f32 0.0, %v3002
    %v3004 = vpop.f32.mrb[0].mxu0
    %v3005 = vadd.f32 0.0, %v3004
    %v3006 = vpop.f32.mrb[0].mxu0
    %v3007 = vadd.f32 0.0, %v3006
    %3008 = vmatprep.mubr.bf16.mxu0 0
    %3009 = vmatmul.mubr.bf16.gmra.mrb[0].mxu0 %v2498
    %v3010 = vpop.f32.mrb[0].mxu0
    %v3011 = vadd.f32 0.0, %v3010
    %v3012 = vpop.f32.mrb[0].mxu0
    %v3013 = vadd.f32 0.0, %v3012
    %v3014 = vpop.f32.mrb[0].mxu0
    %v3015 = vadd.f32 0.0, %v3014
    %v3016 = vpop.f32.mrb[0].mxu0
    %v3017 = vadd.f32 0.0, %v3016
    %3018 = vmatprep.mubr.bf16.mxu0 0
    %3019 = vmatmul.mubr.bf16.gmra.mrb[0].mxu0 %v2501
    %v3020 = vpop.f32.mrb[0].mxu0
    %v3021 = vadd.f32 0.0, %v3020
    %v3022 = vpop.f32.mrb[0].mxu0
    %v3023 = vadd.f32 0.0, %v3022
    %v3024 = vpop.f32.mrb[0].mxu0
    %v3025 = vadd.f32 0.0, %v3024
    %v3026 = vpop.f32.mrb[0].mxu0
    %v3027 = vadd.f32 0.0, %v3026
    %3028 = vmatprep.mubr.bf16.mxu0 0
    %3029 = vmatmul.mubr.bf16.gmra.mrb[0].mxu0 %v2504
    %v3030 = vpop.f32.mrb[0].mxu0
    %v3031 = vadd.f32 0.0, %v3030
    %v3032 = vpop.f32.mrb[0].mxu0
    %v3033 = vadd.f32 0.0, %v3032
    %v3034 = vpop.f32.mrb[0].mxu0
    %v3035 = vadd.f32 0.0, %v3034
    %v3036 = vpop.f32.mrb[0].mxu0
    %v3037 = vadd.f32 0.0, %v3036
    %3038 = vmatprep.mubr.bf16.mxu0 0
    %3039 = vmatmul.mubr.bf16.gmra.mrb[0].mxu0 %v2507
    %v3040 = vpop.f32.mrb[0].mxu0
    %v3041 = vadd.f32 0.0, %v3040
    %v3042 = vpop.f32.mrb[0].mxu0
    %v3043 = vadd.f32 0.0, %v3042
    %v3044 = vpop.f32.mrb[0].mxu0
    %v3045 = vadd.f32 0.0, %v3044
    %v3046 = vpop.f32.mrb[0].mxu0
    %v3047 = vadd.f32 0.0, %v3046
    %3048 = vmatprep.mubr.bf16.mxu0 0
    %3049 = vmatmul.mubr.bf16.gmra.mrb[0].mxu0 %v2510
    %v3050 = vpop.f32.mrb[0].mxu0
    %v3051 = vadd.f32 0.0, %v3050
    %v3052 = vpop.f32.mrb[0].mxu0
    %v3053 = vadd.f32 0.0, %v3052
    %v3054 = vpop.f32.mrb[0].mxu0
    %v3055 = vadd.f32 0.0, %v3054
    %v3056 = vpop.f32.mrb[0].mxu0
    %v3057 = vadd.f32 0.0, %v3056
    %3058 = vmatprep.mubr.bf16.mxu0 0
    %3059 = vmatmul.mubr.bf16.gmra.mrb[0].mxu0 %v2513
    %v3060 = vpop.f32.mrb[0].mxu0
    %v3061 = vadd.f32 0.0, %v3060
    %v3062 = vpop.f32.mrb[0].mxu0
    %v3063 = vadd.f32 0.0, %v3062
    %v3064 = vpop.f32.mrb[0].mxu0
    %v3065 = vadd.f32 0.0, %v3064
    %v3066 = vpop.f32.mrb[0].mxu0
    %v3067 = vadd.f32 0.0, %v3066
    %3068 = vmatprep.mubr.bf16.mxu0 0
    %3069 = vmatmul.mubr.bf16.gmra.mrb[0].mxu0 %v2516
    %v3070 = vpop.f32.mrb[0].mxu0
    %v3071 = vadd.f32 0.0, %v3070
    %v3072 = vpop.f32.mrb[0].mxu0
    %v3073 = vadd.f32 0.0, %v3072
    %v3074 = vpop.f32.mrb[0].mxu0
    %v3075 = vadd.f32 0.0, %v3074
    %v3076 = vpop.f32.mrb[0].mxu0
    %v3077 = vadd.f32 0.0, %v3076
    %3078 = vmatprep.mubr.bf16.mxu0 0
    %3079 = vmatmul.mubr.bf16.gmra.mrb[0].mxu0 %v2519
    %v3080 = vpop.f32.mrb[0].mxu0
    %v3081 = vadd.f32 0.0, %v3080
    %v3082 = vpop.f32.mrb[0].mxu0
    %v3083 = vadd.f32 0.0, %v3082
    %v3084 = vpop.f32.mrb[0].mxu0
    %v3085 = vadd.f32 0.0, %v3084
    %v3086 = vpop.f32.mrb[0].mxu0
    %v3087 = vadd.f32 0.0, %v3086
    %3088 = vmatprep.mubr.bf16.mxu0 0
    %3089 = vmatmul.mubr.bf16.gmra.mrb[0].mxu0 %v2522
    %v3090 = vpop.f32.mrb[0].mxu0
    %v3091 = vadd.f32 0.0, %v3090
    %v3092 = vpop.f32.mrb[0].mxu0
    %v3093 = vadd.f32 0.0, %v3092
    %v3094 = vpop.f32.mrb[0].mxu0
    %v3095 = vadd.f32 0.0, %v3094
    %v3096 = vpop.f32.mrb[0].mxu0
    %v3097 = vadd.f32 0.0, %v3096
    %3098 = vmatprep.mubr.bf16.mxu0 0
    %3099 = vmatmul.mubr.bf16.gmra.mrb[0].mxu0 %v2525
    %v3100 = vpop.f32.mrb[0].mxu0
    %v3101 = vadd.f32 0.0, %v3100
    %v3102 = vpop.f32.mrb[0].mxu0
    %v3103 = vadd.f32 0.0, %v3102
    %v3104 = vpop.f32.mrb[0].mxu0
    %v3105 = vadd.f32 0.0, %v3104
    %v3106 = vpop.f32.mrb[0].mxu0
    %v3107 = vadd.f32 0.0, %v3106
    %3108 = vmatprep.mubr.bf16.mxu0 0
    %3109 = vmatmul.mubr.bf16.gmra.mrb[0].mxu0 %v2528
    %v3110 = vpop.f32.mrb[0].mxu0
    %v3111 = vadd.f32 0.0, %v3110
    %v3112 = vpop.f32.mrb[0].mxu0
    %v3113 = vadd.f32 0.0, %v3112
    %v3114 = vpop.f32.mrb[0].mxu0
    %v3115 = vadd.f32 0.0, %v3114
    %v3116 = vpop.f32.mrb[0].mxu0
    %v3117 = vadd.f32 0.0, %v3116
    %3118 = vmatprep.mubr.bf16.mxu0 0
    %3119 = vmatmul.mubr.bf16.gmra.mrb[0].mxu0 %v2531
    %v3120 = vpop.f32.mrb[0].mxu0
    %v3121 = vadd.f32 0.0, %v3120
    %v3122 = vpop.f32.mrb[0].mxu0
    %v3123 = vadd.f32 0.0, %v3122
    %v3124 = vpop.f32.mrb[0].mxu0
    %v3125 = vadd.f32 0.0, %v3124
    %v3126 = vpop.f32.mrb[0].mxu0
    %v3127 = vadd.f32 0.0, %v3126
    %3128 = vmatprep.mubr.bf16.mxu0 0
    %3129 = vmatmul.mubr.bf16.gmra.mrb[0].mxu0 %v2534
    %v3130 = vpop.f32.mrb[0].mxu0
    %v3131 = vadd.f32 0.0, %v3130
    %v3132 = vpop.f32.mrb[0].mxu0
    %v3133 = vadd.f32 0.0, %v3132
    %v3134 = vpop.f32.mrb[0].mxu0
    %v3135 = vadd.f32 0.0, %v3134
    %v3136 = vpop.f32.mrb[0].mxu0
    %v3137 = vadd.f32 0.0, %v3136
    %3138 = vmatprep.mubr.bf16.mxu0 0
    %3139 = vmatmul.mubr.bf16.gmra.mrb[0].mxu0 %v2537
    %v3140 = vpop.f32.mrb[0].mxu0
    %v3141 = vadd.f32 0.0, %v3140
    %v3142 = vpop.f32.mrb[0].mxu0
    %v3143 = vadd.f32 0.0, %v3142
    %v3144 = vpop.f32.mrb[0].mxu0
    %v3145 = vadd.f32 0.0, %v3144
    %v3146 = vpop.f32.mrb[0].mxu0
    %v3147 = vadd.f32 0.0, %v3146
    %3148 = vmatprep.mubr.bf16.mxu0 0
    %3149 = vmatmul.mubr.bf16.gmra.mrb[0].mxu0 %v2540
    %v3150 = vpop.f32.mrb[0].mxu0
    %v3151 = vadd.f32 0.0, %v3150
    %v3152 = vpop.f32.mrb[0].mxu0
    %v3153 = vadd.f32 0.0, %v3152
    %v3154 = vpop.f32.mrb[0].mxu0
    %v3155 = vadd.f32 0.0, %v3154
    %v3156 = vpop.f32.mrb[0].mxu0
    %v3157 = vadd.f32 0.0, %v3156
    %3158 = vmatprep.mubr.bf16.mxu0 0
    %3159 = vmatmul.mubr.bf16.gmra.mrb[0].mxu0 %v2543
    %v3160 = vpop.f32.mrb[0].mxu0
    %v3161 = vadd.f32 0.0, %v3160
    %v3162 = vpop.f32.mrb[0].mxu0
    %v3163 = vadd.f32 0.0, %v3162
    %v3164 = vpop.f32.mrb[0].mxu0
    %v3165 = vadd.f32 0.0, %v3164
    %v3166 = vpop.f32.mrb[0].mxu0
    %v3167 = vadd.f32 0.0, %v3166
    %3168 = vmatprep.mubr.bf16.mxu0 0
    %3169 = vmatmul.mubr.bf16.gmra.mrb[0].mxu0 %v2546
    %v3170 = vpop.f32.mrb[0].mxu0
    %v3171 = vadd.f32 0.0, %v3170
    %v3172 = vpop.f32.mrb[0].mxu0
    %v3173 = vadd.f32 0.0, %v3172
    %v3174 = vpop.f32.mrb[0].mxu0
    %v3175 = vadd.f32 0.0, %v3174
    %v3176 = vpop.f32.mrb[0].mxu0
    %v3177 = vadd.f32 0.0, %v3176
    %3178 = vmatprep.mubr.bf16.mxu0 0
    %3179 = vmatmul.mubr.bf16.gmra.mrb[0].mxu0 %v2549
    %v3180 = vpop.f32.mrb[0].mxu0
    %v3181 = vadd.f32 0.0, %v3180
    %v3182 = vpop.f32.mrb[0].mxu0
    %v3183 = vadd.f32 0.0, %v3182
    %v3184 = vpop.f32.mrb[0].mxu0
    %v3185 = vadd.f32 0.0, %v3184
    %v3186 = vpop.f32.mrb[0].mxu0
    %v3187 = vadd.f32 0.0, %v3186
    %3188 = vmatprep.mubr.bf16.mxu0 0
    %3189 = vmatmul.mubr.bf16.gmra.mrb[0].mxu0 %v2552
    %v3190 = vpop.f32.mrb[0].mxu0
    %v3191 = vadd.f32 0.0, %v3190
    %v3192 = vpop.f32.mrb[0].mxu0
    %v3193 = vadd.f32 0.0, %v3192
    %v3194 = vpop.f32.mrb[0].mxu0
    %v3195 = vadd.f32 0.0, %v3194
    %v3196 = vpop.f32.mrb[0].mxu0
    %v3197 = vadd.f32 0.0, %v3196
    %3198 = vmatprep.mubr.bf16.mxu0 0
    %3199 = vmatmul.mubr.bf16.gmra.mrb[0].mxu0 %v2555
    %v3200 = vpop.f32.mrb[0].mxu0
    %v3201 = vadd.f32 0.0, %v3200
    %v3202 = vpop.f32.mrb[0].mxu0
    %v3203 = vadd.f32 0.0, %v3202
    %v3204 = vpop.f32.mrb[0].mxu0
    %v3205 = vadd.f32 0.0, %v3204
    %v3206 = vpop.f32.mrb[0].mxu0
    %v3207 = vadd.f32 0.0, %v3206
    %3208 = vmatprep.mubr.bf16.mxu0 0
    %3209 = vmatmul.mubr.bf16.gmra.mrb[0].mxu0 %v2558
    %v3210 = vpop.f32.mrb[0].mxu0
    %v3211 = vadd.f32 0.0, %v3210
    %v3212 = vpop.f32.mrb[0].mxu0
    %v3213 = vadd.f32 0.0, %v3212
    %v3214 = vpop.f32.mrb[0].mxu0
    %v3215 = vadd.f32 0.0, %v3214
    %v3216 = vpop.f32.mrb[0].mxu0
    %v3217 = vadd.f32 0.0, %v3216
    %3218 = vmatprep.mubr.bf16.mxu0 0
    %3219 = vmatmul.mubr.bf16.gmra.mrb[0].mxu0 %v2561
    %v3220 = vpop.f32.mrb[0].mxu0
    %v3221 = vadd.f32 0.0, %v3220
    %v3222 = vpop.f32.mrb[0].mxu0
    %v3223 = vadd.f32 0.0, %v3222
    %v3224 = vpop.f32.mrb[0].mxu0
    %v3225 = vadd.f32 0.0, %v3224
    %v3226 = vpop.f32.mrb[0].mxu0
    %v3227 = vadd.f32 0.0, %v3226
    %3228 = vmatprep.mubr.bf16.mxu0 0
    %3229 = vmatmul.mubr.bf16.gmra.mrb[0].mxu0 %v2564
    %v3230 = vpop.f32.mrb[0].mxu0
    %v3231 = vadd.f32 0.0, %v3230
    %v3232 = vpop.f32.mrb[0].mxu0
    %v3233 = vadd.f32 0.0, %v3232
    %v3234 = vpop.f32.mrb[0].mxu0
    %v3235 = vadd.f32 0.0, %v3234
    %v3236 = vpop.f32.mrb[0].mxu0
    %v3237 = vadd.f32 0.0, %v3236
    %3238 = vdwg.mxu0
    %v3239 = vld [vmem:[#allocation2] sm:$0xff]
    %v3240 = vld [vmem:[#allocation2 + $0x8] sm:$0xff]
    %v3241 = vld [vmem:[#allocation2 + $0x10] sm:$0xff]
    %v3242 = vld [vmem:[#allocation2 + $0x18] sm:$0xff]
    %v3243 = vld [vmem:[#allocation2 + $0x20] sm:$0xff]
    %v3244 = vld [vmem:[#allocation2 + $0x28] sm:$0xff]
    %v3245 = vld [vmem:[#allocation2 + $0x30] sm:$0xff]
    %v3246 = vld [vmem:[#allocation2 + $0x38] sm:$0xff]
    %v3247 = vld [vmem:[#allocation2 + $0x40] sm:$0xff]
    %v3248 = vld [vmem:[#allocation2 + $0x48] sm:$0xff]
    %v3249 = vld [vmem:[#allocation2 + $0x50] sm:$0xff]
    %v3250 = vld [vmem:[#allocation2 + $0x58] sm:$0xff]
    %v3251 = vld [vmem:[#allocation2 + $0x60] sm:$0xff]
    %v3252 = vld [vmem:[#allocation2 + $0x68] sm:$0xff]
    %v3253 = vld [vmem:[#allocation2 + $0x70] sm:$0xff]
    %v3254 = vld [vmem:[#allocation2 + $0x78] sm:$0xff]
    %v3255 = vunpack.c.l.bf16 %v3239
    %v3256 = vunpack.c.h.bf16 %v3239
    %v3257 = vunpack.c.l.bf16 %v3240
    %v3258 = vunpack.c.h.bf16 %v3240
    %v3259 = vunpack.c.l.bf16 %v3241
    %v3260 = vunpack.c.h.bf16 %v3241
    %v3261 = vunpack.c.l.bf16 %v3242
    %v3262 = vunpack.c.h.bf16 %v3242
    %v3263 = vunpack.c.l.bf16 %v3243
    %v3264 = vunpack.c.h.bf16 %v3243
    %v3265 = vunpack.c.l.bf16 %v3244
    %v3266 = vunpack.c.h.bf16 %v3244
    %v3267 = vunpack.c.l.bf16 %v3245
    %v3268 = vunpack.c.h.bf16 %v3245
    %v3269 = vunpack.c.l.bf16 %v3246
    %v3270 = vunpack.c.h.bf16 %v3246
    %v3271 = vunpack.c.l.bf16 %v3247
    %v3272 = vunpack.c.h.bf16 %v3247
    %v3273 = vunpack.c.l.bf16 %v3248
    %v3274 = vunpack.c.h.bf16 %v3248
    %v3275 = vunpack.c.l.bf16 %v3249
    %v3276 = vunpack.c.h.bf16 %v3249
    %v3277 = vunpack.c.l.bf16 %v3250
    %v3278 = vunpack.c.h.bf16 %v3250
    %v3279 = vunpack.c.l.bf16 %v3251
    %v3280 = vunpack.c.h.bf16 %v3251
    %v3281 = vunpack.c.l.bf16 %v3252
    %v3282 = vunpack.c.h.bf16 %v3252
    %v3283 = vunpack.c.l.bf16 %v3253
    %v3284 = vunpack.c.h.bf16 %v3253
    %v3285 = vunpack.c.l.bf16 %v3254
    %v3286 = vunpack.c.h.bf16 %v3254
    %vm3287 = vcmp.lt.f32.partialorder %v2761, %v2601
    %vm3288 = vcmp.lt.f32.partialorder %v2765, %v2605
    %vm3289 = vcmp.lt.f32.partialorder %v2771, %v2611
    %vm3290 = vcmp.lt.f32.partialorder %v2775, %v2615
    %vm3291 = vcmp.lt.f32.partialorder %v2781, %v2621
    %vm3292 = vcmp.lt.f32.partialorder %v2785, %v2625
    %vm3293 = vcmp.lt.f32.partialorder %v2791, %v2631
    %vm3294 = vcmp.lt.f32.partialorder %v2795, %v2635
    %vm3295 = vcmp.lt.f32.partialorder %v2801, %v2641
    %vm3296 = vcmp.lt.f32.partialorder %v2805, %v2645
    %vm3297 = vcmp.lt.f32.partialorder %v2811, %v2651
    %vm3298 = vcmp.lt.f32.partialorder %v2815, %v2655
    %vm3299 = vcmp.lt.f32.partialorder %v2821, %v2661
    %vm3300 = vcmp.lt.f32.partialorder %v2825, %v2665
    %vm3301 = vcmp.lt.f32.partialorder %v2831, %v2671
    %vm3302 = vcmp.lt.f32.partialorder %v2835, %v2675
    %vm3303 = vcmp.lt.f32.partialorder %v2841, %v2681
    %vm3304 = vcmp.lt.f32.partialorder %v2845, %v2685
    %vm3305 = vcmp.lt.f32.partialorder %v2851, %v2691
    %vm3306 = vcmp.lt.f32.partialorder %v2855, %v2695
    %vm3307 = vcmp.lt.f32.partialorder %v2861, %v2701
    %vm3308 = vcmp.lt.f32.partialorder %v2865, %v2705
    %vm3309 = vcmp.lt.f32.partialorder %v2871, %v2711
    %vm3310 = vcmp.lt.f32.partialorder %v2875, %v2715
    %vm3311 = vcmp.lt.f32.partialorder %v2881, %v2721
    %vm3312 = vcmp.lt.f32.partialorder %v2885, %v2725
    %vm3313 = vcmp.lt.f32.partialorder %v2891, %v2731
    %vm3314 = vcmp.lt.f32.partialorder %v2895, %v2735
    %vm3315 = vcmp.lt.f32.partialorder %v2901, %v2741
    %vm3316 = vcmp.lt.f32.partialorder %v2905, %v2745
    %vm3317 = vcmp.lt.f32.partialorder %v2911, %v2751
    %vm3318 = vcmp.lt.f32.partialorder %v2915, %v2755
    %v3319 = vld [vmem:[#allocation2 + $0x80] sm:$0xff]
    %v3320 = vld [vmem:[#allocation2 + $0x88] sm:$0xff]
    %v3321 = vld [vmem:[#allocation2 + $0x90] sm:$0xff]
    %v3322 = vld [vmem:[#allocation2 + $0x98] sm:$0xff]
    %v3323 = vld [vmem:[#allocation2 + $0xa0] sm:$0xff]
    %v3324 = vld [vmem:[#allocation2 + $0xa8] sm:$0xff]
    %v3325 = vld [vmem:[#allocation2 + $0xb0] sm:$0xff]
    %v3326 = vld [vmem:[#allocation2 + $0xb8] sm:$0xff]
    %v3327 = vld [vmem:[#allocation2 + $0xc0] sm:$0xff]
    %v3328 = vld [vmem:[#allocation2 + $0xc8] sm:$0xff]
    %v3329 = vld [vmem:[#allocation2 + $0xd0] sm:$0xff]
    %v3330 = vld [vmem:[#allocation2 + $0xd8] sm:$0xff]
    %v3331 = vld [vmem:[#allocation2 + $0xe0] sm:$0xff]
    %v3332 = vld [vmem:[#allocation2 + $0xe8] sm:$0xff]
    %v3333 = vld [vmem:[#allocation2 + $0xf0] sm:$0xff]
    %v3334 = vld [vmem:[#allocation2 + $0xf8] sm:$0xff]
    %v3335 = vunpack.c.l.bf16 %v3319
    %v3336 = vunpack.c.h.bf16 %v3319
    %v3337 = vunpack.c.l.bf16 %v3320
    %v3338 = vunpack.c.h.bf16 %v3320
    %v3339 = vunpack.c.l.bf16 %v3321
    %v3340 = vunpack.c.h.bf16 %v3321
    %v3341 = vunpack.c.l.bf16 %v3322
    %v3342 = vunpack.c.h.bf16 %v3322
    %v3343 = vunpack.c.l.bf16 %v3323
    %v3344 = vunpack.c.h.bf16 %v3323
    %v3345 = vunpack.c.l.bf16 %v3324
    %v3346 = vunpack.c.h.bf16 %v3324
    %v3347 = vunpack.c.l.bf16 %v3325
    %v3348 = vunpack.c.h.bf16 %v3325
    %v3349 = vunpack.c.l.bf16 %v3326
    %v3350 = vunpack.c.h.bf16 %v3326
    %v3351 = vunpack.c.l.bf16 %v3327
    %v3352 = vunpack.c.h.bf16 %v3327
    %v3353 = vunpack.c.l.bf16 %v3328
    %v3354 = vunpack.c.h.bf16 %v3328
    %v3355 = vunpack.c.l.bf16 %v3329
    %v3356 = vunpack.c.h.bf16 %v3329
    %v3357 = vunpack.c.l.bf16 %v3330
    %v3358 = vunpack.c.h.bf16 %v3330
    %v3359 = vunpack.c.l.bf16 %v3331
    %v3360 = vunpack.c.h.bf16 %v3331
    %v3361 = vunpack.c.l.bf16 %v3332
    %v3362 = vunpack.c.h.bf16 %v3332
    %v3363 = vunpack.c.l.bf16 %v3333
    %v3364 = vunpack.c.h.bf16 %v3333
    %v3365 = vunpack.c.l.bf16 %v3334
    %v3366 = vunpack.c.h.bf16 %v3334
    %v3367 = vsel %vm3287, %v3335, %v3255
    %v3368 = vsel %vm3288, %v3336, %v3256
    %v3369 = vsel %vm3289, %v3337, %v3257
    %v3370 = vsel %vm3290, %v3338, %v3258
    %v3371 = vsel %vm3291, %v3339, %v3259
    %v3372 = vsel %vm3292, %v3340, %v3260
    %v3373 = vsel %vm3293, %v3341, %v3261
    %v3374 = vsel %vm3294, %v3342, %v3262
    %v3375 = vsel %vm3295, %v3343, %v3263
    %v3376 = vsel %vm3296, %v3344, %v3264
    %v3377 = vsel %vm3297, %v3345, %v3265
    %v3378 = vsel %vm3298, %v3346, %v3266
    %v3379 = vsel %vm3299, %v3347, %v3267
    %v3380 = vsel %vm3300, %v3348, %v3268
    %v3381 = vsel %vm3301, %v3349, %v3269
    %v3382 = vsel %vm3302, %v3350, %v3270
    %v3383 = vsel %vm3303, %v3351, %v3271
    %v3384 = vsel %vm3304, %v3352, %v3272
    %v3385 = vsel %vm3305, %v3353, %v3273
    %v3386 = vsel %vm3306, %v3354, %v3274
    %v3387 = vsel %vm3307, %v3355, %v3275
    %v3388 = vsel %vm3308, %v3356, %v3276
    %v3389 = vsel %vm3309, %v3357, %v3277
    %v3390 = vsel %vm3310, %v3358, %v3278
    %v3391 = vsel %vm3311, %v3359, %v3279
    %v3392 = vsel %vm3312, %v3360, %v3280
    %v3393 = vsel %vm3313, %v3361, %v3281
    %v3394 = vsel %vm3314, %v3362, %v3282
    %v3395 = vsel %vm3315, %v3363, %v3283
    %v3396 = vsel %vm3316, %v3364, %v3284
    %v3397 = vsel %vm3317, %v3365, %v3285
    %v3398 = vsel %vm3318, %v3366, %v3286
    %v3399 = vsel %vm3287, %v2761, %v2601
    %v3400 = vsel %vm3288, %v2765, %v2605
    %v3401 = vsel %vm3289, %v2771, %v2611
    %v3402 = vsel %vm3290, %v2775, %v2615
    %v3403 = vsel %vm3291, %v2781, %v2621
    %v3404 = vsel %vm3292, %v2785, %v2625
    %v3405 = vsel %vm3293, %v2791, %v2631
    %v3406 = vsel %vm3294, %v2795, %v2635
    %v3407 = vsel %vm3295, %v2801, %v2641
    %v3408 = vsel %vm3296, %v2805, %v2645
    %v3409 = vsel %vm3297, %v2811, %v2651
    %v3410 = vsel %vm3298, %v2815, %v2655
    %v3411 = vsel %vm3299, %v2821, %v2661
    %v3412 = vsel %vm3300, %v2825, %v2665
    %v3413 = vsel %vm3301, %v2831, %v2671
    %v3414 = vsel %vm3302, %v2835, %v2675
    %v3415 = vsel %vm3303, %v2841, %v2681
    %v3416 = vsel %vm3304, %v2845, %v2685
    %v3417 = vsel %vm3305, %v2851, %v2691
    %v3418 = vsel %vm3306, %v2855, %v2695
    %v3419 = vsel %vm3307, %v2861, %v2701
    %v3420 = vsel %vm3308, %v2865, %v2705
    %v3421 = vsel %vm3309, %v2871, %v2711
    %v3422 = vsel %vm3310, %v2875, %v2715
    %v3423 = vsel %vm3311, %v2881, %v2721
    %v3424 = vsel %vm3312, %v2885, %v2725
    %v3425 = vsel %vm3313, %v2891, %v2731
    %v3426 = vsel %vm3314, %v2895, %v2735
    %v3427 = vsel %vm3315, %v2901, %v2741
    %v3428 = vsel %vm3316, %v2905, %v2745
    %v3429 = vsel %vm3317, %v2911, %v2751
    %v3430 = vsel %vm3318, %v2915, %v2755
    %vm3431 = vcmp.lt.f32.partialorder %v2921, %v3399
    %vm3432 = vcmp.lt.f32.partialorder %v2925, %v3400
    %vm3433 = vcmp.lt.f32.partialorder %v2931, %v3401
    %vm3434 = vcmp.lt.f32.partialorder %v2935, %v3402
    %vm3435 = vcmp.lt.f32.partialorder %v2941, %v3403
    %vm3436 = vcmp.lt.f32.partialorder %v2945, %v3404
    %vm3437 = vcmp.lt.f32.partialorder %v2951, %v3405
    %vm3438 = vcmp.lt.f32.partialorder %v2955, %v3406
    %vm3439 = vcmp.lt.f32.partialorder %v2961, %v3407
    %vm3440 = vcmp.lt.f32.partialorder %v2965, %v3408
    %vm3441 = vcmp.lt.f32.partialorder %v2971, %v3409
    %vm3442 = vcmp.lt.f32.partialorder %v2975, %v3410
    %vm3443 = vcmp.lt.f32.partialorder %v2981, %v3411
    %vm3444 = vcmp.lt.f32.partialorder %v2985, %v3412
    %vm3445 = vcmp.lt.f32.partialorder %v2991, %v3413
    %vm3446 = vcmp.lt.f32.partialorder %v2995, %v3414
    %vm3447 = vcmp.lt.f32.partialorder %v3001, %v3415
    %vm3448 = vcmp.lt.f32.partialorder %v3005, %v3416
    %vm3449 = vcmp.lt.f32.partialorder %v3011, %v3417
    %vm3450 = vcmp.lt.f32.partialorder %v3015, %v3418
    %vm3451 = vcmp.lt.f32.partialorder %v3021, %v3419
    %vm3452 = vcmp.lt.f32.partialorder %v3025, %v3420
    %vm3453 = vcmp.lt.f32.partialorder %v3031, %v3421
    %vm3454 = vcmp.lt.f32.partialorder %v3035, %v3422
    %vm3455 = vcmp.lt.f32.partialorder %v3041, %v3423
    %vm3456 = vcmp.lt.f32.partialorder %v3045, %v3424
    %vm3457 = vcmp.lt.f32.partialorder %v3051, %v3425
    %vm3458 = vcmp.lt.f32.partialorder %v3055, %v3426
    %vm3459 = vcmp.lt.f32.partialorder %v3061, %v3427
    %vm3460 = vcmp.lt.f32.partialorder %v3065, %v3428
    %vm3461 = vcmp.lt.f32.partialorder %v3071, %v3429
    %vm3462 = vcmp.lt.f32.partialorder %v3075, %v3430
    %v3463 = vld [vmem:[#allocation2 + $0x100] sm:$0xff]
    %v3464 = vld [vmem:[#allocation2 + $0x108] sm:$0xff]
    %v3465 = vld [vmem:[#allocation2 + $0x110] sm:$0xff]
    %v3466 = vld [vmem:[#allocation2 + $0x118] sm:$0xff]
    %v3467 = vld [vmem:[#allocation2 + $0x120] sm:$0xff]
    %v3468 = vld [vmem:[#allocation2 + $0x128] sm:$0xff]
    %v3469 = vld [vmem:[#allocation2 + $0x130] sm:$0xff]
    %v3470 = vld [vmem:[#allocation2 + $0x138] sm:$0xff]
    %v3471 = vld [vmem:[#allocation2 + $0x140] sm:$0xff]
    %v3472 = vld [vmem:[#allocation2 + $0x148] sm:$0xff]
    %v3473 = vld [vmem:[#allocation2 + $0x150] sm:$0xff]
    %v3474 = vld [vmem:[#allocation2 + $0x158] sm:$0xff]
    %v3475 = vld [vmem:[#allocation2 + $0x160] sm:$0xff]
    %v3476 = vld [vmem:[#allocation2 + $0x168] sm:$0xff]
    %v3477 = vld [vmem:[#allocation2 + $0x170] sm:$0xff]
    %v3478 = vld [vmem:[#allocation2 + $0x178] sm:$0xff]
    %v3479 = vunpack.c.l.bf16 %v3463
    %v3480 = vunpack.c.h.bf16 %v3463
    %v3481 = vunpack.c.l.bf16 %v3464
    %v3482 = vunpack.c.h.bf16 %v3464
    %v3483 = vunpack.c.l.bf16 %v3465
    %v3484 = vunpack.c.h.bf16 %v3465
    %v3485 = vunpack.c.l.bf16 %v3466
    %v3486 = vunpack.c.h.bf16 %v3466
    %v3487 = vunpack.c.l.bf16 %v3467
    %v3488 = vunpack.c.h.bf16 %v3467
    %v3489 = vunpack.c.l.bf16 %v3468
    %v3490 = vunpack.c.h.bf16 %v3468
    %v3491 = vunpack.c.l.bf16 %v3469
    %v3492 = vunpack.c.h.bf16 %v3469
    %v3493 = vunpack.c.l.bf16 %v3470
    %v3494 = vunpack.c.h.bf16 %v3470
    %v3495 = vunpack.c.l.bf16 %v3471
    %v3496 = vunpack.c.h.bf16 %v3471
    %v3497 = vunpack.c.l.bf16 %v3472
    %v3498 = vunpack.c.h.bf16 %v3472
    %v3499 = vunpack.c.l.bf16 %v3473
    %v3500 = vunpack.c.h.bf16 %v3473
    %v3501 = vunpack.c.l.bf16 %v3474
    %v3502 = vunpack.c.h.bf16 %v3474
    %v3503 = vunpack.c.l.bf16 %v3475
    %v3504 = vunpack.c.h.bf16 %v3475
    %v3505 = vunpack.c.l.bf16 %v3476
    %v3506 = vunpack.c.h.bf16 %v3476
    %v3507 = vunpack.c.l.bf16 %v3477
    %v3508 = vunpack.c.h.bf16 %v3477
    %v3509 = vunpack.c.l.bf16 %v3478
    %v3510 = vunpack.c.h.bf16 %v3478
    %v3511 = vsel %vm3431, %v3479, %v3367
    %v3512 = vsel %vm3432, %v3480, %v3368
    %v3513 = vsel %vm3433, %v3481, %v3369
    %v3514 = vsel %vm3434, %v3482, %v3370
    %v3515 = vsel %vm3435, %v3483, %v3371
    %v3516 = vsel %vm3436, %v3484, %v3372
    %v3517 = vsel %vm3437, %v3485, %v3373
    %v3518 = vsel %vm3438, %v3486, %v3374
    %v3519 = vsel %vm3439, %v3487, %v3375
    %v3520 = vsel %vm3440, %v3488, %v3376
    %v3521 = vsel %vm3441, %v3489, %v3377
    %v3522 = vsel %vm3442, %v3490, %v3378
    %v3523 = vsel %vm3443, %v3491, %v3379
    %v3524 = vsel %vm3444, %v3492, %v3380
    %v3525 = vsel %vm3445, %v3493, %v3381
    %v3526 = vsel %vm3446, %v3494, %v3382
    %v3527 = vsel %vm3447, %v3495, %v3383
    %v3528 = vsel %vm3448, %v3496, %v3384
    %v3529 = vsel %vm3449, %v3497, %v3385
    %v3530 = vsel %vm3450, %v3498, %v3386
    %v3531 = vsel %vm3451, %v3499, %v3387
    %v3532 = vsel %vm3452, %v3500, %v3388
    %v3533 = vsel %vm3453, %v3501, %v3389
    %v3534 = vsel %vm3454, %v3502, %v3390
    %v3535 = vsel %vm3455, %v3503, %v3391
    %v3536 = vsel %vm3456, %v3504, %v3392
    %v3537 = vsel %vm3457, %v3505, %v3393
    %v3538 = vsel %vm3458, %v3506, %v3394
    %v3539 = vsel %vm3459, %v3507, %v3395
    %v3540 = vsel %vm3460, %v3508, %v3396
    %v3541 = vsel %vm3461, %v3509, %v3397
    %v3542 = vsel %vm3462, %v3510, %v3398
    %v3543 = vsel %vm3431, %v2921, %v3399
    %v3544 = vsel %vm3432, %v2925, %v3400
    %v3545 = vsel %vm3433, %v2931, %v3401
    %v3546 = vsel %vm3434, %v2935, %v3402
    %v3547 = vsel %vm3435, %v2941, %v3403
    %v3548 = vsel %vm3436, %v2945, %v3404
    %v3549 = vsel %vm3437, %v2951, %v3405
    %v3550 = vsel %vm3438, %v2955, %v3406
    %v3551 = vsel %vm3439, %v2961, %v3407
    %v3552 = vsel %vm3440, %v2965, %v3408
    %v3553 = vsel %vm3441, %v2971, %v3409
    %v3554 = vsel %vm3442, %v2975, %v3410
    %v3555 = vsel %vm3443, %v2981, %v3411
    %v3556 = vsel %vm3444, %v2985, %v3412
    %v3557 = vsel %vm3445, %v2991, %v3413
    %v3558 = vsel %vm3446, %v2995, %v3414
    %v3559 = vsel %vm3447, %v3001, %v3415
    %v3560 = vsel %vm3448, %v3005, %v3416
    %v3561 = vsel %vm3449, %v3011, %v3417
    %v3562 = vsel %vm3450, %v3015, %v3418
    %v3563 = vsel %vm3451, %v3021, %v3419
    %v3564 = vsel %vm3452, %v3025, %v3420
    %v3565 = vsel %vm3453, %v3031, %v3421
    %v3566 = vsel %vm3454, %v3035, %v3422
    %v3567 = vsel %vm3455, %v3041, %v3423
    %v3568 = vsel %vm3456, %v3045, %v3424
    %v3569 = vsel %vm3457, %v3051, %v3425
    %v3570 = vsel %vm3458, %v3055, %v3426
    %v3571 = vsel %vm3459, %v3061, %v3427
    %v3572 = vsel %vm3460, %v3065, %v3428
    %v3573 = vsel %vm3461, %v3071, %v3429
    %v3574 = vsel %vm3462, %v3075, %v3430
    %vm3575 = vcmp.lt.f32.partialorder %v3081, %v3543
    %vm3576 = vcmp.lt.f32.partialorder %v3085, %v3544
    %vm3577 = vcmp.lt.f32.partialorder %v3091, %v3545
    %vm3578 = vcmp.lt.f32.partialorder %v3095, %v3546
    %vm3579 = vcmp.lt.f32.partialorder %v3101, %v3547
    %vm3580 = vcmp.lt.f32.partialorder %v3105, %v3548
    %vm3581 = vcmp.lt.f32.partialorder %v3111, %v3549
    %vm3582 = vcmp.lt.f32.partialorder %v3115, %v3550
    %vm3583 = vcmp.lt.f32.partialorder %v3121, %v3551
    %vm3584 = vcmp.lt.f32.partialorder %v3125, %v3552
    %vm3585 = vcmp.lt.f32.partialorder %v3131, %v3553
    %vm3586 = vcmp.lt.f32.partialorder %v3135, %v3554
    %vm3587 = vcmp.lt.f32.partialorder %v3141, %v3555
    %vm3588 = vcmp.lt.f32.partialorder %v3145, %v3556
    %vm3589 = vcmp.lt.f32.partialorder %v3151, %v3557
    %vm3590 = vcmp.lt.f32.partialorder %v3155, %v3558
    %vm3591 = vcmp.lt.f32.partialorder %v3161, %v3559
    %vm3592 = vcmp.lt.f32.partialorder %v3165, %v3560
    %vm3593 = vcmp.lt.f32.partialorder %v3171, %v3561
    %vm3594 = vcmp.lt.f32.partialorder %v3175, %v3562
    %vm3595 = vcmp.lt.f32.partialorder %v3181, %v3563
    %vm3596 = vcmp.lt.f32.partialorder %v3185, %v3564
    %vm3597 = vcmp.lt.f32.partialorder %v3191, %v3565
    %vm3598 = vcmp.lt.f32.partialorder %v3195, %v3566
    %vm3599 = vcmp.lt.f32.partialorder %v3201, %v3567
    %vm3600 = vcmp.lt.f32.partialorder %v3205, %v3568
    %vm3601 = vcmp.lt.f32.partialorder %v3211, %v3569
    %vm3602 = vcmp.lt.f32.partialorder %v3215, %v3570
    %vm3603 = vcmp.lt.f32.partialorder %v3221, %v3571
    %vm3604 = vcmp.lt.f32.partialorder %v3225, %v3572
    %vm3605 = vcmp.lt.f32.partialorder %v3231, %v3573
    %vm3606 = vcmp.lt.f32.partialorder %v3235, %v3574
    %v3607 = vunpack.c.l.bf16 %v1148
    %v3608 = vunpack.c.h.bf16 %v1148
    %v3609 = vunpack.c.l.bf16 %v1149
    %v3610 = vunpack.c.h.bf16 %v1149
    %v3611 = vunpack.c.l.bf16 %v1150
    %v3612 = vunpack.c.h.bf16 %v1150
    %v3613 = vunpack.c.l.bf16 %v1151
    %v3614 = vunpack.c.h.bf16 %v1151
    %v3615 = vunpack.c.l.bf16 %v1152
    %v3616 = vunpack.c.h.bf16 %v1152
    %v3617 = vunpack.c.l.bf16 %v1153
    %v3618 = vunpack.c.h.bf16 %v1153
    %v3619 = vunpack.c.l.bf16 %v1154
    %v3620 = vunpack.c.h.bf16 %v1154
    %v3621 = vunpack.c.l.bf16 %v1155
    %v3622 = vunpack.c.h.bf16 %v1155
    %v3623 = vunpack.c.l.bf16 %v1156
    %v3624 = vunpack.c.h.bf16 %v1156
    %v3625 = vunpack.c.l.bf16 %v1157
    %v3626 = vunpack.c.h.bf16 %v1157
    %v3627 = vunpack.c.l.bf16 %v1158
    %v3628 = vunpack.c.h.bf16 %v1158
    %v3629 = vunpack.c.l.bf16 %v1159
    %v3630 = vunpack.c.h.bf16 %v1159
    %v3631 = vunpack.c.l.bf16 %v1160
    %v3632 = vunpack.c.h.bf16 %v1160
    %v3633 = vunpack.c.l.bf16 %v1161
    %v3634 = vunpack.c.h.bf16 %v1161
    %v3635 = vunpack.c.l.bf16 %v1162
    %v3636 = vunpack.c.h.bf16 %v1162
    %v3637 = vunpack.c.l.bf16 %v1163
    %v3638 = vunpack.c.h.bf16 %v1163
    %v3639 = vsel %vm3575, %v3607, %v3511
    %v3640 = vsel %vm3576, %v3608, %v3512
    %v3641 = vsel %vm3577, %v3609, %v3513
    %v3642 = vsel %vm3578, %v3610, %v3514
    %v3643 = vsel %vm3579, %v3611, %v3515
    %v3644 = vsel %vm3580, %v3612, %v3516
    %v3645 = vsel %vm3581, %v3613, %v3517
    %v3646 = vsel %vm3582, %v3614, %v3518
    %v3647 = vsel %vm3583, %v3615, %v3519
    %v3648 = vsel %vm3584, %v3616, %v3520
    %v3649 = vsel %vm3585, %v3617, %v3521
    %v3650 = vsel %vm3586, %v3618, %v3522
    %v3651 = vsel %vm3587, %v3619, %v3523
    %v3652 = vsel %vm3588, %v3620, %v3524
    %v3653 = vsel %vm3589, %v3621, %v3525
    %v3654 = vsel %vm3590, %v3622, %v3526
    %v3655 = vsel %vm3591, %v3623, %v3527
    %v3656 = vsel %vm3592, %v3624, %v3528
    %v3657 = vsel %vm3593, %v3625, %v3529
    %v3658 = vsel %vm3594, %v3626, %v3530
    %v3659 = vsel %vm3595, %v3627, %v3531
    %v3660 = vsel %vm3596, %v3628, %v3532
    %v3661 = vsel %vm3597, %v3629, %v3533
    %v3662 = vsel %vm3598, %v3630, %v3534
    %v3663 = vsel %vm3599, %v3631, %v3535
    %v3664 = vsel %vm3600, %v3632, %v3536
    %v3665 = vsel %vm3601, %v3633, %v3537
    %v3666 = vsel %vm3602, %v3634, %v3538
    %v3667 = vsel %vm3603, %v3635, %v3539
    %v3668 = vsel %vm3604, %v3636, %v3540
    %v3669 = vsel %vm3605, %v3637, %v3541
    %v3670 = vsel %vm3606, %v3638, %v3542
    %v3671 = vsel %vm3575, %v3081, %v3543
    %v3672 = vsel %vm3576, %v3085, %v3544
    %v3673 = vsel %vm3577, %v3091, %v3545
    %v3674 = vsel %vm3578, %v3095, %v3546
    %v3675 = vsel %vm3579, %v3101, %v3547
    %v3676 = vsel %vm3580, %v3105, %v3548
    %v3677 = vsel %vm3581, %v3111, %v3549
    %v3678 = vsel %vm3582, %v3115, %v3550
    %v3679 = vsel %vm3583, %v3121, %v3551
    %v3680 = vsel %vm3584, %v3125, %v3552
    %v3681 = vsel %vm3585, %v3131, %v3553
    %v3682 = vsel %vm3586, %v3135, %v3554
    %v3683 = vsel %vm3587, %v3141, %v3555
    %v3684 = vsel %vm3588, %v3145, %v3556
    %v3685 = vsel %vm3589, %v3151, %v3557
    %v3686 = vsel %vm3590, %v3155, %v3558
    %v3687 = vsel %vm3591, %v3161, %v3559
    %v3688 = vsel %vm3592, %v3165, %v3560
    %v3689 = vsel %vm3593, %v3171, %v3561
    %v3690 = vsel %vm3594, %v3175, %v3562
    %v3691 = vsel %vm3595, %v3181, %v3563
    %v3692 = vsel %vm3596, %v3185, %v3564
    %v3693 = vsel %vm3597, %v3191, %v3565
    %v3694 = vsel %vm3598, %v3195, %v3566
    %v3695 = vsel %vm3599, %v3201, %v3567
    %v3696 = vsel %vm3600, %v3205, %v3568
    %v3697 = vsel %vm3601, %v3211, %v3569
    %v3698 = vsel %vm3602, %v3215, %v3570
    %v3699 = vsel %vm3603, %v3221, %v3571
    %v3700 = vsel %vm3604, %v3225, %v3572
    %v3701 = vsel %vm3605, %v3231, %v3573
    %v3702 = vsel %vm3606, %v3235, %v3574
    %vm3703 = vcmp.ne.f32.partialorder %v3671, 0.0
    %vm3704 = vcmp.ne.f32.partialorder %v3672, 0.0
    %vm3705 = vcmp.ne.f32.partialorder %v3673, 0.0
    %vm3706 = vcmp.ne.f32.partialorder %v3674, 0.0
    %vm3707 = vcmp.ne.f32.partialorder %v3675, 0.0
    %vm3708 = vcmp.ne.f32.partialorder %v3676, 0.0
    %vm3709 = vcmp.ne.f32.partialorder %v3677, 0.0
    %vm3710 = vcmp.ne.f32.partialorder %v3678, 0.0
    %vm3711 = vcmp.ne.f32.partialorder %v3679, 0.0
    %vm3712 = vcmp.ne.f32.partialorder %v3680, 0.0
    %vm3713 = vcmp.ne.f32.partialorder %v3681, 0.0
    %vm3714 = vcmp.ne.f32.partialorder %v3682, 0.0
    %vm3715 = vcmp.ne.f32.partialorder %v3683, 0.0
    %vm3716 = vcmp.ne.f32.partialorder %v3684, 0.0
    %vm3717 = vcmp.ne.f32.partialorder %v3685, 0.0
    %vm3718 = vcmp.ne.f32.partialorder %v3686, 0.0
    %vm3719 = vcmp.ne.f32.partialorder %v3687, 0.0
    %vm3720 = vcmp.ne.f32.partialorder %v3688, 0.0
    %vm3721 = vcmp.ne.f32.partialorder %v3689, 0.0
    %vm3722 = vcmp.ne.f32.partialorder %v3690, 0.0
    %vm3723 = vcmp.ne.f32.partialorder %v3691, 0.0
    %vm3724 = vcmp.ne.f32.partialorder %v3692, 0.0
    %vm3725 = vcmp.ne.f32.partialorder %v3693, 0.0
    %vm3726 = vcmp.ne.f32.partialorder %v3694, 0.0
    %vm3727 = vcmp.ne.f32.partialorder %v3695, 0.0
    %vm3728 = vcmp.ne.f32.partialorder %v3696, 0.0
    %vm3729 = vcmp.ne.f32.partialorder %v3697, 0.0
    %vm3730 = vcmp.ne.f32.partialorder %v3698, 0.0
    %vm3731 = vcmp.ne.f32.partialorder %v3699, 0.0
    %vm3732 = vcmp.ne.f32.partialorder %v3700, 0.0
    %vm3733 = vcmp.ne.f32.partialorder %v3701, 0.0
    %vm3734 = vcmp.ne.f32.partialorder %v3702, 0.0
    %v3735 = vlaneseq
    %v3736 = vand.u32 %v3735, 127
    %vm3737 = vcmp.eq.s32.totalorder %v3736, 0
    %vm3738 = vmand %vm3737, %vm3703
    %vm3739 = vmand %vm3737, %vm3704
    %vm3740 = vmand %vm3737, %vm3705
    %vm3741 = vmand %vm3737, %vm3706
    %vm3742 = vmand %vm3737, %vm3707
    %vm3743 = vmand %vm3737, %vm3708
    %vm3744 = vmand %vm3737, %vm3709
    %vm3745 = vmand %vm3737, %vm3710
    %vm3746 = vmand %vm3737, %vm3711
    %vm3747 = vmand %vm3737, %vm3712
    %vm3748 = vmand %vm3737, %vm3713
    %vm3749 = vmand %vm3737, %vm3714
    %vm3750 = vmand %vm3737, %vm3715
    %vm3751 = vmand %vm3737, %vm3716
    %vm3752 = vmand %vm3737, %vm3717
    %vm3753 = vmand %vm3737, %vm3718
    %vm3754 = vmand %vm3737, %vm3719
    %vm3755 = vmand %vm3737, %vm3720
    %vm3756 = vmand %vm3737, %vm3721
    %vm3757 = vmand %vm3737, %vm3722
    %vm3758 = vmand %vm3737, %vm3723
    %vm3759 = vmand %vm3737, %vm3724
    %vm3760 = vmand %vm3737, %vm3725
    %vm3761 = vmand %vm3737, %vm3726
    %vm3762 = vmand %vm3737, %vm3727
    %vm3763 = vmand %vm3737, %vm3728
    %vm3764 = vmand %vm3737, %vm3729
    %vm3765 = vmand %vm3737, %vm3730
    %vm3766 = vmand %vm3737, %vm3731
    %vm3767 = vmand %vm3737, %vm3732
    %vm3768 = vmand %vm3737, %vm3733
    %vm3769 = vmand %vm3737, %vm3734
    %v3770 = vsel %vm3738, 1.0, 0.0
    %v3771 = vsel %vm3739, 1.0, 0.0
    %v3772 = vsel %vm3740, 1.0, 0.0
    %v3773 = vsel %vm3741, 1.0, 0.0
    %v3774 = vsel %vm3742, 1.0, 0.0
    %v3775 = vsel %vm3743, 1.0, 0.0
    %v3776 = vsel %vm3744, 1.0, 0.0
    %v3777 = vsel %vm3745, 1.0, 0.0
    %v3778 = vsel %vm3746, 1.0, 0.0
    %v3779 = vsel %vm3747, 1.0, 0.0
    %v3780 = vsel %vm3748, 1.0, 0.0
    %v3781 = vsel %vm3749, 1.0, 0.0
    %v3782 = vsel %vm3750, 1.0, 0.0
    %v3783 = vsel %vm3751, 1.0, 0.0
    %v3784 = vsel %vm3752, 1.0, 0.0
    %v3785 = vsel %vm3753, 1.0, 0.0
    %v3786 = vsel %vm3754, 1.0, 0.0
    %v3787 = vsel %vm3755, 1.0, 0.0
    %v3788 = vsel %vm3756, 1.0, 0.0
    %v3789 = vsel %vm3757, 1.0, 0.0
    %v3790 = vsel %vm3758, 1.0, 0.0
    %v3791 = vsel %vm3759, 1.0, 0.0
    %v3792 = vsel %vm3760, 1.0, 0.0
    %v3793 = vsel %vm3761, 1.0, 0.0
    %v3794 = vsel %vm3762, 1.0, 0.0
    %v3795 = vsel %vm3763, 1.0, 0.0
    %v3796 = vsel %vm3764, 1.0, 0.0
    %v3797 = vsel %vm3765, 1.0, 0.0
    %v3798 = vsel %vm3766, 1.0, 0.0
    %v3799 = vsel %vm3767, 1.0, 0.0
    %v3800 = vsel %vm3768, 1.0, 0.0
    %v3801 = vsel %vm3769, 1.0, 0.0
    %vm3802 = vcmp.eq.f32.partialorder %v2601, %v3671
    %vm3803 = vcmp.eq.f32.partialorder %v2605, %v3672
    %vm3804 = vcmp.eq.f32.partialorder %v2611, %v3673
    %vm3805 = vcmp.eq.f32.partialorder %v2615, %v3674
    %vm3806 = vcmp.eq.f32.partialorder %v2621, %v3675
    %vm3807 = vcmp.eq.f32.partialorder %v2625, %v3676
    %vm3808 = vcmp.eq.f32.partialorder %v2631, %v3677
    %vm3809 = vcmp.eq.f32.partialorder %v2635, %v3678
    %vm3810 = vcmp.eq.f32.partialorder %v2641, %v3679
    %vm3811 = vcmp.eq.f32.partialorder %v2645, %v3680
    %vm3812 = vcmp.eq.f32.partialorder %v2651, %v3681
    %vm3813 = vcmp.eq.f32.partialorder %v2655, %v3682
    %vm3814 = vcmp.eq.f32.partialorder %v2661, %v3683
    %vm3815 = vcmp.eq.f32.partialorder %v2665, %v3684
    %vm3816 = vcmp.eq.f32.partialorder %v2671, %v3685
    %vm3817 = vcmp.eq.f32.partialorder %v2675, %v3686
    %vm3818 = vcmp.eq.f32.partialorder %v2681, %v3687
    %vm3819 = vcmp.eq.f32.partialorder %v2685, %v3688
    %vm3820 = vcmp.eq.f32.partialorder %v2691, %v3689
    %vm3821 = vcmp.eq.f32.partialorder %v2695, %v3690
    %vm3822 = vcmp.eq.f32.partialorder %v2701, %v3691
    %vm3823 = vcmp.eq.f32.partialorder %v2705, %v3692
    %vm3824 = vcmp.eq.f32.partialorder %v2711, %v3693
    %vm3825 = vcmp.eq.f32.partialorder %v2715, %v3694
    %vm3826 = vcmp.eq.f32.partialorder %v2721, %v3695
    %vm3827 = vcmp.eq.f32.partialorder %v2725, %v3696
    %vm3828 = vcmp.eq.f32.partialorder %v2731, %v3697
    %vm3829 = vcmp.eq.f32.partialorder %v2735, %v3698
    %vm3830 = vcmp.eq.f32.partialorder %v2741, %v3699
    %vm3831 = vcmp.eq.f32.partialorder %v2745, %v3700
    %vm3832 = vcmp.eq.f32.partialorder %v2751, %v3701
    %vm3833 = vcmp.eq.f32.partialorder %v2755, %v3702
    %vm3834 = vcmp.eq.s32.totalorder %v3736, 1
    %vm3835 = vmand %vm3834, %vm3802
    %vm3836 = vmand %vm3834, %vm3803
    %vm3837 = vmand %vm3834, %vm3804
    %vm3838 = vmand %vm3834, %vm3805
    %vm3839 = vmand %vm3834, %vm3806
    %vm3840 = vmand %vm3834, %vm3807
    %vm3841 = vmand %vm3834, %vm3808
    %vm3842 = vmand %vm3834, %vm3809
    %vm3843 = vmand %vm3834, %vm3810
    %vm3844 = vmand %vm3834, %vm3811
    %vm3845 = vmand %vm3834, %vm3812
    %vm3846 = vmand %vm3834, %vm3813
    %vm3847 = vmand %vm3834, %vm3814
    %vm3848 = vmand %vm3834, %vm3815
    %vm3849 = vmand %vm3834, %vm3816
    %vm3850 = vmand %vm3834, %vm3817
    %vm3851 = vmand %vm3834, %vm3818
    %vm3852 = vmand %vm3834, %vm3819
    %vm3853 = vmand %vm3834, %vm3820
    %vm3854 = vmand %vm3834, %vm3821
    %vm3855 = vmand %vm3834, %vm3822
    %vm3856 = vmand %vm3834, %vm3823
    %vm3857 = vmand %vm3834, %vm3824
    %vm3858 = vmand %vm3834, %vm3825
    %vm3859 = vmand %vm3834, %vm3826
    %vm3860 = vmand %vm3834, %vm3827
    %vm3861 = vmand %vm3834, %vm3828
    %vm3862 = vmand %vm3834, %vm3829
    %vm3863 = vmand %vm3834, %vm3830
    %vm3864 = vmand %vm3834, %vm3831
    %vm3865 = vmand %vm3834, %vm3832
    %vm3866 = vmand %vm3834, %vm3833
    %vm3867 = vmand %vm3835, %vm3703
    %vm3868 = vmand %vm3836, %vm3704
    %vm3869 = vmand %vm3837, %vm3705
    %vm3870 = vmand %vm3838, %vm3706
    %vm3871 = vmand %vm3839, %vm3707
    %vm3872 = vmand %vm3840, %vm3708
    %vm3873 = vmand %vm3841, %vm3709
    %vm3874 = vmand %vm3842, %vm3710
    %vm3875 = vmand %vm3843, %vm3711
    %vm3876 = vmand %vm3844, %vm3712
    %vm3877 = vmand %vm3845, %vm3713
    %vm3878 = vmand %vm3846, %vm3714
    %vm3879 = vmand %vm3847, %vm3715
    %vm3880 = vmand %vm3848, %vm3716
    %vm3881 = vmand %vm3849, %vm3717
    %vm3882 = vmand %vm3850, %vm3718
    %vm3883 = vmand %vm3851, %vm3719
    %vm3884 = vmand %vm3852, %vm3720
    %vm3885 = vmand %vm3853, %vm3721
    %vm3886 = vmand %vm3854, %vm3722
    %vm3887 = vmand %vm3855, %vm3723
    %vm3888 = vmand %vm3856, %vm3724
    %vm3889 = vmand %vm3857, %vm3725
    %vm3890 = vmand %vm3858, %vm3726
    %vm3891 = vmand %vm3859, %vm3727
    %vm3892 = vmand %vm3860, %vm3728
    %vm3893 = vmand %vm3861, %vm3729
    %vm3894 = vmand %vm3862, %vm3730
    %vm3895 = vmand %vm3863, %vm3731
    %vm3896 = vmand %vm3864, %vm3732
    %vm3897 = vmand %vm3865, %vm3733
    %vm3898 = vmand %vm3866, %vm3734
    %v3899 = vsel %vm3867, 1.0, %v3770
    %v3900 = vsel %vm3868, 1.0, %v3771
    %v3901 = vsel %vm3869, 1.0, %v3772
    %v3902 = vsel %vm3870, 1.0, %v3773
    %v3903 = vsel %vm3871, 1.0, %v3774
    %v3904 = vsel %vm3872, 1.0, %v3775
    %v3905 = vsel %vm3873, 1.0, %v3776
    %v3906 = vsel %vm3874, 1.0, %v3777
    %v3907 = vsel %vm3875, 1.0, %v3778
    %v3908 = vsel %vm3876, 1.0, %v3779
    %v3909 = vsel %vm3877, 1.0, %v3780
    %v3910 = vsel %vm3878, 1.0, %v3781
    %v3911 = vsel %vm3879, 1.0, %v3782
    %v3912 = vsel %vm3880, 1.0, %v3783
    %v3913 = vsel %vm3881, 1.0, %v3784
    %v3914 = vsel %vm3882, 1.0, %v3785
    %v3915 = vsel %vm3883, 1.0, %v3786
    %v3916 = vsel %vm3884, 1.0, %v3787
    %v3917 = vsel %vm3885, 1.0, %v3788
    %v3918 = vsel %vm3886, 1.0, %v3789
    %v3919 = vsel %vm3887, 1.0, %v3790
    %v3920 = vsel %vm3888, 1.0, %v3791
    %v3921 = vsel %vm3889, 1.0, %v3792
    %v3922 = vsel %vm3890, 1.0, %v3793
    %v3923 = vsel %vm3891, 1.0, %v3794
    %v3924 = vsel %vm3892, 1.0, %v3795
    %v3925 = vsel %vm3893, 1.0, %v3796
    %v3926 = vsel %vm3894, 1.0, %v3797
    %v3927 = vsel %vm3895, 1.0, %v3798
    %v3928 = vsel %vm3896, 1.0, %v3799
    %v3929 = vsel %vm3897, 1.0, %v3800
    %v3930 = vsel %vm3898, 1.0, %v3801
    %v3931 = vsel %vm3802, %v2603, 100.0
    %v3932 = vsel %vm3803, %v2607, 100.0
    %v3933 = vsel %vm3804, %v2613, 100.0
    %v3934 = vsel %vm3805, %v2617, 100.0
    %v3935 = vsel %vm3806, %v2623, 100.0
    %v3936 = vsel %vm3807, %v2627, 100.0
    %v3937 = vsel %vm3808, %v2633, 100.0
    %v3938 = vsel %vm3809, %v2637, 100.0
    %v3939 = vsel %vm3810, %v2643, 100.0
    %v3940 = vsel %vm3811, %v2647, 100.0
    %v3941 = vsel %vm3812, %v2653, 100.0
    %v3942 = vsel %vm3813, %v2657, 100.0
    %v3943 = vsel %vm3814, %v2663, 100.0
    %v3944 = vsel %vm3815, %v2667, 100.0
    %v3945 = vsel %vm3816, %v2673, 100.0
    %v3946 = vsel %vm3817, %v2677, 100.0
    %v3947 = vsel %vm3818, %v2683, 100.0
    %v3948 = vsel %vm3819, %v2687, 100.0
    %v3949 = vsel %vm3820, %v2693, 100.0
    %v3950 = vsel %vm3821, %v2697, 100.0
    %v3951 = vsel %vm3822, %v2703, 100.0
    %v3952 = vsel %vm3823, %v2707, 100.0
    %v3953 = vsel %vm3824, %v2713, 100.0
    %v3954 = vsel %vm3825, %v2717, 100.0
    %v3955 = vsel %vm3826, %v2723, 100.0
    %v3956 = vsel %vm3827, %v2727, 100.0
    %v3957 = vsel %vm3828, %v2733, 100.0
    %v3958 = vsel %vm3829, %v2737, 100.0
    %v3959 = vsel %vm3830, %v2743, 100.0
    %v3960 = vsel %vm3831, %v2747, 100.0
    %v3961 = vsel %vm3832, %v2753, 100.0
    %v3962 = vsel %vm3833, %v2757, 100.0
    %vm3963 = vcmp.eq.f32.partialorder %v2761, %v3671
    %vm3964 = vcmp.eq.f32.partialorder %v2765, %v3672
    %vm3965 = vcmp.eq.f32.partialorder %v2771, %v3673
    %vm3966 = vcmp.eq.f32.partialorder %v2775, %v3674
    %vm3967 = vcmp.eq.f32.partialorder %v2781, %v3675
    %vm3968 = vcmp.eq.f32.partialorder %v2785, %v3676
    %vm3969 = vcmp.eq.f32.partialorder %v2791, %v3677
    %vm3970 = vcmp.eq.f32.partialorder %v2795, %v3678
    %vm3971 = vcmp.eq.f32.partialorder %v2801, %v3679
    %vm3972 = vcmp.eq.f32.partialorder %v2805, %v3680
    %vm3973 = vcmp.eq.f32.partialorder %v2811, %v3681
    %vm3974 = vcmp.eq.f32.partialorder %v2815, %v3682
    %vm3975 = vcmp.eq.f32.partialorder %v2821, %v3683
    %vm3976 = vcmp.eq.f32.partialorder %v2825, %v3684
    %vm3977 = vcmp.eq.f32.partialorder %v2831, %v3685
    %vm3978 = vcmp.eq.f32.partialorder %v2835, %v3686
    %vm3979 = vcmp.eq.f32.partialorder %v2841, %v3687
    %vm3980 = vcmp.eq.f32.partialorder %v2845, %v3688
    %vm3981 = vcmp.eq.f32.partialorder %v2851, %v3689
    %vm3982 = vcmp.eq.f32.partialorder %v2855, %v3690
    %vm3983 = vcmp.eq.f32.partialorder %v2861, %v3691
    %vm3984 = vcmp.eq.f32.partialorder %v2865, %v3692
    %vm3985 = vcmp.eq.f32.partialorder %v2871, %v3693
    %vm3986 = vcmp.eq.f32.partialorder %v2875, %v3694
    %vm3987 = vcmp.eq.f32.partialorder %v2881, %v3695
    %vm3988 = vcmp.eq.f32.partialorder %v2885, %v3696
    %vm3989 = vcmp.eq.f32.partialorder %v2891, %v3697
    %vm3990 = vcmp.eq.f32.partialorder %v2895, %v3698
    %vm3991 = vcmp.eq.f32.partialorder %v2901, %v3699
    %vm3992 = vcmp.eq.f32.partialorder %v2905, %v3700
    %vm3993 = vcmp.eq.f32.partialorder %v2911, %v3701
    %vm3994 = vcmp.eq.f32.partialorder %v2915, %v3702
    %vm3995 = vcmp.eq.s32.totalorder %v3736, 2
    %vm3996 = vmand %vm3995, %vm3963
    %vm3997 = vmand %vm3995, %vm3964
    %vm3998 = vmand %vm3995, %vm3965
    %vm3999 = vmand %vm3995, %vm3966
    %vm4000 = vmand %vm3995, %vm3967
    %vm4001 = vmand %vm3995, %vm3968
    %vm4002 = vmand %vm3995, %vm3969
    %vm4003 = vmand %vm3995, %vm3970
    %vm4004 = vmand %vm3995, %vm3971
    %vm4005 = vmand %vm3995, %vm3972
    %vm4006 = vmand %vm3995, %vm3973
    %vm4007 = vmand %vm3995, %vm3974
    %vm4008 = vmand %vm3995, %vm3975
    %vm4009 = vmand %vm3995, %vm3976
    %vm4010 = vmand %vm3995, %vm3977
    %vm4011 = vmand %vm3995, %vm3978
    %vm4012 = vmand %vm3995, %vm3979
    %vm4013 = vmand %vm3995, %vm3980
    %vm4014 = vmand %vm3995, %vm3981
    %vm4015 = vmand %vm3995, %vm3982
    %vm4016 = vmand %vm3995, %vm3983
    %vm4017 = vmand %vm3995, %vm3984
    %vm4018 = vmand %vm3995, %vm3985
    %vm4019 = vmand %vm3995, %vm3986
    %vm4020 = vmand %vm3995, %vm3987
    %vm4021 = vmand %vm3995, %vm3988
    %vm4022 = vmand %vm3995, %vm3989
    %vm4023 = vmand %vm3995, %vm3990
    %vm4024 = vmand %vm3995, %vm3991
    %vm4025 = vmand %vm3995, %vm3992
    %vm4026 = vmand %vm3995, %vm3993
    %vm4027 = vmand %vm3995, %vm3994
    %vm4028 = vmand %vm3996, %vm3703
    %vm4029 = vmand %vm3997, %vm3704
    %vm4030 = vmand %vm3998, %vm3705
    %vm4031 = vmand %vm3999, %vm3706
    %vm4032 = vmand %vm4000, %vm3707
    %vm4033 = vmand %vm4001, %vm3708
    %vm4034 = vmand %vm4002, %vm3709
    %vm4035 = vmand %vm4003, %vm3710
    %vm4036 = vmand %vm4004, %vm3711
    %vm4037 = vmand %vm4005, %vm3712
    %vm4038 = vmand %vm4006, %vm3713
    %vm4039 = vmand %vm4007, %vm3714
    %vm4040 = vmand %vm4008, %vm3715
    %vm4041 = vmand %vm4009, %vm3716
    %vm4042 = vmand %vm4010, %vm3717
    %vm4043 = vmand %vm4011, %vm3718
    %vm4044 = vmand %vm4012, %vm3719
    %vm4045 = vmand %vm4013, %vm3720
    %vm4046 = vmand %vm4014, %vm3721
    %vm4047 = vmand %vm4015, %vm3722
    %vm4048 = vmand %vm4016, %vm3723
    %vm4049 = vmand %vm4017, %vm3724
    %vm4050 = vmand %vm4018, %vm3725
    %vm4051 = vmand %vm4019, %vm3726
    %vm4052 = vmand %vm4020, %vm3727
    %vm4053 = vmand %vm4021, %vm3728
    %vm4054 = vmand %vm4022, %vm3729
    %vm4055 = vmand %vm4023, %vm3730
    %vm4056 = vmand %vm4024, %vm3731
    %vm4057 = vmand %vm4025, %vm3732
    %vm4058 = vmand %vm4026, %vm3733
    %vm4059 = vmand %vm4027, %vm3734
    %v4060 = vsel %vm4028, 1.0, %v3899
    %v4061 = vsel %vm4029, 1.0, %v3900
    %v4062 = vsel %vm4030, 1.0, %v3901
    %v4063 = vsel %vm4031, 1.0, %v3902
    %v4064 = vsel %vm4032, 1.0, %v3903
    %v4065 = vsel %vm4033, 1.0, %v3904
    %v4066 = vsel %vm4034, 1.0, %v3905
    %v4067 = vsel %vm4035, 1.0, %v3906
    %v4068 = vsel %vm4036, 1.0, %v3907
    %v4069 = vsel %vm4037, 1.0, %v3908
    %v4070 = vsel %vm4038, 1.0, %v3909
    %v4071 = vsel %vm4039, 1.0, %v3910
    %v4072 = vsel %vm4040, 1.0, %v3911
    %v4073 = vsel %vm4041, 1.0, %v3912
    %v4074 = vsel %vm4042, 1.0, %v3913
    %v4075 = vsel %vm4043, 1.0, %v3914
    %v4076 = vsel %vm4044, 1.0, %v3915
    %v4077 = vsel %vm4045, 1.0, %v3916
    %v4078 = vsel %vm4046, 1.0, %v3917
    %v4079 = vsel %vm4047, 1.0, %v3918
    %v4080 = vsel %vm4048, 1.0, %v3919
    %v4081 = vsel %vm4049, 1.0, %v3920
    %v4082 = vsel %vm4050, 1.0, %v3921
    %v4083 = vsel %vm4051, 1.0, %v3922
    %v4084 = vsel %vm4052, 1.0, %v3923
    %v4085 = vsel %vm4053, 1.0, %v3924
    %v4086 = vsel %vm4054, 1.0, %v3925
    %v4087 = vsel %vm4055, 1.0, %v3926
    %v4088 = vsel %vm4056, 1.0, %v3927
    %v4089 = vsel %vm4057, 1.0, %v3928
    %v4090 = vsel %vm4058, 1.0, %v3929
    %v4091 = vsel %vm4059, 1.0, %v3930
    %v4092 = vsel %vm3963, %v2763, 100.0
    %v4093 = vsel %vm3964, %v2767, 100.0
    %v4094 = vsel %vm3965, %v2773, 100.0
    %v4095 = vsel %vm3966, %v2777, 100.0
    %v4096 = vsel %vm3967, %v2783, 100.0
    %v4097 = vsel %vm3968, %v2787, 100.0
    %v4098 = vsel %vm3969, %v2793, 100.0
    %v4099 = vsel %vm3970, %v2797, 100.0
    %v4100 = vsel %vm3971, %v2803, 100.0
    %v4101 = vsel %vm3972, %v2807, 100.0
    %v4102 = vsel %vm3973, %v2813, 100.0
    %v4103 = vsel %vm3974, %v2817, 100.0
    %v4104 = vsel %vm3975, %v2823, 100.0
    %v4105 = vsel %vm3976, %v2827, 100.0
    %v4106 = vsel %vm3977, %v2833, 100.0
    %v4107 = vsel %vm3978, %v2837, 100.0
    %v4108 = vsel %vm3979, %v2843, 100.0
    %v4109 = vsel %vm3980, %v2847, 100.0
    %v4110 = vsel %vm3981, %v2853, 100.0
    %v4111 = vsel %vm3982, %v2857, 100.0
    %v4112 = vsel %vm3983, %v2863, 100.0
    %v4113 = vsel %vm3984, %v2867, 100.0
    %v4114 = vsel %vm3985, %v2873, 100.0
    %v4115 = vsel %vm3986, %v2877, 100.0
    %v4116 = vsel %vm3987, %v2883, 100.0
    %v4117 = vsel %vm3988, %v2887, 100.0
    %v4118 = vsel %vm3989, %v2893, 100.0
    %v4119 = vsel %vm3990, %v2897, 100.0
    %v4120 = vsel %vm3991, %v2903, 100.0
    %v4121 = vsel %vm3992, %v2907, 100.0
    %v4122 = vsel %vm3993, %v2913, 100.0
    %v4123 = vsel %vm3994, %v2917, 100.0
    %vm4124 = vcmp.lt.f32.partialorder %v4092, %v3931
    %vm4125 = vcmp.lt.f32.partialorder %v4093, %v3932
    %vm4126 = vcmp.lt.f32.partialorder %v4094, %v3933
    %vm4127 = vcmp.lt.f32.partialorder %v4095, %v3934
    %vm4128 = vcmp.lt.f32.partialorder %v4096, %v3935
    %vm4129 = vcmp.lt.f32.partialorder %v4097, %v3936
    %vm4130 = vcmp.lt.f32.partialorder %v4098, %v3937
    %vm4131 = vcmp.lt.f32.partialorder %v4099, %v3938
    %vm4132 = vcmp.lt.f32.partialorder %v4100, %v3939
    %vm4133 = vcmp.lt.f32.partialorder %v4101, %v3940
    %vm4134 = vcmp.lt.f32.partialorder %v4102, %v3941
    %vm4135 = vcmp.lt.f32.partialorder %v4103, %v3942
    %vm4136 = vcmp.lt.f32.partialorder %v4104, %v3943
    %vm4137 = vcmp.lt.f32.partialorder %v4105, %v3944
    %vm4138 = vcmp.lt.f32.partialorder %v4106, %v3945
    %vm4139 = vcmp.lt.f32.partialorder %v4107, %v3946
    %vm4140 = vcmp.lt.f32.partialorder %v4108, %v3947
    %vm4141 = vcmp.lt.f32.partialorder %v4109, %v3948
    %vm4142 = vcmp.lt.f32.partialorder %v4110, %v3949
    %vm4143 = vcmp.lt.f32.partialorder %v4111, %v3950
    %vm4144 = vcmp.lt.f32.partialorder %v4112, %v3951
    %vm4145 = vcmp.lt.f32.partialorder %v4113, %v3952
    %vm4146 = vcmp.lt.f32.partialorder %v4114, %v3953
    %vm4147 = vcmp.lt.f32.partialorder %v4115, %v3954
    %vm4148 = vcmp.lt.f32.partialorder %v4116, %v3955
    %vm4149 = vcmp.lt.f32.partialorder %v4117, %v3956
    %vm4150 = vcmp.lt.f32.partialorder %v4118, %v3957
    %vm4151 = vcmp.lt.f32.partialorder %v4119, %v3958
    %vm4152 = vcmp.lt.f32.partialorder %v4120, %v3959
    %vm4153 = vcmp.lt.f32.partialorder %v4121, %v3960
    %vm4154 = vcmp.lt.f32.partialorder %v4122, %v3961
    %vm4155 = vcmp.lt.f32.partialorder %v4123, %v3962
    %v4156 = vsel %vm4124, %v3335, %v3255
    %v4157 = vsel %vm4125, %v3336, %v3256
    %v4158 = vsel %vm4126, %v3337, %v3257
    %v4159 = vsel %vm4127, %v3338, %v3258
    %v4160 = vsel %vm4128, %v3339, %v3259
    %v4161 = vsel %vm4129, %v3340, %v3260
    %v4162 = vsel %vm4130, %v3341, %v3261
    %v4163 = vsel %vm4131, %v3342, %v3262
    %v4164 = vsel %vm4132, %v3343, %v3263
    %v4165 = vsel %vm4133, %v3344, %v3264
    %v4166 = vsel %vm4134, %v3345, %v3265
    %v4167 = vsel %vm4135, %v3346, %v3266
    %v4168 = vsel %vm4136, %v3347, %v3267
    %v4169 = vsel %vm4137, %v3348, %v3268
    %v4170 = vsel %vm4138, %v3349, %v3269
    %v4171 = vsel %vm4139, %v3350, %v3270
    %v4172 = vsel %vm4140, %v3351, %v3271
    %v4173 = vsel %vm4141, %v3352, %v3272
    %v4174 = vsel %vm4142, %v3353, %v3273
    %v4175 = vsel %vm4143, %v3354, %v3274
    %v4176 = vsel %vm4144, %v3355, %v3275
    %v4177 = vsel %vm4145, %v3356, %v3276
    %v4178 = vsel %vm4146, %v3357, %v3277
    %v4179 = vsel %vm4147, %v3358, %v3278
    %v4180 = vsel %vm4148, %v3359, %v3279
    %v4181 = vsel %vm4149, %v3360, %v3280
    %v4182 = vsel %vm4150, %v3361, %v3281
    %v4183 = vsel %vm4151, %v3362, %v3282
    %v4184 = vsel %vm4152, %v3363, %v3283
    %v4185 = vsel %vm4153, %v3364, %v3284
    %v4186 = vsel %vm4154, %v3365, %v3285
    %v4187 = vsel %vm4155, %v3366, %v3286
    %v4188 = vsel %vm4124, %v4092, %v3931
    %v4189 = vsel %vm4125, %v4093, %v3932
    %v4190 = vsel %vm4126, %v4094, %v3933
    %v4191 = vsel %vm4127, %v4095, %v3934
    %v4192 = vsel %vm4128, %v4096, %v3935
    %v4193 = vsel %vm4129, %v4097, %v3936
    %v4194 = vsel %vm4130, %v4098, %v3937
    %v4195 = vsel %vm4131, %v4099, %v3938
    %v4196 = vsel %vm4132, %v4100, %v3939
    %v4197 = vsel %vm4133, %v4101, %v3940
    %v4198 = vsel %vm4134, %v4102, %v3941
    %v4199 = vsel %vm4135, %v4103, %v3942
    %v4200 = vsel %vm4136, %v4104, %v3943
    %v4201 = vsel %vm4137, %v4105, %v3944
    %v4202 = vsel %vm4138, %v4106, %v3945
    %v4203 = vsel %vm4139, %v4107, %v3946
    %v4204 = vsel %vm4140, %v4108, %v3947
    %v4205 = vsel %vm4141, %v4109, %v3948
    %v4206 = vsel %vm4142, %v4110, %v3949
    %v4207 = vsel %vm4143, %v4111, %v3950
    %v4208 = vsel %vm4144, %v4112, %v3951
    %v4209 = vsel %vm4145, %v4113, %v3952
    %v4210 = vsel %vm4146, %v4114, %v3953
    %v4211 = vsel %vm4147, %v4115, %v3954
    %v4212 = vsel %vm4148, %v4116, %v3955
    %v4213 = vsel %vm4149, %v4117, %v3956
    %v4214 = vsel %vm4150, %v4118, %v3957
    %v4215 = vsel %vm4151, %v4119, %v3958
    %v4216 = vsel %vm4152, %v4120, %v3959
    %v4217 = vsel %vm4153, %v4121, %v3960
    %v4218 = vsel %vm4154, %v4122, %v3961
    %v4219 = vsel %vm4155, %v4123, %v3962
    %vm4220 = vcmp.eq.f32.partialorder %v2921, %v3671
    %vm4221 = vcmp.eq.f32.partialorder %v2925, %v3672
    %vm4222 = vcmp.eq.f32.partialorder %v2931, %v3673
    %vm4223 = vcmp.eq.f32.partialorder %v2935, %v3674
    %vm4224 = vcmp.eq.f32.partialorder %v2941, %v3675
    %vm4225 = vcmp.eq.f32.partialorder %v2945, %v3676
    %vm4226 = vcmp.eq.f32.partialorder %v2951, %v3677
    %vm4227 = vcmp.eq.f32.partialorder %v2955, %v3678
    %vm4228 = vcmp.eq.f32.partialorder %v2961, %v3679
    %vm4229 = vcmp.eq.f32.partialorder %v2965, %v3680
    %vm4230 = vcmp.eq.f32.partialorder %v2971, %v3681
    %vm4231 = vcmp.eq.f32.partialorder %v2975, %v3682
    %vm4232 = vcmp.eq.f32.partialorder %v2981, %v3683
    %vm4233 = vcmp.eq.f32.partialorder %v2985, %v3684
    %vm4234 = vcmp.eq.f32.partialorder %v2991, %v3685
    %vm4235 = vcmp.eq.f32.partialorder %v2995, %v3686
    %vm4236 = vcmp.eq.f32.partialorder %v3001, %v3687
    %vm4237 = vcmp.eq.f32.partialorder %v3005, %v3688
    %vm4238 = vcmp.eq.f32.partialorder %v3011, %v3689
    %vm4239 = vcmp.eq.f32.partialorder %v3015, %v3690
    %vm4240 = vcmp.eq.f32.partialorder %v3021, %v3691
    %vm4241 = vcmp.eq.f32.partialorder %v3025, %v3692
    %vm4242 = vcmp.eq.f32.partialorder %v3031, %v3693
    %vm4243 = vcmp.eq.f32.partialorder %v3035, %v3694
    %vm4244 = vcmp.eq.f32.partialorder %v3041, %v3695
    %vm4245 = vcmp.eq.f32.partialorder %v3045, %v3696
    %vm4246 = vcmp.eq.f32.partialorder %v3051, %v3697
    %vm4247 = vcmp.eq.f32.partialorder %v3055, %v3698
    %vm4248 = vcmp.eq.f32.partialorder %v3061, %v3699
    %vm4249 = vcmp.eq.f32.partialorder %v3065, %v3700
    %vm4250 = vcmp.eq.f32.partialorder %v3071, %v3701
    %vm4251 = vcmp.eq.f32.partialorder %v3075, %v3702
    %vm4252 = vcmp.eq.s32.totalorder %v3736, 3
    %vm4253 = vmand %vm4252, %vm4220
    %vm4254 = vmand %vm4252, %vm4221
    %vm4255 = vmand %vm4252, %vm4222
    %vm4256 = vmand %vm4252, %vm4223
    %vm4257 = vmand %vm4252, %vm4224
    %vm4258 = vmand %vm4252, %vm4225
    %vm4259 = vmand %vm4252, %vm4226
    %vm4260 = vmand %vm4252, %vm4227
    %vm4261 = vmand %vm4252, %vm4228
    %vm4262 = vmand %vm4252, %vm4229
    %vm4263 = vmand %vm4252, %vm4230
    %vm4264 = vmand %vm4252, %vm4231
    %vm4265 = vmand %vm4252, %vm4232
    %vm4266 = vmand %vm4252, %vm4233
    %vm4267 = vmand %vm4252, %vm4234
    %vm4268 = vmand %vm4252, %vm4235
    %vm4269 = vmand %vm4252, %vm4236
    %vm4270 = vmand %vm4252, %vm4237
    %vm4271 = vmand %vm4252, %vm4238
    %vm4272 = vmand %vm4252, %vm4239
    %vm4273 = vmand %vm4252, %vm4240
    %vm4274 = vmand %vm4252, %vm4241
    %vm4275 = vmand %vm4252, %vm4242
    %vm4276 = vmand %vm4252, %vm4243
    %vm4277 = vmand %vm4252, %vm4244
    %vm4278 = vmand %vm4252, %vm4245
    %vm4279 = vmand %vm4252, %vm4246
    %vm4280 = vmand %vm4252, %vm4247
    %vm4281 = vmand %vm4252, %vm4248
    %vm4282 = vmand %vm4252, %vm4249
    %vm4283 = vmand %vm4252, %vm4250
    %vm4284 = vmand %vm4252, %vm4251
    %vm4285 = vmand %vm4253, %vm3703
    %vm4286 = vmand %vm4254, %vm3704
    %vm4287 = vmand %vm4255, %vm3705
    %vm4288 = vmand %vm4256, %vm3706
    %vm4289 = vmand %vm4257, %vm3707
    %vm4290 = vmand %vm4258, %vm3708
    %vm4291 = vmand %vm4259, %vm3709
    %vm4292 = vmand %vm4260, %vm3710
    %vm4293 = vmand %vm4261, %vm3711
    %vm4294 = vmand %vm4262, %vm3712
    %vm4295 = vmand %vm4263, %vm3713
    %vm4296 = vmand %vm4264, %vm3714
    %vm4297 = vmand %vm4265, %vm3715
    %vm4298 = vmand %vm4266, %vm3716
    %vm4299 = vmand %vm4267, %vm3717
    %vm4300 = vmand %vm4268, %vm3718
    %vm4301 = vmand %vm4269, %vm3719
    %vm4302 = vmand %vm4270, %vm3720
    %vm4303 = vmand %vm4271, %vm3721
    %vm4304 = vmand %vm4272, %vm3722
    %vm4305 = vmand %vm4273, %vm3723
    %vm4306 = vmand %vm4274, %vm3724
    %vm4307 = vmand %vm4275, %vm3725
    %vm4308 = vmand %vm4276, %vm3726
    %vm4309 = vmand %vm4277, %vm3727
    %vm4310 = vmand %vm4278, %vm3728
    %vm4311 = vmand %vm4279, %vm3729
    %vm4312 = vmand %vm4280, %vm3730
    %vm4313 = vmand %vm4281, %vm3731
    %vm4314 = vmand %vm4282, %vm3732
    %vm4315 = vmand %vm4283, %vm3733
    %vm4316 = vmand %vm4284, %vm3734
    %v4317 = vsel %vm4285, 1.0, %v4060
    %v4318 = vsel %vm4286, 1.0, %v4061
    %v4319 = vsel %vm4287, 1.0, %v4062
    %v4320 = vsel %vm4288, 1.0, %v4063
    %v4321 = vsel %vm4289, 1.0, %v4064
    %v4322 = vsel %vm4290, 1.0, %v4065
    %v4323 = vsel %vm4291, 1.0, %v4066
    %v4324 = vsel %vm4292, 1.0, %v4067
    %v4325 = vsel %vm4293, 1.0, %v4068
    %v4326 = vsel %vm4294, 1.0, %v4069
    %v4327 = vsel %vm4295, 1.0, %v4070
    %v4328 = vsel %vm4296, 1.0, %v4071
    %v4329 = vsel %vm4297, 1.0, %v4072
    %v4330 = vsel %vm4298, 1.0, %v4073
    %v4331 = vsel %vm4299, 1.0, %v4074
    %v4332 = vsel %vm4300, 1.0, %v4075
    %v4333 = vsel %vm4301, 1.0, %v4076
    %v4334 = vsel %vm4302, 1.0, %v4077
    %v4335 = vsel %vm4303, 1.0, %v4078
    %v4336 = vsel %vm4304, 1.0, %v4079
    %v4337 = vsel %vm4305, 1.0, %v4080
    %v4338 = vsel %vm4306, 1.0, %v4081
    %v4339 = vsel %vm4307, 1.0, %v4082
    %v4340 = vsel %vm4308, 1.0, %v4083
    %v4341 = vsel %vm4309, 1.0, %v4084
    %v4342 = vsel %vm4310, 1.0, %v4085
    %v4343 = vsel %vm4311, 1.0, %v4086
    %v4344 = vsel %vm4312, 1.0, %v4087
    %v4345 = vsel %vm4313, 1.0, %v4088
    %v4346 = vsel %vm4314, 1.0, %v4089
    %v4347 = vsel %vm4315, 1.0, %v4090
    %v4348 = vsel %vm4316, 1.0, %v4091
    %v4349 = vsel %vm4220, %v2923, 100.0
    %v4350 = vsel %vm4221, %v2927, 100.0
    %v4351 = vsel %vm4222, %v2933, 100.0
    %v4352 = vsel %vm4223, %v2937, 100.0
    %v4353 = vsel %vm4224, %v2943, 100.0
    %v4354 = vsel %vm4225, %v2947, 100.0
    %v4355 = vsel %vm4226, %v2953, 100.0
    %v4356 = vsel %vm4227, %v2957, 100.0
    %v4357 = vsel %vm4228, %v2963, 100.0
    %v4358 = vsel %vm4229, %v2967, 100.0
    %v4359 = vsel %vm4230, %v2973, 100.0
    %v4360 = vsel %vm4231, %v2977, 100.0
    %v4361 = vsel %vm4232, %v2983, 100.0
    %v4362 = vsel %vm4233, %v2987, 100.0
    %v4363 = vsel %vm4234, %v2993, 100.0
    %v4364 = vsel %vm4235, %v2997, 100.0
    %v4365 = vsel %vm4236, %v3003, 100.0
    %v4366 = vsel %vm4237, %v3007, 100.0
    %v4367 = vsel %vm4238, %v3013, 100.0
    %v4368 = vsel %vm4239, %v3017, 100.0
    %v4369 = vsel %vm4240, %v3023, 100.0
    %v4370 = vsel %vm4241, %v3027, 100.0
    %v4371 = vsel %vm4242, %v3033, 100.0
    %v4372 = vsel %vm4243, %v3037, 100.0
    %v4373 = vsel %vm4244, %v3043, 100.0
    %v4374 = vsel %vm4245, %v3047, 100.0
    %v4375 = vsel %vm4246, %v3053, 100.0
    %v4376 = vsel %vm4247, %v3057, 100.0
    %v4377 = vsel %vm4248, %v3063, 100.0
    %v4378 = vsel %vm4249, %v3067, 100.0
    %v4379 = vsel %vm4250, %v3073, 100.0
    %v4380 = vsel %vm4251, %v3077, 100.0
    %vm4381 = vcmp.lt.f32.partialorder %v4349, %v4188
    %vm4382 = vcmp.lt.f32.partialorder %v4350, %v4189
    %vm4383 = vcmp.lt.f32.partialorder %v4351, %v4190
    %vm4384 = vcmp.lt.f32.partialorder %v4352, %v4191
    %vm4385 = vcmp.lt.f32.partialorder %v4353, %v4192
    %vm4386 = vcmp.lt.f32.partialorder %v4354, %v4193
    %vm4387 = vcmp.lt.f32.partialorder %v4355, %v4194
    %vm4388 = vcmp.lt.f32.partialorder %v4356, %v4195
    %vm4389 = vcmp.lt.f32.partialorder %v4357, %v4196
    %vm4390 = vcmp.lt.f32.partialorder %v4358, %v4197
    %vm4391 = vcmp.lt.f32.partialorder %v4359, %v4198
    %vm4392 = vcmp.lt.f32.partialorder %v4360, %v4199
    %vm4393 = vcmp.lt.f32.partialorder %v4361, %v4200
    %vm4394 = vcmp.lt.f32.partialorder %v4362, %v4201
    %vm4395 = vcmp.lt.f32.partialorder %v4363, %v4202
    %vm4396 = vcmp.lt.f32.partialorder %v4364, %v4203
    %vm4397 = vcmp.lt.f32.partialorder %v4365, %v4204
    %vm4398 = vcmp.lt.f32.partialorder %v4366, %v4205
    %vm4399 = vcmp.lt.f32.partialorder %v4367, %v4206
    %vm4400 = vcmp.lt.f32.partialorder %v4368, %v4207
    %vm4401 = vcmp.lt.f32.partialorder %v4369, %v4208
    %vm4402 = vcmp.lt.f32.partialorder %v4370, %v4209
    %vm4403 = vcmp.lt.f32.partialorder %v4371, %v4210
    %vm4404 = vcmp.lt.f32.partialorder %v4372, %v4211
    %vm4405 = vcmp.lt.f32.partialorder %v4373, %v4212
    %vm4406 = vcmp.lt.f32.partialorder %v4374, %v4213
    %vm4407 = vcmp.lt.f32.partialorder %v4375, %v4214
    %vm4408 = vcmp.lt.f32.partialorder %v4376, %v4215
    %vm4409 = vcmp.lt.f32.partialorder %v4377, %v4216
    %vm4410 = vcmp.lt.f32.partialorder %v4378, %v4217
    %vm4411 = vcmp.lt.f32.partialorder %v4379, %v4218
    %vm4412 = vcmp.lt.f32.partialorder %v4380, %v4219
    %v4413 = vsel %vm4381, %v3479, %v4156
    %v4414 = vsel %vm4382, %v3480, %v4157
    %v4415 = vsel %vm4383, %v3481, %v4158
    %v4416 = vsel %vm4384, %v3482, %v4159
    %v4417 = vsel %vm4385, %v3483, %v4160
    %v4418 = vsel %vm4386, %v3484, %v4161
    %v4419 = vsel %vm4387, %v3485, %v4162
    %v4420 = vsel %vm4388, %v3486, %v4163
    %v4421 = vsel %vm4389, %v3487, %v4164
    %v4422 = vsel %vm4390, %v3488, %v4165
    %v4423 = vsel %vm4391, %v3489, %v4166
    %v4424 = vsel %vm4392, %v3490, %v4167
    %v4425 = vsel %vm4393, %v3491, %v4168
    %v4426 = vsel %vm4394, %v3492, %v4169
    %v4427 = vsel %vm4395, %v3493, %v4170
    %v4428 = vsel %vm4396, %v3494, %v4171
    %v4429 = vsel %vm4397, %v3495, %v4172
    %v4430 = vsel %vm4398, %v3496, %v4173
    %v4431 = vsel %vm4399, %v3497, %v4174
    %v4432 = vsel %vm4400, %v3498, %v4175
    %v4433 = vsel %vm4401, %v3499, %v4176
    %v4434 = vsel %vm4402, %v3500, %v4177
    %v4435 = vsel %vm4403, %v3501, %v4178
    %v4436 = vsel %vm4404, %v3502, %v4179
    %v4437 = vsel %vm4405, %v3503, %v4180
    %v4438 = vsel %vm4406, %v3504, %v4181
    %v4439 = vsel %vm4407, %v3505, %v4182
    %v4440 = vsel %vm4408, %v3506, %v4183
    %v4441 = vsel %vm4409, %v3507, %v4184
    %v4442 = vsel %vm4410, %v3508, %v4185
    %v4443 = vsel %vm4411, %v3509, %v4186
    %v4444 = vsel %vm4412, %v3510, %v4187
    %v4445 = vsel %vm4381, %v4349, %v4188
    %v4446 = vsel %vm4382, %v4350, %v4189
    %v4447 = vsel %vm4383, %v4351, %v4190
    %v4448 = vsel %vm4384, %v4352, %v4191
    %v4449 = vsel %vm4385, %v4353, %v4192
    %v4450 = vsel %vm4386, %v4354, %v4193
    %v4451 = vsel %vm4387, %v4355, %v4194
    %v4452 = vsel %vm4388, %v4356, %v4195
    %v4453 = vsel %vm4389, %v4357, %v4196
    %v4454 = vsel %vm4390, %v4358, %v4197
    %v4455 = vsel %vm4391, %v4359, %v4198
    %v4456 = vsel %vm4392, %v4360, %v4199
    %v4457 = vsel %vm4393, %v4361, %v4200
    %v4458 = vsel %vm4394, %v4362, %v4201
    %v4459 = vsel %vm4395, %v4363, %v4202
    %v4460 = vsel %vm4396, %v4364, %v4203
    %v4461 = vsel %vm4397, %v4365, %v4204
    %v4462 = vsel %vm4398, %v4366, %v4205
    %v4463 = vsel %vm4399, %v4367, %v4206
    %v4464 = vsel %vm4400, %v4368, %v4207
    %v4465 = vsel %vm4401, %v4369, %v4208
    %v4466 = vsel %vm4402, %v4370, %v4209
    %v4467 = vsel %vm4403, %v4371, %v4210
    %v4468 = vsel %vm4404, %v4372, %v4211
    %v4469 = vsel %vm4405, %v4373, %v4212
    %v4470 = vsel %vm4406, %v4374, %v4213
    %v4471 = vsel %vm4407, %v4375, %v4214
    %v4472 = vsel %vm4408, %v4376, %v4215
    %v4473 = vsel %vm4409, %v4377, %v4216
    %v4474 = vsel %vm4410, %v4378, %v4217
    %v4475 = vsel %vm4411, %v4379, %v4218
    %v4476 = vsel %vm4412, %v4380, %v4219
    %vm4477 = vcmp.eq.f32.partialorder %v3081, %v3671
    %vm4478 = vcmp.eq.f32.partialorder %v3085, %v3672
    %vm4479 = vcmp.eq.f32.partialorder %v3091, %v3673
    %vm4480 = vcmp.eq.f32.partialorder %v3095, %v3674
    %vm4481 = vcmp.eq.f32.partialorder %v3101, %v3675
    %vm4482 = vcmp.eq.f32.partialorder %v3105, %v3676
    %vm4483 = vcmp.eq.f32.partialorder %v3111, %v3677
    %vm4484 = vcmp.eq.f32.partialorder %v3115, %v3678
    %vm4485 = vcmp.eq.f32.partialorder %v3121, %v3679
    %vm4486 = vcmp.eq.f32.partialorder %v3125, %v3680
    %vm4487 = vcmp.eq.f32.partialorder %v3131, %v3681
    %vm4488 = vcmp.eq.f32.partialorder %v3135, %v3682
    %vm4489 = vcmp.eq.f32.partialorder %v3141, %v3683
    %vm4490 = vcmp.eq.f32.partialorder %v3145, %v3684
    %vm4491 = vcmp.eq.f32.partialorder %v3151, %v3685
    %vm4492 = vcmp.eq.f32.partialorder %v3155, %v3686
    %vm4493 = vcmp.eq.f32.partialorder %v3161, %v3687
    %vm4494 = vcmp.eq.f32.partialorder %v3165, %v3688
    %vm4495 = vcmp.eq.f32.partialorder %v3171, %v3689
    %vm4496 = vcmp.eq.f32.partialorder %v3175, %v3690
    %vm4497 = vcmp.eq.f32.partialorder %v3181, %v3691
    %vm4498 = vcmp.eq.f32.partialorder %v3185, %v3692
    %vm4499 = vcmp.eq.f32.partialorder %v3191, %v3693
    %vm4500 = vcmp.eq.f32.partialorder %v3195, %v3694
    %vm4501 = vcmp.eq.f32.partialorder %v3201, %v3695
    %vm4502 = vcmp.eq.f32.partialorder %v3205, %v3696
    %vm4503 = vcmp.eq.f32.partialorder %v3211, %v3697
    %vm4504 = vcmp.eq.f32.partialorder %v3215, %v3698
    %vm4505 = vcmp.eq.f32.partialorder %v3221, %v3699
    %vm4506 = vcmp.eq.f32.partialorder %v3225, %v3700
    %vm4507 = vcmp.eq.f32.partialorder %v3231, %v3701
    %vm4508 = vcmp.eq.f32.partialorder %v3235, %v3702
    %vm4509 = vcmp.eq.s32.totalorder %v3736, 4
    %vm4510 = vmand %vm4509, %vm4477
    %vm4511 = vmand %vm4509, %vm4478
    %vm4512 = vmand %vm4509, %vm4479
    %vm4513 = vmand %vm4509, %vm4480
    %vm4514 = vmand %vm4509, %vm4481
    %vm4515 = vmand %vm4509, %vm4482
    %vm4516 = vmand %vm4509, %vm4483
    %vm4517 = vmand %vm4509, %vm4484
    %vm4518 = vmand %vm4509, %vm4485
    %vm4519 = vmand %vm4509, %vm4486
    %vm4520 = vmand %vm4509, %vm4487
    %vm4521 = vmand %vm4509, %vm4488
    %vm4522 = vmand %vm4509, %vm4489
    %vm4523 = vmand %vm4509, %vm4490
    %vm4524 = vmand %vm4509, %vm4491
    %vm4525 = vmand %vm4509, %vm4492
    %vm4526 = vmand %vm4509, %vm4493
    %vm4527 = vmand %vm4509, %vm4494
    %vm4528 = vmand %vm4509, %vm4495
    %vm4529 = vmand %vm4509, %vm4496
    %vm4530 = vmand %vm4509, %vm4497
    %vm4531 = vmand %vm4509, %vm4498
    %vm4532 = vmand %vm4509, %vm4499
    %vm4533 = vmand %vm4509, %vm4500
    %vm4534 = vmand %vm4509, %vm4501
    %vm4535 = vmand %vm4509, %vm4502
    %vm4536 = vmand %vm4509, %vm4503
    %vm4537 = vmand %vm4509, %vm4504
    %vm4538 = vmand %vm4509, %vm4505
    %vm4539 = vmand %vm4509, %vm4506
    %vm4540 = vmand %vm4509, %vm4507
    %vm4541 = vmand %vm4509, %vm4508
    %vm4542 = vmand %vm4510, %vm3703
    %vm4543 = vmand %vm4511, %vm3704
    %vm4544 = vmand %vm4512, %vm3705
    %vm4545 = vmand %vm4513, %vm3706
    %vm4546 = vmand %vm4514, %vm3707
    %vm4547 = vmand %vm4515, %vm3708
    %vm4548 = vmand %vm4516, %vm3709
    %vm4549 = vmand %vm4517, %vm3710
    %vm4550 = vmand %vm4518, %vm3711
    %vm4551 = vmand %vm4519, %vm3712
    %vm4552 = vmand %vm4520, %vm3713
    %vm4553 = vmand %vm4521, %vm3714
    %vm4554 = vmand %vm4522, %vm3715
    %vm4555 = vmand %vm4523, %vm3716
    %vm4556 = vmand %vm4524, %vm3717
    %vm4557 = vmand %vm4525, %vm3718
    %vm4558 = vmand %vm4526, %vm3719
    %vm4559 = vmand %vm4527, %vm3720
    %vm4560 = vmand %vm4528, %vm3721
    %vm4561 = vmand %vm4529, %vm3722
    %vm4562 = vmand %vm4530, %vm3723
    %vm4563 = vmand %vm4531, %vm3724
    %vm4564 = vmand %vm4532, %vm3725
    %vm4565 = vmand %vm4533, %vm3726
    %vm4566 = vmand %vm4534, %vm3727
    %vm4567 = vmand %vm4535, %vm3728
    %vm4568 = vmand %vm4536, %vm3729
    %vm4569 = vmand %vm4537, %vm3730
    %vm4570 = vmand %vm4538, %vm3731
    %vm4571 = vmand %vm4539, %vm3732
    %vm4572 = vmand %vm4540, %vm3733
    %vm4573 = vmand %vm4541, %vm3734
    %v4574 = vsel %vm4542, 1.0, %v4317
    %v4575 = vsel %vm4543, 1.0, %v4318
    %v4576 = vsel %vm4544, 1.0, %v4319
    %v4577 = vsel %vm4545, 1.0, %v4320
    %v4578 = vsel %vm4546, 1.0, %v4321
    %v4579 = vsel %vm4547, 1.0, %v4322
    %v4580 = vsel %vm4548, 1.0, %v4323
    %v4581 = vsel %vm4549, 1.0, %v4324
    %v4582 = vsel %vm4550, 1.0, %v4325
    %v4583 = vsel %vm4551, 1.0, %v4326
    %v4584 = vsel %vm4552, 1.0, %v4327
    %v4585 = vsel %vm4553, 1.0, %v4328
    %v4586 = vsel %vm4554, 1.0, %v4329
    %v4587 = vsel %vm4555, 1.0, %v4330
    %v4588 = vsel %vm4556, 1.0, %v4331
    %v4589 = vsel %vm4557, 1.0, %v4332
    %v4590 = vsel %vm4558, 1.0, %v4333
    %v4591 = vsel %vm4559, 1.0, %v4334
    %v4592 = vsel %vm4560, 1.0, %v4335
    %v4593 = vsel %vm4561, 1.0, %v4336
    %v4594 = vsel %vm4562, 1.0, %v4337
    %v4595 = vsel %vm4563, 1.0, %v4338
    %v4596 = vsel %vm4564, 1.0, %v4339
    %v4597 = vsel %vm4565, 1.0, %v4340
    %v4598 = vsel %vm4566, 1.0, %v4341
    %v4599 = vsel %vm4567, 1.0, %v4342
    %v4600 = vsel %vm4568, 1.0, %v4343
    %v4601 = vsel %vm4569, 1.0, %v4344
    %v4602 = vsel %vm4570, 1.0, %v4345
    %v4603 = vsel %vm4571, 1.0, %v4346
    %v4604 = vsel %vm4572, 1.0, %v4347
    %v4605 = vsel %vm4573, 1.0, %v4348
    %v4606 = vsel %vm4477, %v3083, 100.0
    %v4607 = vsel %vm4478, %v3087, 100.0
    %v4608 = vsel %vm4479, %v3093, 100.0
    %v4609 = vsel %vm4480, %v3097, 100.0
    %v4610 = vsel %vm4481, %v3103, 100.0
    %v4611 = vsel %vm4482, %v3107, 100.0
    %v4612 = vsel %vm4483, %v3113, 100.0
    %v4613 = vsel %vm4484, %v3117, 100.0
    %v4614 = vsel %vm4485, %v3123, 100.0
    %v4615 = vsel %vm4486, %v3127, 100.0
    %v4616 = vsel %vm4487, %v3133, 100.0
    %v4617 = vsel %vm4488, %v3137, 100.0
    %v4618 = vsel %vm4489, %v3143, 100.0
    %v4619 = vsel %vm4490, %v3147, 100.0
    %v4620 = vsel %vm4491, %v3153, 100.0
    %v4621 = vsel %vm4492, %v3157, 100.0
    %v4622 = vsel %vm4493, %v3163, 100.0
    %v4623 = vsel %vm4494, %v3167, 100.0
    %v4624 = vsel %vm4495, %v3173, 100.0
    %v4625 = vsel %vm4496, %v3177, 100.0
    %v4626 = vsel %vm4497, %v3183, 100.0
    %v4627 = vsel %vm4498, %v3187, 100.0
    %v4628 = vsel %vm4499, %v3193, 100.0
    %v4629 = vsel %vm4500, %v3197, 100.0
    %v4630 = vsel %vm4501, %v3203, 100.0
    %v4631 = vsel %vm4502, %v3207, 100.0
    %v4632 = vsel %vm4503, %v3213, 100.0
    %v4633 = vsel %vm4504, %v3217, 100.0
    %v4634 = vsel %vm4505, %v3223, 100.0
    %v4635 = vsel %vm4506, %v3227, 100.0
    %v4636 = vsel %vm4507, %v3233, 100.0
    %v4637 = vsel %vm4508, %v3237, 100.0
    %vm4638 = vcmp.lt.f32.partialorder %v4606, %v4445
    %vm4639 = vcmp.lt.f32.partialorder %v4607, %v4446
    %vm4640 = vcmp.lt.f32.partialorder %v4608, %v4447
    %vm4641 = vcmp.lt.f32.partialorder %v4609, %v4448
    %vm4642 = vcmp.lt.f32.partialorder %v4610, %v4449
    %vm4643 = vcmp.lt.f32.partialorder %v4611, %v4450
    %vm4644 = vcmp.lt.f32.partialorder %v4612, %v4451
    %vm4645 = vcmp.lt.f32.partialorder %v4613, %v4452
    %vm4646 = vcmp.lt.f32.partialorder %v4614, %v4453
    %vm4647 = vcmp.lt.f32.partialorder %v4615, %v4454
    %vm4648 = vcmp.lt.f32.partialorder %v4616, %v4455
    %vm4649 = vcmp.lt.f32.partialorder %v4617, %v4456
    %vm4650 = vcmp.lt.f32.partialorder %v4618, %v4457
    %vm4651 = vcmp.lt.f32.partialorder %v4619, %v4458
    %vm4652 = vcmp.lt.f32.partialorder %v4620, %v4459
    %vm4653 = vcmp.lt.f32.partialorder %v4621, %v4460
    %vm4654 = vcmp.lt.f32.partialorder %v4622, %v4461
    %vm4655 = vcmp.lt.f32.partialorder %v4623, %v4462
    %vm4656 = vcmp.lt.f32.partialorder %v4624, %v4463
    %vm4657 = vcmp.lt.f32.partialorder %v4625, %v4464
    %vm4658 = vcmp.lt.f32.partialorder %v4626, %v4465
    %vm4659 = vcmp.lt.f32.partialorder %v4627, %v4466
    %vm4660 = vcmp.lt.f32.partialorder %v4628, %v4467
    %vm4661 = vcmp.lt.f32.partialorder %v4629, %v4468
    %vm4662 = vcmp.lt.f32.partialorder %v4630, %v4469
    %vm4663 = vcmp.lt.f32.partialorder %v4631, %v4470
    %vm4664 = vcmp.lt.f32.partialorder %v4632, %v4471
    %vm4665 = vcmp.lt.f32.partialorder %v4633, %v4472
    %vm4666 = vcmp.lt.f32.partialorder %v4634, %v4473
    %vm4667 = vcmp.lt.f32.partialorder %v4635, %v4474
    %vm4668 = vcmp.lt.f32.partialorder %v4636, %v4475
    %vm4669 = vcmp.lt.f32.partialorder %v4637, %v4476
    %v4670 = vsel %vm4638, %v3607, %v4413
    %v4671 = vsel %vm4639, %v3608, %v4414
    %v4672 = vsel %vm4640, %v3609, %v4415
    %v4673 = vsel %vm4641, %v3610, %v4416
    %v4674 = vsel %vm4642, %v3611, %v4417
    %v4675 = vsel %vm4643, %v3612, %v4418
    %v4676 = vsel %vm4644, %v3613, %v4419
    %v4677 = vsel %vm4645, %v3614, %v4420
    %v4678 = vsel %vm4646, %v3615, %v4421
    %v4679 = vsel %vm4647, %v3616, %v4422
    %v4680 = vsel %vm4648, %v3617, %v4423
    %v4681 = vsel %vm4649, %v3618, %v4424
    %v4682 = vsel %vm4650, %v3619, %v4425
    %v4683 = vsel %vm4651, %v3620, %v4426
    %v4684 = vsel %vm4652, %v3621, %v4427
    %v4685 = vsel %vm4653, %v3622, %v4428
    %v4686 = vsel %vm4654, %v3623, %v4429
    %v4687 = vsel %vm4655, %v3624, %v4430
    %v4688 = vsel %vm4656, %v3625, %v4431
    %v4689 = vsel %vm4657, %v3626, %v4432
    %v4690 = vsel %vm4658, %v3627, %v4433
    %v4691 = vsel %vm4659, %v3628, %v4434
    %v4692 = vsel %vm4660, %v3629, %v4435
    %v4693 = vsel %vm4661, %v3630, %v4436
    %v4694 = vsel %vm4662, %v3631, %v4437
    %v4695 = vsel %vm4663, %v3632, %v4438
    %v4696 = vsel %vm4664, %v3633, %v4439
    %v4697 = vsel %vm4665, %v3634, %v4440
    %v4698 = vsel %vm4666, %v3635, %v4441
    %v4699 = vsel %vm4667, %v3636, %v4442
    %v4700 = vsel %vm4668, %v3637, %v4443
    %v4701 = vsel %vm4669, %v3638, %v4444
    %4702 = vrot.lane.b32.xlu0 %v4670, 64
    %v4703 = vpop.permute.xlu0 %4702
    %4704 = vrot.lane.b32.xlu0 %v4671, 64
    %v4705 = vpop.permute.xlu0 %4704
    %4706 = vrot.lane.b32.xlu0 %v4672, 64
    %v4707 = vpop.permute.xlu0 %4706
    %4708 = vrot.lane.b32.xlu0 %v4673, 64
    %v4709 = vpop.permute.xlu0 %4708
    %4710 = vrot.lane.b32.xlu0 %v4674, 64
    %v4711 = vpop.permute.xlu0 %4710
    %4712 = vrot.lane.b32.xlu0 %v4675, 64
    %v4713 = vpop.permute.xlu0 %4712
    %4714 = vrot.lane.b32.xlu0 %v4676, 64
    %v4715 = vpop.permute.xlu0 %4714
    %4716 = vrot.lane.b32.xlu0 %v4677, 64
    %v4717 = vpop.permute.xlu0 %4716
    %4718 = vrot.lane.b32.xlu0 %v4678, 64
    %v4719 = vpop.permute.xlu0 %4718
    %4720 = vrot.lane.b32.xlu0 %v4679, 64
    %v4721 = vpop.permute.xlu0 %4720
    %4722 = vrot.lane.b32.xlu0 %v4680, 64
    %v4723 = vpop.permute.xlu0 %4722
    %4724 = vrot.lane.b32.xlu0 %v4681, 64
    %v4725 = vpop.permute.xlu0 %4724
    %4726 = vrot.lane.b32.xlu0 %v4682, 64
    %v4727 = vpop.permute.xlu0 %4726
    %4728 = vrot.lane.b32.xlu0 %v4683, 64
    %v4729 = vpop.permute.xlu0 %4728
    %4730 = vrot.lane.b32.xlu0 %v4684, 64
    %v4731 = vpop.permute.xlu0 %4730
    %4732 = vrot.lane.b32.xlu0 %v4685, 64
    %v4733 = vpop.permute.xlu0 %4732
    %4734 = vrot.lane.b32.xlu0 %v4686, 64
    %v4735 = vpop.permute.xlu0 %4734
    %4736 = vrot.lane.b32.xlu0 %v4687, 64
    %v4737 = vpop.permute.xlu0 %4736
    %4738 = vrot.lane.b32.xlu0 %v4688, 64
    %v4739 = vpop.permute.xlu0 %4738
    %4740 = vrot.lane.b32.xlu0 %v4689, 64
    %v4741 = vpop.permute.xlu0 %4740
    %4742 = vrot.lane.b32.xlu0 %v4690, 64
    %v4743 = vpop.permute.xlu0 %4742
    %4744 = vrot.lane.b32.xlu0 %v4691, 64
    %v4745 = vpop.permute.xlu0 %4744
    %4746 = vrot.lane.b32.xlu0 %v4692, 64
    %v4747 = vpop.permute.xlu0 %4746
    %4748 = vrot.lane.b32.xlu0 %v4693, 64
    %v4749 = vpop.permute.xlu0 %4748
    %4750 = vrot.lane.b32.xlu0 %v4694, 64
    %v4751 = vpop.permute.xlu0 %4750
    %4752 = vrot.lane.b32.xlu0 %v4695, 64
    %v4753 = vpop.permute.xlu0 %4752
    %4754 = vrot.lane.b32.xlu0 %v4696, 64
    %v4755 = vpop.permute.xlu0 %4754
    %4756 = vrot.lane.b32.xlu0 %v4697, 64
    %v4757 = vpop.permute.xlu0 %4756
    %4758 = vrot.lane.b32.xlu0 %v4698, 64
    %v4759 = vpop.permute.xlu0 %4758
    %4760 = vrot.lane.b32.xlu0 %v4699, 64
    %v4761 = vpop.permute.xlu0 %4760
    %4762 = vrot.lane.b32.xlu0 %v4700, 64
    %v4763 = vpop.permute.xlu0 %4762
    %4764 = vrot.lane.b32.xlu0 %v4701, 64
    %v4765 = vpop.permute.xlu0 %4764
    %v4766 = vsel %vm3703, %v4703, %v3639
    %v4767 = vsel %vm3704, %v4705, %v3640
    %v4768 = vsel %vm3705, %v4707, %v3641
    %v4769 = vsel %vm3706, %v4709, %v3642
    %v4770 = vsel %vm3707, %v4711, %v3643
    %v4771 = vsel %vm3708, %v4713, %v3644
    %v4772 = vsel %vm3709, %v4715, %v3645
    %v4773 = vsel %vm3710, %v4717, %v3646
    %v4774 = vsel %vm3711, %v4719, %v3647
    %v4775 = vsel %vm3712, %v4721, %v3648
    %v4776 = vsel %vm3713, %v4723, %v3649
    %v4777 = vsel %vm3714, %v4725, %v3650
    %v4778 = vsel %vm3715, %v4727, %v3651
    %v4779 = vsel %vm3716, %v4729, %v3652
    %v4780 = vsel %vm3717, %v4731, %v3653
    %v4781 = vsel %vm3718, %v4733, %v3654
    %v4782 = vsel %vm3719, %v4735, %v3655
    %v4783 = vsel %vm3720, %v4737, %v3656
    %v4784 = vsel %vm3721, %v4739, %v3657
    %v4785 = vsel %vm3722, %v4741, %v3658
    %v4786 = vsel %vm3723, %v4743, %v3659
    %v4787 = vsel %vm3724, %v4745, %v3660
    %v4788 = vsel %vm3725, %v4747, %v3661
    %v4789 = vsel %vm3726, %v4749, %v3662
    %v4790 = vsel %vm3727, %v4751, %v3663
    %v4791 = vsel %vm3728, %v4753, %v3664
    %v4792 = vsel %vm3729, %v4755, %v3665
    %v4793 = vsel %vm3730, %v4757, %v3666
    %v4794 = vsel %vm3731, %v4759, %v3667
    %v4795 = vsel %vm3732, %v4761, %v3668
    %v4796 = vsel %vm3733, %v4763, %v3669
    %v4797 = vsel %vm3734, %v4765, %v3670
    %vm4798 = vcmask 523264
    %4799 = vst.msk [vmem:[#allocation11] sm:$0xff] %vm4798, %v4766
    %4800 = vst.msk [vmem:[#allocation11 + $0x8] sm:$0xff] %vm4798, %v4767
    %4801 = vst.msk [vmem:[#allocation11 + $0x10] sm:$0xff] %vm4798, %v4768
    %4802 = vst.msk [vmem:[#allocation11 + $0x18] sm:$0xff] %vm4798, %v4769
    %4803 = vst.msk [vmem:[#allocation11 + $0x20] sm:$0xff] %vm4798, %v4770
    %4804 = vst.msk [vmem:[#allocation11 + $0x28] sm:$0xff] %vm4798, %v4771
    %4805 = vst.msk [vmem:[#allocation11 + $0x30] sm:$0xff] %vm4798, %v4772
    %4806 = vst.msk [vmem:[#allocation11 + $0x38] sm:$0xff] %vm4798, %v4773
    %4807 = vst.msk [vmem:[#allocation11 + $0x40] sm:$0xff] %vm4798, %v4774
    %4808 = vst.msk [vmem:[#allocation11 + $0x48] sm:$0xff] %vm4798, %v4775
    %4809 = vst.msk [vmem:[#allocation11 + $0x50] sm:$0xff] %vm4798, %v4776
    %4810 = vst.msk [vmem:[#allocation11 + $0x58] sm:$0xff] %vm4798, %v4777
    %4811 = vst.msk [vmem:[#allocation11 + $0x60] sm:$0xff] %vm4798, %v4778
    %4812 = vst.msk [vmem:[#allocation11 + $0x68] sm:$0xff] %vm4798, %v4779
    %4813 = vst.msk [vmem:[#allocation11 + $0x70] sm:$0xff] %vm4798, %v4780
    %4814 = vst.msk [vmem:[#allocation11 + $0x78] sm:$0xff] %vm4798, %v4781
    %4815 = vst.msk [vmem:[#allocation11 + $0x80] sm:$0xff] %vm4798, %v4782
    %4816 = vst.msk [vmem:[#allocation11 + $0x88] sm:$0xff] %vm4798, %v4783
    %4817 = vst.msk [vmem:[#allocation11 + $0x90] sm:$0xff] %vm4798, %v4784
    %4818 = vst.msk [vmem:[#allocation11 + $0x98] sm:$0xff] %vm4798, %v4785
    %4819 = vst.msk [vmem:[#allocation11 + $0xa0] sm:$0xff] %vm4798, %v4786
    %4820 = vst.msk [vmem:[#allocation11 + $0xa8] sm:$0xff] %vm4798, %v4787
    %4821 = vst.msk [vmem:[#allocation11 + $0xb0] sm:$0xff] %vm4798, %v4788
    %4822 = vst.msk [vmem:[#allocation11 + $0xb8] sm:$0xff] %vm4798, %v4789
    %4823 = vst.msk [vmem:[#allocation11 + $0xc0] sm:$0xff] %vm4798, %v4790
    %4824 = vst.msk [vmem:[#allocation11 + $0xc8] sm:$0xff] %vm4798, %v4791
    %4825 = vst.msk [vmem:[#allocation11 + $0xd0] sm:$0xff] %vm4798, %v4792
    %4826 = vst.msk [vmem:[#allocation11 + $0xd8] sm:$0xff] %vm4798, %v4793
    %4827 = vst.msk [vmem:[#allocation11 + $0xe0] sm:$0xff] %vm4798, %v4794
    %4828 = vst.msk [vmem:[#allocation11 + $0xe8] sm:$0xff] %vm4798, %v4795
    %4829 = vst.msk [vmem:[#allocation11 + $0xf0] sm:$0xff] %vm4798, %v4796
    %4830 = vst.msk [vmem:[#allocation11 + $0xf8] sm:$0xff] %vm4798, %v4797
    %vm4831 = vcmask 64512
    %4832 = vst.msk [vmem:[#allocation12] sm:$0xff] %vm4831, %v4574
    %4833 = vst.msk [vmem:[#allocation12 + $0x8] sm:$0xff] %vm4831, %v4575
    %4834 = vst.msk [vmem:[#allocation12 + $0x10] sm:$0xff] %vm4831, %v4576
    %4835 = vst.msk [vmem:[#allocation12 + $0x18] sm:$0xff] %vm4831, %v4577
    %4836 = vst.msk [vmem:[#allocation12 + $0x20] sm:$0xff] %vm4831, %v4578
    %4837 = vst.msk [vmem:[#allocation12 + $0x28] sm:$0xff] %vm4831, %v4579
    %4838 = vst.msk [vmem:[#allocation12 + $0x30] sm:$0xff] %vm4831, %v4580
    %4839 = vst.msk [vmem:[#allocation12 + $0x38] sm:$0xff] %vm4831, %v4581
    %4840 = vst.msk [vmem:[#allocation12 + $0x40] sm:$0xff] %vm4831, %v4582
    %4841 = vst.msk [vmem:[#allocation12 + $0x48] sm:$0xff] %vm4831, %v4583
    %4842 = vst.msk [vmem:[#allocation12 + $0x50] sm:$0xff] %vm4831, %v4584
    %4843 = vst.msk [vmem:[#allocation12 + $0x58] sm:$0xff] %vm4831, %v4585
    %4844 = vst.msk [vmem:[#allocation12 + $0x60] sm:$0xff] %vm4831, %v4586
    %4845 = vst.msk [vmem:[#allocation12 + $0x68] sm:$0xff] %vm4831, %v4587
    %4846 = vst.msk [vmem:[#allocation12 + $0x70] sm:$0xff] %vm4831, %v4588
    %4847 = vst.msk [vmem:[#allocation12 + $0x78] sm:$0xff] %vm4831, %v4589
    %4848 = vst.msk [vmem:[#allocation12 + $0x80] sm:$0xff] %vm4831, %v4590
    %4849 = vst.msk [vmem:[#allocation12 + $0x88] sm:$0xff] %vm4831, %v4591
    %4850 = vst.msk [vmem:[#allocation12 + $0x90] sm:$0xff] %vm4831, %v4592
    %4851 = vst.msk [vmem:[#allocation12 + $0x98] sm:$0xff] %vm4831, %v4593
    %4852 = vst.msk [vmem:[#allocation12 + $0xa0] sm:$0xff] %vm4831, %v4594
    %4853 = vst.msk [vmem:[#allocation12 + $0xa8] sm:$0xff] %vm4831, %v4595
    %4854 = vst.msk [vmem:[#allocation12 + $0xb0] sm:$0xff] %vm4831, %v4596
    %4855 = vst.msk [vmem:[#allocation12 + $0xb8] sm:$0xff] %vm4831, %v4597
    %4856 = vst.msk [vmem:[#allocation12 + $0xc0] sm:$0xff] %vm4831, %v4598
    %4857 = vst.msk [vmem:[#allocation12 + $0xc8] sm:$0xff] %vm4831, %v4599
    %4858 = vst.msk [vmem:[#allocation12 + $0xd0] sm:$0xff] %vm4831, %v4600
    %4859 = vst.msk [vmem:[#allocation12 + $0xd8] sm:$0xff] %vm4831, %v4601
    %4860 = vst.msk [vmem:[#allocation12 + $0xe0] sm:$0xff] %vm4831, %v4602
    %4861 = vst.msk [vmem:[#allocation12 + $0xe8] sm:$0xff] %vm4831, %v4603
    %4862 = vst.msk [vmem:[#allocation12 + $0xf0] sm:$0xff] %vm4831, %v4604
    %4863 = vst.msk [vmem:[#allocation12 + $0xf8] sm:$0xff] %vm4831, %v4605
    // Predicated region
    $region34: #{tpu_custom_call.1} parent=1 // pred_check
      _
    $region35: #{tpu_custom_call.1} parent=1 // pred_check_branch
      %4865 = sbr.rel (0) target = $region37
    $region36: #{tpu_custom_call.1} parent=1 // pred_region
      %s4867 = ssub.s32 4096, 4096
      %4868 = vsyncadd [#allocation5], %s4867
      %s4869 = sshll.u32 [#allocation11], 4
      %s4870 = int_to_ptr.vmem [resolvable:$true] %s4869
      %4875 = dma.vmem_to_hbm [thread:$0]  %s4870, 4096, %s4, [#allocation5], 128, 128, 8
    $region37: #{tpu_custom_call.1} parent=1 // pred_fallthru
      _
    // Predicated region
    $region38: #{tpu_custom_call.1} parent=1 // pred_check
      _
    $region39: #{tpu_custom_call.1} parent=1 // pred_check_branch
      %4877 = sbr.rel (0) target = $region41
    $region40: #{tpu_custom_call.1} parent=1 // pred_region
      %s4879 = ssub.s32 4096, 4096
      %4880 = vsyncadd [#allocation13], %s4879
      %s4881 = sshll.u32 [#allocation12], 4
      %s4882 = int_to_ptr.vmem [resolvable:$true] %s4881
      %4887 = dma.vmem_to_hbm [thread:$0]  %s4882, 4096, %s5, [#allocation13], 128, 128, 8
    $region41: #{tpu_custom_call.1} parent=1 // pred_fallthru
      _
    // Predicated region
    $region42: #{tpu_custom_call.1} parent=1 // pred_check
      _
    $region43: #{tpu_custom_call.1} parent=1 // pred_check_branch
      %4889 = sbr.rel (0) target = $region45
    $region44: #{tpu_custom_call.1} parent=1 // pred_region
      %4890 = dma.done [#allocation5], 4096
    $region45: #{tpu_custom_call.1} parent=1 // pred_fallthru
      _
    // Predicated region
    $region46: #{tpu_custom_call.1} parent=1 // pred_check
      _
    $region47: #{tpu_custom_call.1} parent=1 // pred_check_branch
      %4892 = sbr.rel (0) target = $region49
    $region48: #{tpu_custom_call.1} parent=1 // pred_region
      %4893 = dma.done [#allocation13], 4096
    $region49: #{tpu_custom_call.1} parent=1 // pred_fallthru
      _
    %4894 = vsyncpa [#allocation4], 1
    %4895 = vsyncpa [#allocation7], 1
    %4896 = vsyncpa [#allocation10], 1
    %4897 = vsyncpa [#allocation5], 1
    %4898 = vsyncpa [#allocation13], 1

</llo_original>
